<compile_context>
chip_gen: v7x
topology: tpu7x:2x2x1
jax: 0.10.0
libtpu: 0.0.40
codegen_flags: <defaults>
</compile_context>

<pallas_src>
import functools

import jax
import jax.numpy as jnp
from jax.experimental import pallas as pl
from jax.experimental.pallas import tpu as pltpu

_EDGE_TILE = 256    # edge-tile size; multiple of 256 keeps v6e/v7x MXU depth full
_NODE_ALIGN = 256   # node padding = contraction depth of the gather matmuls


def _round_up(x, m):
    return ((x + m - 1) // m) * m


def _pad1(x, n):
    return jnp.pad(x, (0, n - x.shape[0]))


def _pad2(x, rows, cols):
    return jnp.pad(x, ((0, rows - x.shape[0]), (0, cols - x.shape[1])))


def _vmem_limit_bytes():
    """Generation-aware VMEM cap (~80% of physical), with a safe fallback."""
    try:
        cap = getattr(pltpu.get_tpu_info(), "vmem_capacity_bytes", None)
        if cap:
            return int(0.8 * int(cap))
    except Exception:
        pass
    return 32 * 1024 * 1024


# --------------------------------------------------------------------------
# Kernel: grid = (layer, edge_tile).  h resident in the output VMEM block,
# aggr resident in a VMEM scratch across edge tiles.
# --------------------------------------------------------------------------
def node_emb_kernel(h0_ref, gsrc_ref, gdst_ref, gdstt_ref, gsrct_ref,
                    wmsg_ref, bmsg_ref, wih_ref, whh_ref, bgi_ref, bgh_ref,
                    h_ref, aggr_ref):
    f32 = jnp.float32
    layer = pl.program_id(0)
    et = pl.program_id(1)
    dp = whh_ref.shape[0]          # padded feature dim (static, multiple of 128)
    d2p = 2 * dp

    @pl.when(jnp.logical_and(layer == 0, et == 0))
    def _init_h():
        h_ref[...] = h0_ref[...]

    @pl.when(et == 0)
    def _init_aggr():
        aggr_ref[...] = jnp.zeros_like(aggr_ref)

    h = h_ref[...]                             # layer-start node state [Np, Dp] f32
    h_b = h.astype(jnp.bfloat16)

    # ---- gather this edge tile's endpoint features (one-hot MXU, K = Np) ----
    h_src = jnp.dot(gsrc_ref[...], h_b, preferred_element_type=f32)   # [TE, Dp]
    h_dst = jnp.dot(gdst_ref[...], h_b, preferred_element_type=f32)
    x = jnp.concatenate([h_src, h_dst], axis=1).astype(jnp.bfloat16)  # [TE, 2Dp]

    # ---- fused message linear: one K=2Dp matmul -> [a_fwd | a_rev] ----------
    a = jnp.dot(x, wmsg_ref[...], preferred_element_type=f32) + bmsg_ref[...]
    a_b = a.astype(jnp.bfloat16)                                      # [TE, 4Dp]

    # ---- scatter-add via pre-transposed one-hot tiles (no in-kernel .T) -----
    aggr_ref[...] += (
        jnp.dot(gdstt_ref[...], a_b[:, :d2p], preferred_element_type=f32)
        + jnp.dot(gsrct_ref[...], a_b[:, d2p:], preferred_element_type=f32))

    # ---- GRU update once all edge tiles of this layer are accumulated -------
    @pl.when(et == pl.num_programs(1) - 1)
    def _gru():
        ag_b = aggr_ref[...].astype(jnp.bfloat16)                     # [Np, 2Dp]
        gi = jnp.dot(ag_b, wih_ref[...], preferred_element_type=f32) + bgi_ref[...]
        gh = jnp.dot(h_b, whh_ref[...], preferred_element_type=f32) + bgh_ref[...]
        r = jax.nn.sigmoid(gi[:, :dp] + gh[:, :dp])
        z = jax.nn.sigmoid(gi[:, dp:d2p] + gh[:, dp:d2p])
        n = jnp.tanh(gi[:, d2p:] + r * gh[:, d2p:])
        h_ref[...] = (1.0 - z) * n + z * h


# --------------------------------------------------------------------------
# One-time preprocessing (hoisted out of the per-call forward path).
# --------------------------------------------------------------------------
def _pack_layer(lp, d, dp):
    """Fuse / pad one layer's PyTorch-layout weights into MXU-friendly blocks."""
    d2p = 2 * dp
    wmT = lp["w_msg"].T          # [2d, 2d]  (x @ W^T form)
    wrT = lp["w_rev"].T          # [2d, 2d]
    wihT = lp["w_ih"].T          # [2d, 3d]
    whhT = lp["w_hh"].T          # [d, 3d]

    blk = lambda m: _pad2(m, dp, d2p)
    # X = [h_src | h_dst] (2Dp)  ->  [a_fwd | a_rev] (4Dp)
    w_msg_f = jnp.block([[blk(wmT[:d]), blk(wrT[d:])],
                         [blk(wmT[d:]), blk(wrT[:d])]])               # [2Dp, 4Dp]
    b_msg_f = jnp.concatenate([_pad1(lp["b_msg"], d2p),
                               _pad1(lp["b_rev"], d2p)])[None, :]     # [1, 4Dp]

    gi_blk = lambda m: _pad2(m, d2p, dp)
    w_ih_f = jnp.concatenate([gi_blk(wihT[:, 0 * d:1 * d]),
                              gi_blk(wihT[:, 1 * d:2 * d]),
                              gi_blk(wihT[:, 2 * d:3 * d])], axis=1)  # [2Dp, 3Dp]
    gh_blk = lambda m: _pad2(m, dp, dp)
    w_hh_f = jnp.concatenate([gh_blk(whhT[:, 0 * d:1 * d]),
                              gh_blk(whhT[:, 1 * d:2 * d]),
                              gh_blk(whhT[:, 2 * d:3 * d])], axis=1)  # [Dp, 3Dp]

    b_ih, b_hh = lp["b_ih"], lp["b_hh"]
    b_gi = jnp.concatenate([_pad1(b_ih[0 * d:1 * d] + b_hh[0 * d:1 * d], dp),
                            _pad1(b_ih[1 * d:2 * d] + b_hh[1 * d:2 * d], dp),
                            _pad1(b_ih[2 * d:3 * d], dp)])[None, :]   # [1, 3Dp]
    b_gh = jnp.concatenate([jnp.zeros((2 * dp,), jnp.float32),
                            _pad1(b_hh[2 * d:3 * d], dp)])[None, :]   # [1, 3Dp]
    return dict(w_msg=w_msg_f, b_msg=b_msg_f, w_ih=w_ih_f, w_hh=w_hh_f,
                b_gi=b_gi, b_gh=b_gh)


def pack_weights(params, ndim):
    """Stack per-layer fused/padded weights (bf16 MXU operands, f32 biases)."""
    dp = _round_up(ndim, 128)
    packed = [_pack_layer(lp, ndim, dp) for lp in params["layers"]]
    out = {}
    for k in ("w_msg", "w_ih", "w_hh"):
        out[k] = jnp.stack([p[k] for p in packed]).astype(jnp.bfloat16)
    for k in ("b_msg", "b_gi", "b_gh"):
        out[k] = jnp.stack([p[k] for p in packed]).astype(jnp.float32)
    return out


def pack_graph(edge_index, num_nodes):
    """Build padded one-hot gather/scatter matrices once per edge_index."""
    src, dst = edge_index[0], edge_index[1]
    e = src.shape[0]
    np_pad = _round_up(max(num_nodes, 8), _NODE_ALIGN)
    ep_pad = _round_up(max(e, 8), _EDGE_TILE)
    gsrc = _pad2(jax.nn.one_hot(src, np_pad, dtype=jnp.bfloat16), ep_pad, np_pad)
    gdst = _pad2(jax.nn.one_hot(dst, np_pad, dtype=jnp.bfloat16), ep_pad, np_pad)
    return dict(gsrc=gsrc, gdst=gdst, gsrc_t=gsrc.T, gdst_t=gdst.T)


# --------------------------------------------------------------------------
# Forward (per-call work only: embedding lookup, h0 padding, pallas_call).
# --------------------------------------------------------------------------
def node_emb_apply(weights, graph, h0):
    n_nodes, d = h0.shape
    L, dp, d3p = weights["w_hh"].shape          # [L, Dp, 3Dp]
    d2p, d4p = 2 * dp, 4 * dp
    ep_pad, np_pad = graph["gsrc"].shape
    te = _EDGE_TILE
    n_et = ep_pad // te

    h0_p = _pad2(h0.astype(jnp.float32), np_pad, dp)

    in_specs = [
        pl.BlockSpec((np_pad, dp), lambda l, e: (0, 0)),           # h0
        pl.BlockSpec((te, np_pad), lambda l, e: (e, 0)),           # gsrc tile
        pl.BlockSpec((te, np_pad), lambda l, e: (e, 0)),           # gdst tile
        pl.BlockSpec((np_pad, te), lambda l, e: (0, e)),           # gdst^T tile
        pl.BlockSpec((np_pad, te), lambda l, e: (0, e)),           # gsrc^T tile
        pl.BlockSpec((None, d2p, d4p), lambda l, e: (l, 0, 0)),    # fused msg W
        pl.BlockSpec((None, 1, d4p), lambda l, e: (l, 0, 0)),      # fused msg bias
        pl.BlockSpec((None, d2p, d3p), lambda l, e: (l, 0, 0)),    # fused GRU W_ih
        pl.BlockSpec((None, dp, d3p), lambda l, e: (l, 0, 0)),     # fused GRU W_hh
        pl.BlockSpec((None, 1, d3p), lambda l, e: (l, 0, 0)),      # GRU gi bias
        pl.BlockSpec((None, 1, d3p), lambda l, e: (l, 0, 0)),      # GRU gh bias
    ]

    h_out = pl.pallas_call(
        node_emb_kernel,
        out_shape=jax.ShapeDtypeStruct((np_pad, dp), jnp.float32),
        grid_spec=pltpu.PrefetchScalarGridSpec(
            num_scalar_prefetch=0,
            grid=(L, n_et),                      # layer loop x edge-tile loop
            in_specs=in_specs,
            out_specs=pl.BlockSpec((np_pad, dp), lambda l, e: (0, 0)),
            scratch_shapes=[pltpu.VMEM((np_pad, d2p), jnp.float32)],  # aggr
        ),
        input_output_aliases={0: 0},             # donate padded h0 buffer
        compiler_params=pltpu.CompilerParams(
            dimension_semantics=("arbitrary", "arbitrary"),
            vmem_limit_bytes=_vmem_limit_bytes(),
        ),
    )(h0_p, graph["gsrc"], graph["gdst"], graph["gdst_t"], graph["gsrc_t"],
      weights["w_msg"], weights["b_msg"], weights["w_ih"], weights["w_hh"],
      weights["b_gi"], weights["b_gh"])

    return h_out[:n_nodes, :d]


def node_emb_forward(emb, weights, graph, node_atts):
    """NodeEmb.forward (inference mode: dropout = identity)."""
    h0 = emb[node_atts].astype(jnp.float32)     # embedding lookup (JAX glue)
    return node_emb_apply(weights, graph, h0)


# --------------------------------------------------------------------------
# Pure-JAX f32 reference (direct transcription of the PyTorch module).
# --------------------------------------------------------------------------
def node_emb_reference(params, edge_index, node_atts):
    h = params["emb"][node_atts].astype(jnp.float32)
    N, d = h.shape
    src, dst = edge_index[0], edge_index[1]
    for lp in params["layers"]:
        h_src, h_dst = h[src], h[dst]
        a_fwd = jnp.concatenate([h_src, h_dst], 1) @ lp["w_msg"].T + lp["b_msg"]
        a_rev = jnp.concatenate([h_dst, h_src], 1) @ lp["w_rev"].T + lp["b_rev"]
        aggr = (jnp.zeros((N, 2 * d), jnp.float32)
                .at[dst].add(a_fwd).at[src].add(a_rev))
        gi = aggr @ lp["w_ih"].T + lp["b_ih"]
        gh = h @ lp["w_hh"].T + lp["b_hh"]
        r = jax.nn.sigmoid(gi[:, :d] + gh[:, :d])
        z = jax.nn.sigmoid(gi[:, d:2 * d] + gh[:, d:2 * d])
        n = jnp.tanh(gi[:, 2 * d:] + r * gh[:, 2 * d:])
        h = (1.0 - z) * n + z * h
    return h


# --------------------------------------------------------------------------
# Param init (PyTorch-layout weights: nn.Linear [out, in], GRUCell [3d, *]).
# --------------------------------------------------------------------------
def init_params(key, ndim, num_layers):
    keys = jax.random.split(key, 1 + num_layers)
    emb = jax.random.normal(keys[0], (11, ndim), jnp.float32)
    d2, d3 = 2 * ndim, 3 * ndim
    s = 1.0 / (ndim ** 0.5)

    def xavier(k, shape):
        fan_out, fan_in = shape
        lim = (6.0 / (fan_in + fan_out)) ** 0.5
        return jax.random.uniform(k, shape, jnp.float32, -lim, lim)

    layers = []
    for l in range(num_layers):
        ks = jax.random.split(keys[1 + l], 8)
        layers.append(dict(
            w_msg=xavier(ks[0], (d2, d2)),
            b_msg=jax.random.uniform(ks[1], (d2,), jnp.float32, -s, s),
            w_rev=xavier(ks[2], (d2, d2)),
            b_rev=jax.random.uniform(ks[3], (d2,), jnp.float32, -s, s),
            w_ih=jax.random.uniform(ks[4], (d3, d2), jnp.float32, -s, s),
            w_hh=jax.random.uniform(ks[5], (d3, ndim), jnp.float32, -s, s),
            b_ih=jax.random.uniform(ks[6], (d3,), jnp.float32, -s, s),
            b_hh=jax.random.uniform(ks[7], (d3,), jnp.float32, -s, s),
        ))
    return dict(emb=emb, layers=layers)


if __name__ == "__main__":
    ndim = 32
    num_layers = 2
    N = 8            # number of nodes
    E = 12           # number of directed edges before reversal doubling

    key = jax.random.PRNGKey(0)
    k_param, k_att, k_edge = jax.random.split(key, 3)

    params = init_params(k_param, ndim, num_layers)
    node_atts = jax.random.randint(k_att, (N,), 0, 11, dtype=jnp.int32)
    edge_index = jax.random.randint(k_edge, (2, E), 0, N, dtype=jnp.int32)

    # One-time preprocessing (hoisted out of the forward path).
    weights_packed = pack_weights(params, ndim)
    graph_packed = pack_graph(edge_index, N)

    fwd = jax.jit(node_emb_forward)
    h_out = fwd(params["emb"], weights_packed, graph_packed, node_atts)
    jax.block_until_ready(h_out)

    h_ref = node_emb_reference(params, edge_index, node_atts)

    assert h_out.shape == (N, ndim)
    assert bool(jnp.all(jnp.isfinite(h_out)))
    # bf16 MXU operands with f32 accumulation: loose tolerance vs f32 reference.
    assert bool(jnp.allclose(h_out, h_ref, rtol=5e-2, atol=1.5e-1)), (
        "max abs diff = %f" % float(jnp.max(jnp.abs(h_out - h_ref))))
    print("KERNEL_OK")
</pallas_src>

<mosaic_0001>
module attributes {stable_mosaic.version = 11 : i64} {
  func.func @node_emb_kernel(%arg0: i32, %arg1: i32, %arg2: memref<256x128xf32, #tpu.memory_space<vmem>>, %arg3: memref<256x256xbf16, #tpu.memory_space<vmem>>, %arg4: memref<256x256xbf16, #tpu.memory_space<vmem>>, %arg5: memref<256x256xbf16, #tpu.memory_space<vmem>>, %arg6: memref<256x256xbf16, #tpu.memory_space<vmem>>, %arg7: memref<1x256x512xbf16, #tpu.memory_space<vmem>>, %arg8: memref<1x1x512xf32, #tpu.memory_space<vmem>>, %arg9: memref<1x256x384xbf16, #tpu.memory_space<vmem>>, %arg10: memref<1x128x384xbf16, #tpu.memory_space<vmem>>, %arg11: memref<1x1x384xf32, #tpu.memory_space<vmem>>, %arg12: memref<1x1x384xf32, #tpu.memory_space<vmem>>, %arg13: memref<256x128xf32, #tpu.memory_space<vmem>>, %arg14: memref<256x256xf32, #tpu.memory_space<vmem>>) attributes {dimension_semantics = [#tpu.dimension_semantics<arbitrary>, #tpu.dimension_semantics<arbitrary>], iteration_bounds = array<i64: 2, 1>, scalar_prefetch = 0 : i64, scratch_operands = 1 : i64, tpu.core_type = #tpu.core_type<tc>, window_params = [{pipeline_mode = #tpu.pipeline_mode<synchronous>, transform_indices = @transform_0, window_bounds = array<i64: 256, 128>}, {transform_indices = @transform_1, window_bounds = array<i64: 256, 256>}, {transform_indices = @transform_2, window_bounds = array<i64: 256, 256>}, {transform_indices = @transform_3, window_bounds = array<i64: 256, 256>}, {transform_indices = @transform_4, window_bounds = array<i64: 256, 256>}, {transform_indices = @transform_5, window_bounds = array<i64: 1, 256, 512>}, {transform_indices = @transform_6, window_bounds = array<i64: 1, 1, 512>}, {transform_indices = @transform_7, window_bounds = array<i64: 1, 256, 384>}, {transform_indices = @transform_8, window_bounds = array<i64: 1, 128, 384>}, {transform_indices = @transform_9, window_bounds = array<i64: 1, 1, 384>}, {transform_indices = @transform_10, window_bounds = array<i64: 1, 1, 384>}, {pipeline_mode = #tpu.pipeline_mode<synchronous>, transform_indices = @transform_11, window_bounds = array<i64: 256, 128>}]} {
    %c0_i32 = arith.constant 0 : i32
    %0 = arith.cmpi eq, %arg0, %c0_i32 : i32
    %c0_i32_0 = arith.constant 0 : i32
    %1 = arith.cmpi eq, %arg1, %c0_i32_0 : i32
    %2 = arith.andi %0, %1 : i1
    %3 = arith.extui %2 : i1 to i32
    %c0_i32_1 = arith.constant 0 : i32
    %4 = arith.cmpi ne, %3, %c0_i32_1 : i32
    scf.if %4 {
      %c0_29 = arith.constant 0 : index
      %c0_30 = arith.constant 0 : index
      %37 = vector.load %arg2[%c0_29, %c0_30] : memref<256x128xf32, #tpu.memory_space<vmem>>, vector<256x128xf32>
      %c0_31 = arith.constant 0 : index
      %c0_32 = arith.constant 0 : index
      %38 = vector.load %arg13[%c0_31, %c0_32] : memref<256x128xf32, #tpu.memory_space<vmem>>, vector<256x128xf32>
      tpu.vector_store %arg13[%c0_31, %c0_32], %37 {strides = array<i32>} : memref<256x128xf32, #tpu.memory_space<vmem>>, vector<256x128xf32>,
    } else {
    }
    %c0_i32_2 = arith.constant 0 : i32
    %5 = arith.cmpi eq, %arg1, %c0_i32_2 : i32
    %6 = arith.extui %5 : i1 to i32
    %c0_i32_3 = arith.constant 0 : i32
    %7 = arith.cmpi ne, %6, %c0_i32_3 : i32
    scf.if %7 {
      %cst_29 = arith.constant 0.000000e+00 : f32
      %37 = vector.broadcast %cst_29 : f32 to vector<256x256xf32>
      %c0_30 = arith.constant 0 : index
      %c0_31 = arith.constant 0 : index
      %38 = vector.load %arg14[%c0_30, %c0_31] : memref<256x256xf32, #tpu.memory_space<vmem>>, vector<256x256xf32>
      tpu.vector_store %arg14[%c0_30, %c0_31], %37 {strides = array<i32>} : memref<256x256xf32, #tpu.memory_space<vmem>>, vector<256x256xf32>,
    } else {
    }
    %c0 = arith.constant 0 : index
    %c0_4 = arith.constant 0 : index
    %8 = vector.load %arg13[%c0, %c0_4] : memref<256x128xf32, #tpu.memory_space<vmem>>, vector<256x128xf32>
    %9 = arith.truncf %8 : vector<256x128xf32> to vector<256x128xbf16>
    %c0_5 = arith.constant 0 : index
    %c0_6 = arith.constant 0 : index
    %10 = vector.load %arg3[%c0_5, %c0_6] : memref<256x256xbf16, #tpu.memory_space<vmem>>, vector<256x256xbf16>
    %cst = arith.constant dense<0.000000e+00> : vector<256x128xf32>
    %11 = tpu.matmul %10, %9, %cst {dimension_numbers = #tpu.dot_dimension_numbers<[1], [0], [0], [1], [0, 0, 1, 1], [], []>} : vector<256x256xbf16>, vector<256x128xbf16>, vector<256x128xf32> -> vector<256x128xf32>
    %c0_7 = arith.constant 0 : index
    %c0_8 = arith.constant 0 : index
    %12 = vector.load %arg4[%c0_7, %c0_8] : memref<256x256xbf16, #tpu.memory_space<vmem>>, vector<256x256xbf16>
    %cst_9 = arith.constant dense<0.000000e+00> : vector<256x128xf32>
    %13 = tpu.matmul %12, %9, %cst_9 {dimension_numbers = #tpu.dot_dimension_numbers<[1], [0], [0], [1], [0, 0, 1, 1], [], []>} : vector<256x256xbf16>, vector<256x128xbf16>, vector<256x128xf32> -> vector<256x128xf32>
    %14 = tpu.concatenate %11, %13 in 1 : vector<256x128xf32>, vector<256x128xf32> -> vector<256x256xf32>
    %15 = arith.truncf %14 : vector<256x256xf32> to vector<256x256xbf16>
    %c0_10 = arith.constant 0 : index
    %c0_11 = arith.constant 0 : index
    %c0_12 = arith.constant 0 : index
    %16 = vector.load %arg7[%c0_10, %c0_11, %c0_12] : memref<1x256x512xbf16, #tpu.memory_space<vmem>>, vector<1x256x512xbf16>
    %17 = vector.shape_cast %16 : vector<1x256x512xbf16> to vector<256x512xbf16>
    %cst_13 = arith.constant dense<0.000000e+00> : vector<256x512xf32>
    %18 = tpu.matmul %15, %17, %cst_13 {dimension_numbers = #tpu.dot_dimension_numbers<[1], [0], [0], [1], [0, 0, 1, 1], [], []>} : vector<256x256xbf16>, vector<256x512xbf16>, vector<256x512xf32> -> vector<256x512xf32>
    %c0_14 = arith.constant 0 : index
    %c0_15 = arith.constant 0 : index
    %c0_16 = arith.constant 0 : index
    %19 = vector.load %arg8[%c0_14, %c0_15, %c0_16] : memref<1x1x512xf32, #tpu.memory_space<vmem>>, vector<1x1x512xf32>
    %20 = vector.shape_cast %19 : vector<1x1x512xf32> to vector<1x512xf32>
    %21 = vector.broadcast %20 : vector<1x512xf32> to vector<256x512xf32>
    %22 = arith.addf %18, %21 : vector<256x512xf32>
    %23 = arith.truncf %22 : vector<256x512xf32> to vector<256x512xbf16>
    %c0_17 = arith.constant 0 : index
    %c0_18 = arith.constant 0 : index
    %24 = vector.load %arg14[%c0_17, %c0_18] : memref<256x256xf32, #tpu.memory_space<vmem>>, vector<256x256xf32>
    %c0_19 = arith.constant 0 : index
    %c0_20 = arith.constant 0 : index
    %25 = vector.load %arg5[%c0_19, %c0_20] : memref<256x256xbf16, #tpu.memory_space<vmem>>, vector<256x256xbf16>
    %26 = vector.extract_strided_slice %23 {offsets = [0, 0], sizes = [256, 256], strides = [1, 1]} : vector<256x512xbf16> to vector<256x256xbf16>
    %cst_21 = arith.constant dense<0.000000e+00> : vector<256x256xf32>
    %27 = tpu.matmul %25, %26, %cst_21 {dimension_numbers = #tpu.dot_dimension_numbers<[1], [0], [0], [1], [0, 0, 1, 1], [], []>} : vector<256x256xbf16>, vector<256x256xbf16>, vector<256x256xf32> -> vector<256x256xf32>
    %c0_22 = arith.constant 0 : index
    %c0_23 = arith.constant 0 : index
    %28 = vector.load %arg6[%c0_22, %c0_23] : memref<256x256xbf16, #tpu.memory_space<vmem>>, vector<256x256xbf16>
    %29 = vector.extract_strided_slice %23 {offsets = [0, 256], sizes = [256, 256], strides = [1, 1]} : vector<256x512xbf16> to vector<256x256xbf16>
    %cst_24 = arith.constant dense<0.000000e+00> : vector<256x256xf32>
    %30 = tpu.matmul %28, %29, %cst_24 {dimension_numbers = #tpu.dot_dimension_numbers<[1], [0], [0], [1], [0, 0, 1, 1], [], []>} : vector<256x256xbf16>, vector<256x256xbf16>, vector<256x256xf32> -> vector<256x256xf32>
    %31 = arith.addf %27, %30 : vector<256x256xf32>
    %32 = arith.addf %24, %31 : vector<256x256xf32>
    %c0_25 = arith.constant 0 : index
    %c0_26 = arith.constant 0 : index
    %33 = vector.load %arg14[%c0_25, %c0_26] : memref<256x256xf32, #tpu.memory_space<vmem>>, vector<256x256xf32>
    tpu.vector_store %arg14[%c0_25, %c0_26], %32 {strides = array<i32>} : memref<256x256xf32, #tpu.memory_space<vmem>>, vector<256x256xf32>,
    %c0_i32_27 = arith.constant 0 : i32
    %34 = arith.cmpi eq, %arg1, %c0_i32_27 : i32
    %35 = arith.extui %34 : i1 to i32
    %c0_i32_28 = arith.constant 0 : i32
    %36 = arith.cmpi ne, %35, %c0_i32_28 : i32
    scf.if %36 {
      %c0_29 = arith.constant 0 : index
      %c0_30 = arith.constant 0 : index
      %37 = vector.load %arg14[%c0_29, %c0_30] : memref<256x256xf32, #tpu.memory_space<vmem>>, vector<256x256xf32>
      %38 = arith.truncf %37 : vector<256x256xf32> to vector<256x256xbf16>
      %c0_31 = arith.constant 0 : index
      %c0_32 = arith.constant 0 : index
      %c0_33 = arith.constant 0 : index
      %39 = vector.load %arg9[%c0_31, %c0_32, %c0_33] : memref<1x256x384xbf16, #tpu.memory_space<vmem>>, vector<1x256x384xbf16>
      %40 = vector.shape_cast %39 : vector<1x256x384xbf16> to vector<256x384xbf16>
      %cst_34 = arith.constant dense<0.000000e+00> : vector<256x384xf32>
      %41 = tpu.matmul %38, %40, %cst_34 {dimension_numbers = #tpu.dot_dimension_numbers<[1], [0], [0], [1], [0, 0, 1, 1], [], []>} : vector<256x256xbf16>, vector<256x384xbf16>, vector<256x384xf32> -> vector<256x384xf32>
      %c0_35 = arith.constant 0 : index
      %c0_36 = arith.constant 0 : index
      %c0_37 = arith.constant 0 : index
      %42 = vector.load %arg11[%c0_35, %c0_36, %c0_37] : memref<1x1x384xf32, #tpu.memory_space<vmem>>, vector<1x1x384xf32>
      %43 = vector.shape_cast %42 : vector<1x1x384xf32> to vector<1x384xf32>
      %44 = vector.broadcast %43 : vector<1x384xf32> to vector<256x384xf32>
      %45 = arith.addf %41, %44 : vector<256x384xf32>
      %c0_38 = arith.constant 0 : index
      %c0_39 = arith.constant 0 : index
      %c0_40 = arith.constant 0 : index
      %46 = vector.load %arg10[%c0_38, %c0_39, %c0_40] : memref<1x128x384xbf16, #tpu.memory_space<vmem>>, vector<1x128x384xbf16>
      %47 = vector.shape_cast %46 : vector<1x128x384xbf16> to vector<128x384xbf16>
      %cst_41 = arith.constant dense<0.000000e+00> : vector<256x384xf32>
      %48 = tpu.matmul %9, %47, %cst_41 {dimension_numbers = #tpu.dot_dimension_numbers<[1], [0], [0], [1], [0, 0, 1, 1], [], []>} : vector<256x128xbf16>, vector<128x384xbf16>, vector<256x384xf32> -> vector<256x384xf32>
      %c0_42 = arith.constant 0 : index
      %c0_43 = arith.constant 0 : index
      %c0_44 = arith.constant 0 : index
      %49 = vector.load %arg12[%c0_42, %c0_43, %c0_44] : memref<1x1x384xf32, #tpu.memory_space<vmem>>, vector<1x1x384xf32>
      %50 = vector.shape_cast %49 : vector<1x1x384xf32> to vector<1x384xf32>
      %51 = vector.broadcast %50 : vector<1x384xf32> to vector<256x384xf32>
      %52 = arith.addf %48, %51 : vector<256x384xf32>
      %53 = vector.extract_strided_slice %45 {offsets = [0, 0], sizes = [256, 128], strides = [1, 1]} : vector<256x384xf32> to vector<256x128xf32>
      %54 = vector.extract_strided_slice %52 {offsets = [0, 0], sizes = [256, 128], strides = [1, 1]} : vector<256x384xf32> to vector<256x128xf32>
      %55 = arith.addf %53, %54 : vector<256x128xf32>
      %56 = arith.negf %55 : vector<256x128xf32>
      %57 = math.exp %56 : vector<256x128xf32>
      %cst_45 = arith.constant 1.000000e+00 : f32
      %58 = vector.broadcast %cst_45 : f32 to vector<256x128xf32>
      %59 = arith.addf %58, %57 : vector<256x128xf32>
      %60 = arith.divf %58, %59 : vector<256x128xf32>
      %61 = vector.extract_strided_slice %45 {offsets = [0, 128], sizes = [256, 128], strides = [1, 1]} : vector<256x384xf32> to vector<256x128xf32>
      %62 = vector.extract_strided_slice %52 {offsets = [0, 128], sizes = [256, 128], strides = [1, 1]} : vector<256x384xf32> to vector<256x128xf32>
      %63 = arith.addf %61, %62 : vector<256x128xf32>
      %64 = arith.negf %63 : vector<256x128xf32>
      %65 = math.exp %64 : vector<256x128xf32>
      %cst_46 = arith.constant 1.000000e+00 : f32
      %66 = vector.broadcast %cst_46 : f32 to vector<256x128xf32>
      %67 = arith.addf %66, %65 : vector<256x128xf32>
      %68 = arith.divf %66, %67 : vector<256x128xf32>
      %69 = vector.extract_strided_slice %45 {offsets = [0, 256], sizes = [256, 128], strides = [1, 1]} : vector<256x384xf32> to vector<256x128xf32>
      %70 = vector.extract_strided_slice %52 {offsets = [0, 256], sizes = [256, 128], strides = [1, 1]} : vector<256x384xf32> to vector<256x128xf32>
      %71 = arith.mulf %60, %70 : vector<256x128xf32>
      %72 = arith.addf %69, %71 : vector<256x128xf32>
      %73 = math.tanh %72 : vector<256x128xf32>
      %cst_47 = arith.constant 1.000000e+00 : f32
      %74 = vector.broadcast %cst_47 : f32 to vector<256x128xf32>
      %75 = arith.subf %74, %68 : vector<256x128xf32>
      %76 = arith.mulf %75, %73 : vector<256x128xf32>
      %77 = arith.mulf %68, %8 : vector<256x128xf32>
      %78 = arith.addf %76, %77 : vector<256x128xf32>
      %c0_48 = arith.constant 0 : index
      %c0_49 = arith.constant 0 : index
      %79 = vector.load %arg13[%c0_48, %c0_49] : memref<256x128xf32, #tpu.memory_space<vmem>>, vector<256x128xf32>
      tpu.vector_store %arg13[%c0_48, %c0_49], %78 {strides = array<i32>} : memref<256x128xf32, #tpu.memory_space<vmem>>, vector<256x128xf32>,
    } else {
    }
    return
  }
  func.func @transform_0(%arg0: i32, %arg1: i32) -> (i32, i32) {
    %c0_i32 = arith.constant 0 : i32
    %c0_i32_0 = arith.constant 0 : i32
    %c0_i32_1 = arith.constant 0 : i32
    return %c0_i32, %c0_i32_0 : i32, i32
  }
  func.func @transform_1(%arg0: i32, %arg1: i32) -> (i32, i32) {
    %c0_i32 = arith.constant 0 : i32
    %c0_i32_0 = arith.constant 0 : i32
    return %arg1, %c0_i32 : i32, i32
  }
  func.func @transform_2(%arg0: i32, %arg1: i32) -> (i32, i32) {
    %c0_i32 = arith.constant 0 : i32
    %c0_i32_0 = arith.constant 0 : i32
    return %arg1, %c0_i32 : i32, i32
  }
  func.func @transform_3(%arg0: i32, %arg1: i32) -> (i32, i32) {
    %c0_i32 = arith.constant 0 : i32
    %c0_i32_0 = arith.constant 0 : i32
    return %c0_i32, %arg1 : i32, i32
  }
  func.func @transform_4(%arg0: i32, %arg1: i32) -> (i32, i32) {
    %c0_i32 = arith.constant 0 : i32
    %c0_i32_0 = arith.constant 0 : i32
    return %c0_i32, %arg1 : i32, i32
  }
  func.func @transform_5(%arg0: i32, %arg1: i32) -> (i32, i32, i32) {
    %c0_i32 = arith.constant 0 : i32
    %c0_i32_0 = arith.constant 0 : i32
    %c0_i32_1 = arith.constant 0 : i32
    return %arg0, %c0_i32, %c0_i32_0 : i32, i32, i32
  }
  func.func @transform_6(%arg0: i32, %arg1: i32) -> (i32, i32, i32) {
    %c0_i32 = arith.constant 0 : i32
    %c0_i32_0 = arith.constant 0 : i32
    %c0_i32_1 = arith.constant 0 : i32
    return %arg0, %c0_i32, %c0_i32_0 : i32, i32, i32
  }
  func.func @transform_7(%arg0: i32, %arg1: i32) -> (i32, i32, i32) {
    %c0_i32 = arith.constant 0 : i32
    %c0_i32_0 = arith.constant 0 : i32
    %c0_i32_1 = arith.constant 0 : i32
    return %arg0, %c0_i32, %c0_i32_0 : i32, i32, i32
  }
  func.func @transform_8(%arg0: i32, %arg1: i32) -> (i32, i32, i32) {
    %c0_i32 = arith.constant 0 : i32
    %c0_i32_0 = arith.constant 0 : i32
    %c0_i32_1 = arith.constant 0 : i32
    return %arg0, %c0_i32, %c0_i32_0 : i32, i32, i32
  }
  func.func @transform_9(%arg0: i32, %arg1: i32) -> (i32, i32, i32) {
    %c0_i32 = arith.constant 0 : i32
    %c0_i32_0 = arith.constant 0 : i32
    %c0_i32_1 = arith.constant 0 : i32
    return %arg0, %c0_i32, %c0_i32_0 : i32, i32, i32
  }
  func.func @transform_10(%arg0: i32, %arg1: i32) -> (i32, i32, i32) {
    %c0_i32 = arith.constant 0 : i32
    %c0_i32_0 = arith.constant 0 : i32
    %c0_i32_1 = arith.constant 0 : i32
    return %arg0, %c0_i32, %c0_i32_0 : i32, i32, i32
  }
  func.func @transform_11(%arg0: i32, %arg1: i32) -> (i32, i32) {
    %c0_i32 = arith.constant 0 : i32
    %c0_i32_0 = arith.constant 0 : i32
    %c0_i32_1 = arith.constant 0 : i32
    return %c0_i32, %c0_i32_0 : i32, i32
  }
}

</mosaic_0001>

<llo_original>
// kernel: node_emb_forward.1
$region0: #{node_emb_forward.1}
  #allocation0 [shape = 'u32[]', space=smem, size = 0x4, offset = 0x4, fixed_abs, tag = 'smem constant byte address 0x4 - core index']
  #allocation1 [shape = 'u32[144,128]{1,0:T(1,128)}', space=vmem, size = 0x12000, scoped, tag = 'internal scratch']
  #allocation2 [shape = 'f32[256,256]{1,0:T(8,128)}', space=vmem, size = 0x40000, scoped, tag = 'scratch operand']
  %s0 = inlined_call_operand.vmem [shape: f32[256,128], index: 0, kind: input, shape index: {}, may-alias: {0,11}]
  %s1 = inlined_call_operand.vmem [shape: bf16[256,256], index: 1, kind: input, shape index: {}]
  %s2 = inlined_call_operand.hbm [shape: bf16[256,256], index: 2, kind: input, shape index: {}]
  %s3 = inlined_call_operand.hbm [shape: bf16[256,256], index: 3, kind: input, shape index: {}]
  %s4 = inlined_call_operand.hbm [shape: bf16[256,256], index: 4, kind: input, shape index: {}]
  %s5 = inlined_call_operand.hbm [shape: bf16[2,256,512], index: 5, kind: input, shape index: {}]
  %s6 = inlined_call_operand.vmem [shape: f32[2,1,512], index: 6, kind: input, shape index: {}]
  %s7 = inlined_call_operand.hbm [shape: bf16[2,256,384], index: 7, kind: input, shape index: {}]
  %s8 = inlined_call_operand.hbm [shape: bf16[2,128,384], index: 8, kind: input, shape index: {}]
  %s9 = inlined_call_operand.vmem [shape: f32[2,1,384], index: 9, kind: input, shape index: {}]
  %s10 = inlined_call_operand.vmem [shape: f32[2,1,384], index: 10, kind: input, shape index: {}]
  %s11 = inlined_call_operand.vmem [shape: f32[256,128], index: 11, kind: output, shape index: {}, may-alias: {0,11}]
  %s12 = sld [smem:[#allocation0]]
  $region113: #{node_emb_forward.1} parent=0
    _
  %s14 = ssub.s32 1, %s12
  %s15 = scalar_select 0, %s14, %s12
  $region1: #{node_emb_forward.1} parent=0
    #allocation3 [shape = 'u8[131072]{0}', space=vmem, size = 0x20000, scoped, tag = 'input window, operand 2, single buffered']
    #allocation4 [shape = 's32[2]{0}', space=sflag, size = 0x8, scoped, tag = 'scoped memory for node_emb_forward.1']
    #allocation5 [shape = 'u8[131072]{0}', space=vmem, size = 0x20000, scoped, tag = 'input window, operand 3, single buffered']
    #allocation6 [shape = 's32[1]{0}', space=sflag, size = 0x4, scoped, tag = 'scoped memory for node_emb_forward.1']
    #allocation7 [shape = 'u8[131072]{0}', space=vmem, size = 0x20000, scoped, tag = 'input window, operand 4, single buffered']
    #allocation8 [shape = 'u8[524288]{0}', space=vmem, size = 0x80000, scoped, tag = 'input window, operand 5']
    #allocation9 [shape = 's32[2]{0}', space=sflag, size = 0x8, scoped, tag = 'scoped memory for node_emb_forward.1']
    #allocation10 [shape = 'u8[393216]{0}', space=vmem, size = 0x60000, scoped, tag = 'input window, operand 7']
    #allocation11 [shape = 'u8[196608]{0}', space=vmem, size = 0x30000, scoped, tag = 'input window, operand 8']
    #allocation12 [shape = 's32[2]{0}', space=sflag, size = 0x8, scoped, tag = 'scoped memory for node_emb_forward.1']
    %16 = vsyncpa [#allocation4], 0
    %17 = vsyncpa [#allocation6], 0
    %18 = vsyncpa [#allocation9], 0
    %s19 = scalar_lea.sflag [#allocation9], 1
    %20 = vsyncpa %s19, 0
    %21 = vsyncpa [#allocation12], 0
    %s22 = scalar_lea.sflag [#allocation12], 1
    %23 = vsyncpa %s22, 0
    loop: start=0, step=1, limit=4
    $region2: #{node_emb_forward.1} parent=1 // loop_pre_header
      _
    $region3: #{node_emb_forward.1} parent=1 // loop_header
      %s25 = sphi 0, %s29
      %p26 = scmp.ge.s32.totalorder %s25, 4
      %s32 = sphi 0, %s44
      %s33 = sphi 0, %s40
      %s34 = sphi 0, %s32
      %s35 = sphi 0, %s33
      %s36 = sphi 0, %s34
      %s37 = sphi 0, %s35
      %s45 = sphi 0, %s45
      %s47 = sphi 0, %s45
      %s48 = sphi 0, %s47
      %s62 = sphi 0, %s48
      %s68 = sphi 0, %s70
      %s71 = sphi 0, %s68
      %s72 = sphi 0, %s71
      %s88 = sphi 0, %s72
      %s94 = sphi 0, %s96
      %s97 = sphi 0, %s94
      %s98 = sphi 0, %s97
      %s114 = sphi 0, %s98
      %s120 = sphi 0, %s122
      %s123 = sphi 0, %s120
      %s124 = sphi 0, %s123
      %s140 = sphi 0, %s124
      %s146 = sphi 0, %s148
      %s149 = sphi 0, %s146
      %s150 = sphi 0, %s149
      %s166 = sphi 0, %s150
      %s172 = sphi 0, %s174
      %s175 = sphi 0, %s172
      %s176 = sphi 0, %s175
      %s192 = sphi 0, %s176
      %s198 = sphi 0, %s200
      %s201 = sphi 0, %s198
      %s202 = sphi 0, %s201
      %s218 = sphi 0, %s202
      %s224 = sphi 0, %s226
      %s227 = sphi 0, %s224
      %s228 = sphi 0, %s227
      %s244 = sphi 0, %s228
      %s250 = sphi 0, %s252
      %s253 = sphi 0, %s250
      %s254 = sphi 0, %s253
      %s270 = sphi 0, %s254
      %s276 = sphi 0, %s278
      %s279 = sphi 0, %s276
      %s280 = sphi 0, %s279
      %s296 = sphi 0, %s280
      %s302 = sphi 0, %s304
      %s305 = sphi 0, %s302
      %s306 = sphi 0, %s305
      %s322 = sphi 0, %s306
      %s326 = sphi 0, %s326
      %s328 = sphi 0, %s326
      %s329 = sphi 0, %s328
      %s343 = sphi 0, %s329
    $region4: #{node_emb_forward.1} parent=1 // loop_header_branch
      %28 = sbr.rel (%p26) target = $region8
    $region5: #{node_emb_forward.1} parent=1 // loop_body
      %s30 = ssub.s32 %s25, 1
      %s31 = ssub.s32 %s25, 2
      %s38 = sadd.s32 1, %s33
      %p39 = scmp.ge.s32.totalorder %s38, 1
      %s40 = scalar_select %p39, 0, %s38
      %s41 = sadd.s32 1, %s32
      %s42 = scalar_select %p39, %s41, %s32
      %p43 = scmp.ge.s32.totalorder %s42, 2
      %s44 = scalar_select %p43, 0, %s42
      %s46 = sadd.s32 %s45, 1
      %p49 = scmp.eq.s32.totalorder %s25, 1
      %p50 = scmp.ne.s32.totalorder %s45, %s47
      %p51 = scmp.eq.s32.totalorder %s25, 0
      %p52 = por %p50, %p51
      %p53 = scmp.ne.s32.totalorder %s45, %s47
      %p54 = scmp.eq.s32.totalorder %s30, 1
      %p55 = por %p53, %p54
      %p56 = scmp.ne.s32.totalorder %s47, %s48
      %p57 = scmp.eq.s32.totalorder %s30, 0
      %p58 = por %p56, %p57
      %p59 = scmp.ne.s32.totalorder %s47, %s48
      %p60 = scmp.eq.s32.totalorder %s31, 1
      %p61 = por %p59, %p60
      %p63 = scmp.ne.s32.totalorder %s48, %s62
      %p64 = scmp.eq.s32.totalorder %s31, 0
      %p65 = por %p63, %p64
      %s66 = ssub.s32 %s33, %s40
      %p67 = scmp.eq.s32.totalorder %s66, 0
      %s69 = sadd.s32 %s68, 1
      %s70 = scalar_select %p67, %s68, %s69
      %p73 = pneg %p67
      %p74 = scmp.eq.s32.totalorder %s25, 1
      %p75 = por %p73, %p74
      %p76 = scmp.ne.s32.totalorder %s68, %s71
      %p77 = scmp.eq.s32.totalorder %s25, 0
      %p78 = por %p76, %p77
      %p79 = scmp.ne.s32.totalorder %s68, %s71
      %p80 = scmp.eq.s32.totalorder %s30, 1
      %p81 = por %p79, %p80
      %p82 = scmp.ne.s32.totalorder %s71, %s72
      %p83 = scmp.eq.s32.totalorder %s30, 0
      %p84 = por %p82, %p83
      %p85 = scmp.ne.s32.totalorder %s71, %s72
      %p86 = scmp.eq.s32.totalorder %s31, 1
      %p87 = por %p85, %p86
      %p89 = scmp.ne.s32.totalorder %s72, %s88
      %p90 = scmp.eq.s32.totalorder %s31, 0
      %p91 = por %p89, %p90
      %s92 = ssub.s32 %s33, %s40
      %p93 = scmp.eq.s32.totalorder %s92, 0
      %s95 = sadd.s32 %s94, 1
      %s96 = scalar_select %p93, %s94, %s95
      %p99 = pneg %p93
      %p100 = scmp.eq.s32.totalorder %s25, 1
      %p101 = por %p99, %p100
      %p102 = scmp.ne.s32.totalorder %s94, %s97
      %p103 = scmp.eq.s32.totalorder %s25, 0
      %p104 = por %p102, %p103
      %p105 = scmp.ne.s32.totalorder %s94, %s97
      %p106 = scmp.eq.s32.totalorder %s30, 1
      %p107 = por %p105, %p106
      %p108 = scmp.ne.s32.totalorder %s97, %s98
      %p109 = scmp.eq.s32.totalorder %s30, 0
      %p110 = por %p108, %p109
      %p111 = scmp.ne.s32.totalorder %s97, %s98
      %p112 = scmp.eq.s32.totalorder %s31, 1
      %p113 = por %p111, %p112
      %p115 = scmp.ne.s32.totalorder %s98, %s114
      %p116 = scmp.eq.s32.totalorder %s31, 0
      %p117 = por %p115, %p116
      %s118 = ssub.s32 %s33, %s40
      %p119 = scmp.eq.s32.totalorder %s118, 0
      %s121 = sadd.s32 %s120, 1
      %s122 = scalar_select %p119, %s120, %s121
      %p125 = pneg %p119
      %p126 = scmp.eq.s32.totalorder %s25, 1
      %p127 = por %p125, %p126
      %p128 = scmp.ne.s32.totalorder %s120, %s123
      %p129 = scmp.eq.s32.totalorder %s25, 0
      %p130 = por %p128, %p129
      %p131 = scmp.ne.s32.totalorder %s120, %s123
      %p132 = scmp.eq.s32.totalorder %s30, 1
      %p133 = por %p131, %p132
      %p134 = scmp.ne.s32.totalorder %s123, %s124
      %p135 = scmp.eq.s32.totalorder %s30, 0
      %p136 = por %p134, %p135
      %p137 = scmp.ne.s32.totalorder %s123, %s124
      %p138 = scmp.eq.s32.totalorder %s31, 1
      %p139 = por %p137, %p138
      %p141 = scmp.ne.s32.totalorder %s124, %s140
      %p142 = scmp.eq.s32.totalorder %s31, 0
      %p143 = por %p141, %p142
      %s144 = ssub.s32 %s33, %s40
      %p145 = scmp.eq.s32.totalorder %s144, 0
      %s147 = sadd.s32 %s146, 1
      %s148 = scalar_select %p145, %s146, %s147
      %p151 = pneg %p145
      %p152 = scmp.eq.s32.totalorder %s25, 1
      %p153 = por %p151, %p152
      %p154 = scmp.ne.s32.totalorder %s146, %s149
      %p155 = scmp.eq.s32.totalorder %s25, 0
      %p156 = por %p154, %p155
      %p157 = scmp.ne.s32.totalorder %s146, %s149
      %p158 = scmp.eq.s32.totalorder %s30, 1
      %p159 = por %p157, %p158
      %p160 = scmp.ne.s32.totalorder %s149, %s150
      %p161 = scmp.eq.s32.totalorder %s30, 0
      %p162 = por %p160, %p161
      %p163 = scmp.ne.s32.totalorder %s149, %s150
      %p164 = scmp.eq.s32.totalorder %s31, 1
      %p165 = por %p163, %p164
      %p167 = scmp.ne.s32.totalorder %s150, %s166
      %p168 = scmp.eq.s32.totalorder %s31, 0
      %p169 = por %p167, %p168
      %s170 = ssub.s32 %s32, %s44
      %p171 = scmp.eq.s32.totalorder %s170, 0
      %s173 = sadd.s32 %s172, 1
      %s174 = scalar_select %p171, %s172, %s173
      %p177 = pneg %p171
      %p178 = scmp.eq.s32.totalorder %s25, 1
      %p179 = por %p177, %p178
      %p180 = scmp.ne.s32.totalorder %s172, %s175
      %p181 = scmp.eq.s32.totalorder %s25, 0
      %p182 = por %p180, %p181
      %p183 = scmp.ne.s32.totalorder %s172, %s175
      %p184 = scmp.eq.s32.totalorder %s30, 1
      %p185 = por %p183, %p184
      %p186 = scmp.ne.s32.totalorder %s175, %s176
      %p187 = scmp.eq.s32.totalorder %s30, 0
      %p188 = por %p186, %p187
      %p189 = scmp.ne.s32.totalorder %s175, %s176
      %p190 = scmp.eq.s32.totalorder %s31, 1
      %p191 = por %p189, %p190
      %p193 = scmp.ne.s32.totalorder %s176, %s192
      %p194 = scmp.eq.s32.totalorder %s31, 0
      %p195 = por %p193, %p194
      %s196 = ssub.s32 %s32, %s44
      %p197 = scmp.eq.s32.totalorder %s196, 0
      %s199 = sadd.s32 %s198, 1
      %s200 = scalar_select %p197, %s198, %s199
      %p203 = pneg %p197
      %p204 = scmp.eq.s32.totalorder %s25, 1
      %p205 = por %p203, %p204
      %p206 = scmp.ne.s32.totalorder %s198, %s201
      %p207 = scmp.eq.s32.totalorder %s25, 0
      %p208 = por %p206, %p207
      %p209 = scmp.ne.s32.totalorder %s198, %s201
      %p210 = scmp.eq.s32.totalorder %s30, 1
      %p211 = por %p209, %p210
      %p212 = scmp.ne.s32.totalorder %s201, %s202
      %p213 = scmp.eq.s32.totalorder %s30, 0
      %p214 = por %p212, %p213
      %p215 = scmp.ne.s32.totalorder %s201, %s202
      %p216 = scmp.eq.s32.totalorder %s31, 1
      %p217 = por %p215, %p216
      %p219 = scmp.ne.s32.totalorder %s202, %s218
      %p220 = scmp.eq.s32.totalorder %s31, 0
      %p221 = por %p219, %p220
      %s222 = ssub.s32 %s32, %s44
      %p223 = scmp.eq.s32.totalorder %s222, 0
      %s225 = sadd.s32 %s224, 1
      %s226 = scalar_select %p223, %s224, %s225
      %p229 = pneg %p223
      %p230 = scmp.eq.s32.totalorder %s25, 1
      %p231 = por %p229, %p230
      %p232 = scmp.ne.s32.totalorder %s224, %s227
      %p233 = scmp.eq.s32.totalorder %s25, 0
      %p234 = por %p232, %p233
      %p235 = scmp.ne.s32.totalorder %s224, %s227
      %p236 = scmp.eq.s32.totalorder %s30, 1
      %p237 = por %p235, %p236
      %p238 = scmp.ne.s32.totalorder %s227, %s228
      %p239 = scmp.eq.s32.totalorder %s30, 0
      %p240 = por %p238, %p239
      %p241 = scmp.ne.s32.totalorder %s227, %s228
      %p242 = scmp.eq.s32.totalorder %s31, 1
      %p243 = por %p241, %p242
      %p245 = scmp.ne.s32.totalorder %s228, %s244
      %p246 = scmp.eq.s32.totalorder %s31, 0
      %p247 = por %p245, %p246
      %s248 = ssub.s32 %s32, %s44
      %p249 = scmp.eq.s32.totalorder %s248, 0
      %s251 = sadd.s32 %s250, 1
      %s252 = scalar_select %p249, %s250, %s251
      %p255 = pneg %p249
      %p256 = scmp.eq.s32.totalorder %s25, 1
      %p257 = por %p255, %p256
      %p258 = scmp.ne.s32.totalorder %s250, %s253
      %p259 = scmp.eq.s32.totalorder %s25, 0
      %p260 = por %p258, %p259
      %p261 = scmp.ne.s32.totalorder %s250, %s253
      %p262 = scmp.eq.s32.totalorder %s30, 1
      %p263 = por %p261, %p262
      %p264 = scmp.ne.s32.totalorder %s253, %s254
      %p265 = scmp.eq.s32.totalorder %s30, 0
      %p266 = por %p264, %p265
      %p267 = scmp.ne.s32.totalorder %s253, %s254
      %p268 = scmp.eq.s32.totalorder %s31, 1
      %p269 = por %p267, %p268
      %p271 = scmp.ne.s32.totalorder %s254, %s270
      %p272 = scmp.eq.s32.totalorder %s31, 0
      %p273 = por %p271, %p272
      %s274 = ssub.s32 %s32, %s44
      %p275 = scmp.eq.s32.totalorder %s274, 0
      %s277 = sadd.s32 %s276, 1
      %s278 = scalar_select %p275, %s276, %s277
      %p281 = pneg %p275
      %p282 = scmp.eq.s32.totalorder %s25, 1
      %p283 = por %p281, %p282
      %p284 = scmp.ne.s32.totalorder %s276, %s279
      %p285 = scmp.eq.s32.totalorder %s25, 0
      %p286 = por %p284, %p285
      %p287 = scmp.ne.s32.totalorder %s276, %s279
      %p288 = scmp.eq.s32.totalorder %s30, 1
      %p289 = por %p287, %p288
      %p290 = scmp.ne.s32.totalorder %s279, %s280
      %p291 = scmp.eq.s32.totalorder %s30, 0
      %p292 = por %p290, %p291
      %p293 = scmp.ne.s32.totalorder %s279, %s280
      %p294 = scmp.eq.s32.totalorder %s31, 1
      %p295 = por %p293, %p294
      %p297 = scmp.ne.s32.totalorder %s280, %s296
      %p298 = scmp.eq.s32.totalorder %s31, 0
      %p299 = por %p297, %p298
      %s300 = ssub.s32 %s32, %s44
      %p301 = scmp.eq.s32.totalorder %s300, 0
      %s303 = sadd.s32 %s302, 1
      %s304 = scalar_select %p301, %s302, %s303
      %p307 = pneg %p301
      %p308 = scmp.eq.s32.totalorder %s25, 1
      %p309 = por %p307, %p308
      %p310 = scmp.ne.s32.totalorder %s302, %s305
      %p311 = scmp.eq.s32.totalorder %s25, 0
      %p312 = por %p310, %p311
      %p313 = scmp.ne.s32.totalorder %s302, %s305
      %p314 = scmp.eq.s32.totalorder %s30, 1
      %p315 = por %p313, %p314
      %p316 = scmp.ne.s32.totalorder %s305, %s306
      %p317 = scmp.eq.s32.totalorder %s30, 0
      %p318 = por %p316, %p317
      %p319 = scmp.ne.s32.totalorder %s305, %s306
      %p320 = scmp.eq.s32.totalorder %s31, 1
      %p321 = por %p319, %p320
      %p323 = scmp.ne.s32.totalorder %s306, %s322
      %p324 = scmp.eq.s32.totalorder %s31, 0
      %p325 = por %p323, %p324
      %s327 = sadd.s32 %s326, 1
      %p330 = scmp.eq.s32.totalorder %s25, 1
      %p331 = scmp.ne.s32.totalorder %s326, %s328
      %p332 = scmp.eq.s32.totalorder %s25, 0
      %p333 = por %p331, %p332
      %p334 = scmp.ne.s32.totalorder %s326, %s328
      %p335 = scmp.eq.s32.totalorder %s30, 1
      %p336 = por %p334, %p335
      %p337 = scmp.ne.s32.totalorder %s328, %s329
      %p338 = scmp.eq.s32.totalorder %s30, 0
      %p339 = por %p337, %p338
      %p340 = scmp.ne.s32.totalorder %s328, %s329
      %p341 = scmp.eq.s32.totalorder %s31, 1
      %p342 = por %p340, %p341
      %p344 = scmp.ne.s32.totalorder %s329, %s343
      %p345 = scmp.eq.s32.totalorder %s31, 0
      %p346 = por %p344, %p345
      %p347 = scmp.le.s32.totalorder 1, %s25
      %p348 = scmp.lt.s32.totalorder %s25, 3
      %p349 = pnand %p347, %p348
      %p350 = pneg %p349
      // Predicated region
      $region9: #{node_emb_forward.1} parent=5 // pred_check
        _
      $region10: #{node_emb_forward.1} parent=5 // pred_check_branch
        %352 = sbr.rel (%p349) target = $region12
      $region11: #{node_emb_forward.1} parent=5 // pred_region
        %s353 = ssub.s32 %s25, 1
        // Predicated region
        $region13: #{node_emb_forward.1} parent=11 // pred_check
          %p354 = pneg %p58
        $region14: #{node_emb_forward.1} parent=11 // pred_check_branch
          %356 = sbr.rel (%p354) target = $region16
        $region15: #{node_emb_forward.1} parent=11 // pred_region
          _
        $region16: #{node_emb_forward.1} parent=11 // pred_fallthru
          _
        // Predicated region
        $region17: #{node_emb_forward.1} parent=11 // pred_check
          %p357 = pneg %p84
        $region18: #{node_emb_forward.1} parent=11 // pred_check_branch
          %359 = sbr.rel (%p357) target = $region20
        $region19: #{node_emb_forward.1} parent=11 // pred_region
          %s360 = smul.u32 32, %s35
          %p361 = scmp.lt.s32.totalorder %s360, 31
          %s362 = scalar_select %p361, %s360, 31
          %s363 = smul.addr %s362, 2
          %s364 = smul.addr %s363, 4
          %s365 = scalar_lea.vmem %s1, %s364
          %s366 = smul.u32 32, %s35
        $region20: #{node_emb_forward.1} parent=11 // pred_fallthru
          _
        // Predicated region
        $region21: #{node_emb_forward.1} parent=11 // pred_check
          %p367 = pneg %p110
        $region22: #{node_emb_forward.1} parent=11 // pred_check_branch
          %369 = sbr.rel (%p367) target = $region24
        $region23: #{node_emb_forward.1} parent=11 // pred_region
          %s370 = smul.u32 32, %s35
          %s372 = ssub.s32 4096, 4096
          %373 = vsyncadd [#allocation4], %s372
          %s374 = smul.addr %s370, 2
          %s375 = smul.addr %s374, 64
          %s376 = scalar_lea.hbm %s2, %s375
          %s377 = sshll.u32 [#allocation3], 4
          %s378 = int_to_ptr.vmem [resolvable:$true] %s377
          %383 = dma.hbm_to_vmem [thread:$0]  %s376, 4096, %s378, [#allocation4], 128, 128, 8
        $region24: #{node_emb_forward.1} parent=11 // pred_fallthru
          _
        // Predicated region
        $region25: #{node_emb_forward.1} parent=11 // pred_check
          %p384 = pneg %p136
        $region26: #{node_emb_forward.1} parent=11 // pred_check_branch
          %386 = sbr.rel (%p384) target = $region28
        $region27: #{node_emb_forward.1} parent=11 // pred_region
          %s387 = smul.u32 2, %s35
          %s389 = ssub.s32 4096, 4096
          %390 = vsyncadd [#allocation6], %s389
          %s391 = smul.addr %s387, 64
          %s392 = scalar_lea.hbm %s3, %s391
          %s393 = sshll.u32 [#allocation5], 4
          %s394 = int_to_ptr.vmem [resolvable:$true] %s393
          %399 = dma.hbm_to_vmem [thread:$0]  %s392, 4096, %s394, [#allocation6], 128, 128, 8
        $region28: #{node_emb_forward.1} parent=11 // pred_fallthru
          _
        // Predicated region
        $region29: #{node_emb_forward.1} parent=11 // pred_check
          %p400 = pneg %p162
        $region30: #{node_emb_forward.1} parent=11 // pred_check_branch
          %402 = sbr.rel (%p400) target = $region32
        $region31: #{node_emb_forward.1} parent=11 // pred_region
          %s403 = smul.u32 2, %s35
          %s405 = ssub.s32 4096, 4096
          %406 = vsyncadd [#allocation6], %s405
          %s407 = smul.addr %s403, 64
          %s408 = scalar_lea.hbm %s4, %s407
          %s409 = sshll.u32 [#allocation7], 4
          %s410 = int_to_ptr.vmem [resolvable:$true] %s409
          %415 = dma.hbm_to_vmem [thread:$0]  %s408, 4096, %s410, [#allocation6], 128, 128, 8
        $region32: #{node_emb_forward.1} parent=11 // pred_fallthru
          _
      $region12: #{node_emb_forward.1} parent=5 // pred_fallthru
        _
      %p416 = scmp.lt.s32.totalorder %s25, 2
      // Predicated region
      $region33: #{node_emb_forward.1} parent=5 // pred_check
        %p417 = pneg %p416
      $region34: #{node_emb_forward.1} parent=5 // pred_check_branch
        %419 = sbr.rel (%p417) target = $region36
      $region35: #{node_emb_forward.1} parent=5 // pred_region
        // Predicated region
        $region37: #{node_emb_forward.1} parent=35 // pred_check
          %p420 = pneg %p182
        $region38: #{node_emb_forward.1} parent=35 // pred_check_branch
          %422 = sbr.rel (%p420) target = $region40
        $region39: #{node_emb_forward.1} parent=35 // pred_region
          %s423 = sand.u32 %s25, 1
          %s424 = scalar_lea.sflag [#allocation9], %s423
          %s425 = sand.u32 %s172, 1
          %s426 = smul.addr %s425, 512
          %s427 = scalar_lea.vmem [#allocation8], %s426
          %s429 = ssub.s32 8192, 8192
          %430 = vsyncadd %s424, %s429
          %s431 = smul.addr %s32, 128
          %s432 = smul.addr %s431, 64
          %s433 = scalar_lea.hbm %s5, %s432
          %s434 = sshll.u32 %s427, 4
          %s435 = int_to_ptr.vmem [resolvable:$true] %s434
          %440 = dma.hbm_to_vmem [thread:$0]  %s433, 8192, %s435, %s424, 256, 256, 16
        $region40: #{node_emb_forward.1} parent=35 // pred_fallthru
          _
        // Predicated region
        $region41: #{node_emb_forward.1} parent=35 // pred_check
          %p441 = pneg %p208
        $region42: #{node_emb_forward.1} parent=35 // pred_check_branch
          %443 = sbr.rel (%p441) target = $region44
        $region43: #{node_emb_forward.1} parent=35 // pred_region
          %p444 = scmp.lt.s32.totalorder %s32, 1
          %s445 = scalar_select %p444, %s32, 1
          %s446 = smul.addr %s445, 4
          %s447 = scalar_lea.vmem %s6, %s446
        $region44: #{node_emb_forward.1} parent=35 // pred_fallthru
          _
        // Predicated region
        $region45: #{node_emb_forward.1} parent=35 // pred_check
          %p448 = pneg %p234
        $region46: #{node_emb_forward.1} parent=35 // pred_check_branch
          %450 = sbr.rel (%p448) target = $region48
        $region47: #{node_emb_forward.1} parent=35 // pred_region
          %s451 = sand.u32 %s25, 1
          %s452 = scalar_lea.sflag [#allocation9], %s451
          %s453 = sand.u32 %s224, 1
          %s454 = smul.addr %s453, 384
          %s455 = scalar_lea.vmem [#allocation10], %s454
          %s457 = ssub.s32 6144, 6144
          %458 = vsyncadd %s452, %s457
          %s459 = smul.addr %s32, 96
          %s460 = smul.addr %s459, 64
          %s461 = scalar_lea.hbm %s7, %s460
          %s462 = sshll.u32 %s455, 4
          %s463 = int_to_ptr.vmem [resolvable:$true] %s462
          %468 = dma.hbm_to_vmem [thread:$0]  %s461, 6144, %s463, %s452, 192, 192, 12
        $region48: #{node_emb_forward.1} parent=35 // pred_fallthru
          _
        // Predicated region
        $region49: #{node_emb_forward.1} parent=35 // pred_check
          %p469 = pneg %p260
        $region50: #{node_emb_forward.1} parent=35 // pred_check_branch
          %471 = sbr.rel (%p469) target = $region52
        $region51: #{node_emb_forward.1} parent=35 // pred_region
          %s472 = sand.u32 %s250, 1
          %s473 = scalar_lea.sflag [#allocation12], %s472
          %s474 = sand.u32 %s250, 1
          %s475 = smul.addr %s474, 192
          %s476 = scalar_lea.vmem [#allocation11], %s475
          %s478 = ssub.s32 3072, 3072
          %479 = vsyncadd %s473, %s478
          %s480 = smul.addr %s32, 48
          %s481 = smul.addr %s480, 64
          %s482 = scalar_lea.hbm %s8, %s481
          %s483 = sshll.u32 %s476, 4
          %s484 = int_to_ptr.vmem [resolvable:$true] %s483
          %489 = dma.hbm_to_vmem [thread:$0]  %s482, 3072, %s484, %s473, 192, 192, 12
        $region52: #{node_emb_forward.1} parent=35 // pred_fallthru
          _
        // Predicated region
        $region53: #{node_emb_forward.1} parent=35 // pred_check
          %p490 = pneg %p286
        $region54: #{node_emb_forward.1} parent=35 // pred_check_branch
          %492 = sbr.rel (%p490) target = $region56
        $region55: #{node_emb_forward.1} parent=35 // pred_region
          %p493 = scmp.lt.s32.totalorder %s32, 1
          %s494 = scalar_select %p493, %s32, 1
          %s495 = smul.addr %s494, 3
          %s496 = scalar_lea.vmem %s9, %s495
        $region56: #{node_emb_forward.1} parent=35 // pred_fallthru
          _
        // Predicated region
        $region57: #{node_emb_forward.1} parent=35 // pred_check
          %p497 = pneg %p312
        $region58: #{node_emb_forward.1} parent=35 // pred_check_branch
          %499 = sbr.rel (%p497) target = $region60
        $region59: #{node_emb_forward.1} parent=35 // pred_region
          %p500 = scmp.lt.s32.totalorder %s32, 1
          %s501 = scalar_select %p500, %s32, 1
          %s502 = smul.addr %s501, 3
          %s503 = scalar_lea.vmem %s10, %s502
        $region60: #{node_emb_forward.1} parent=35 // pred_fallthru
          _
      $region36: #{node_emb_forward.1} parent=5 // pred_fallthru
        _
      %p504 = scmp.le.s32.totalorder 1, %s25
      %p505 = scmp.lt.s32.totalorder %s25, 3
      %p506 = pnand %p504, %p505
      %p507 = pneg %p506
      // Predicated region
      $region61: #{node_emb_forward.1} parent=5 // pred_check
        _
      $region62: #{node_emb_forward.1} parent=5 // pred_check_branch
        %509 = sbr.rel (%p506) target = $region64
      $region63: #{node_emb_forward.1} parent=5 // pred_region
        %s510 = ssub.s32 %s25, 1
        // Predicated region
        $region65: #{node_emb_forward.1} parent=63 // pred_check
          %p511 = pneg %p110
        $region66: #{node_emb_forward.1} parent=63 // pred_check_branch
          %513 = sbr.rel (%p511) target = $region68
        $region67: #{node_emb_forward.1} parent=63 // pred_region
          %514 = dma.done [#allocation4], 4096
        $region68: #{node_emb_forward.1} parent=63 // pred_fallthru
          _
        // Predicated region
        $region69: #{node_emb_forward.1} parent=63 // pred_check
          %p515 = pneg %p136
        $region70: #{node_emb_forward.1} parent=63 // pred_check_branch
          %517 = sbr.rel (%p515) target = $region72
        $region71: #{node_emb_forward.1} parent=63 // pred_region
          %518 = dma.done [#allocation6], 4096
        $region72: #{node_emb_forward.1} parent=63 // pred_fallthru
          _
        // Predicated region
        $region73: #{node_emb_forward.1} parent=63 // pred_check
          %p519 = pneg %p162
        $region74: #{node_emb_forward.1} parent=63 // pred_check_branch
          %521 = sbr.rel (%p519) target = $region76
        $region75: #{node_emb_forward.1} parent=63 // pred_region
          %522 = dma.done [#allocation6], 4096
        $region76: #{node_emb_forward.1} parent=63 // pred_fallthru
          _
        %s523 = sand.u32 %s30, 1
        %s524 = scalar_lea.sflag [#allocation9], %s523
        %s525 = sand.u32 %s175, 1
        %s526 = smul.addr %s525, 512
        %s527 = scalar_lea.vmem [#allocation8], %s526
        // Predicated region
        $region77: #{node_emb_forward.1} parent=63 // pred_check
          %p528 = pneg %p188
        $region78: #{node_emb_forward.1} parent=63 // pred_check_branch
          %530 = sbr.rel (%p528) target = $region80
        $region79: #{node_emb_forward.1} parent=63 // pred_region
          %531 = dma.done %s524, 8192
        $region80: #{node_emb_forward.1} parent=63 // pred_fallthru
          _
        %s532 = sand.u32 %s30, 1
        %s533 = scalar_lea.sflag [#allocation9], %s532
        %s534 = sand.u32 %s227, 1
        %s535 = smul.addr %s534, 384
        %s536 = scalar_lea.vmem [#allocation10], %s535
        // Predicated region
        $region81: #{node_emb_forward.1} parent=63 // pred_check
          %p537 = pneg %p240
        $region82: #{node_emb_forward.1} parent=63 // pred_check_branch
          %539 = sbr.rel (%p537) target = $region84
        $region83: #{node_emb_forward.1} parent=63 // pred_region
          %540 = dma.done %s533, 6144
        $region84: #{node_emb_forward.1} parent=63 // pred_fallthru
          _
        %s541 = sand.u32 %s253, 1
        %s542 = scalar_lea.sflag [#allocation12], %s541
        %s543 = sand.u32 %s253, 1
        %s544 = smul.addr %s543, 192
        %s545 = scalar_lea.vmem [#allocation11], %s544
        // Predicated region
        $region85: #{node_emb_forward.1} parent=63 // pred_check
          %p546 = pneg %p266
        $region86: #{node_emb_forward.1} parent=63 // pred_check_branch
          %548 = sbr.rel (%p546) target = $region88
        $region87: #{node_emb_forward.1} parent=63 // pred_region
          %549 = dma.done %s542, 3072
        $region88: #{node_emb_forward.1} parent=63 // pred_fallthru
          _
        %p550 = pneg %p58
        %p551 = pneg %p55
        %s552 = smul.u32 32, %s35
        %p553 = scmp.lt.s32.totalorder %s552, 31
        %s554 = scalar_select %p553, %s552, 31
        %s555 = smul.addr %s554, 2
        %s556 = smul.addr %s555, 4
        %s557 = scalar_lea.vmem %s1, %s556
        %p558 = pneg %p84
        %p559 = pneg %p81
        %p560 = pneg %p110
        %p561 = pneg %p107
        %p562 = pneg %p136
        %p563 = pneg %p133
        %p564 = pneg %p162
        %p565 = pneg %p159
        %s566 = sand.u32 %s30, 1
        %s567 = scalar_lea.sflag [#allocation9], %s566
        %s568 = sand.u32 %s175, 1
        %s569 = smul.addr %s568, 512
        %s570 = scalar_lea.vmem [#allocation8], %s569
        %p571 = pneg %p188
        %p572 = pneg %p185
        %p573 = scmp.lt.s32.totalorder %s34, 1
        %s574 = scalar_select %p573, %s34, 1
        %s575 = smul.addr %s574, 4
        %s576 = scalar_lea.vmem %s6, %s575
        %p577 = pneg %p214
        %p578 = pneg %p211
        %s579 = sand.u32 %s30, 1
        %s580 = scalar_lea.sflag [#allocation9], %s579
        %s581 = sand.u32 %s227, 1
        %s582 = smul.addr %s581, 384
        %s583 = scalar_lea.vmem [#allocation10], %s582
        %p584 = pneg %p240
        %p585 = pneg %p237
        %s586 = sand.u32 %s253, 1
        %s587 = scalar_lea.sflag [#allocation12], %s586
        %s588 = sand.u32 %s253, 1
        %s589 = smul.addr %s588, 192
        %s590 = scalar_lea.vmem [#allocation11], %s589
        %p591 = pneg %p266
        %p592 = pneg %p263
        %p593 = scmp.lt.s32.totalorder %s34, 1
        %s594 = scalar_select %p593, %s34, 1
        %s595 = smul.addr %s594, 3
        %s596 = scalar_lea.vmem %s9, %s595
        %p597 = pneg %p292
        %p598 = pneg %p289
        %p599 = scmp.lt.s32.totalorder %s34, 1
        %s600 = scalar_select %p599, %s34, 1
        %s601 = smul.addr %s600, 3
        %s602 = scalar_lea.vmem %s10, %s601
        %p603 = pneg %p318
        %p604 = pneg %p315
        %p605 = pneg %p339
        %p606 = pneg %p336
        %s607 = smul.u32 32, %s35
        %p608 = scmp.lt.s32.totalorder %s607, 31
        %s609 = scalar_select %p608, %s607, 31
        %s610 = smul.addr %s609, 2
        %s611 = smul.addr %s610, 4
        %s612 = scalar_lea.vmem %s1, %s611
        %s613 = smul.u32 32, %s35
        %s614 = smul.u32 32, %s35
        %s615 = smul.u32 2, %s35
        %s616 = smul.u32 2, %s35
        %p617 = scmp.lt.s32.totalorder %s34, 1
        %s618 = scalar_select %p617, %s34, 1
        %s619 = smul.addr %s618, 4
        %s620 = scalar_lea.vmem %s6, %s619
        %p621 = scmp.lt.s32.totalorder %s34, 1
        %s622 = scalar_select %p621, %s34, 1
        %s623 = smul.addr %s622, 3
        %s624 = scalar_lea.vmem %s9, %s623
        %p625 = scmp.lt.s32.totalorder %s34, 1
        %s626 = scalar_select %p625, %s34, 1
        %s627 = smul.addr %s626, 3
        %s628 = scalar_lea.vmem %s10, %s627
        %p630 = scmp.eq.s32.totalorder %s34, 0
        %p631 = scmp.eq.s32.totalorder %s35, 0
        %p632 = pnand %p630, %p631
        %p633 = pneg %p632
        // Predicated region
        $region89: #{node_emb_forward.1} parent=63 // pred_check
          _
        $region90: #{node_emb_forward.1} parent=63 // pred_check_branch
          %635 = sbr.rel (%p632) target = $region92
        $region91: #{node_emb_forward.1} parent=63 // pred_region
          %v636 = vld [vmem:[%s0] sm:$0xff]
          %v637 = vld [vmem:[%s0 + $0x8] sm:$0xff]
          %v638 = vld [vmem:[%s0 + $0x10] sm:$0xff]
          %v639 = vld [vmem:[%s0 + $0x18] sm:$0xff]
          %v640 = vld [vmem:[%s0 + $0x20] sm:$0xff]
          %v641 = vld [vmem:[%s0 + $0x28] sm:$0xff]
          %v642 = vld [vmem:[%s0 + $0x30] sm:$0xff]
          %v643 = vld [vmem:[%s0 + $0x38] sm:$0xff]
          %v644 = vld [vmem:[%s0 + $0x40] sm:$0xff]
          %v645 = vld [vmem:[%s0 + $0x48] sm:$0xff]
          %v646 = vld [vmem:[%s0 + $0x50] sm:$0xff]
          %v647 = vld [vmem:[%s0 + $0x58] sm:$0xff]
          %v648 = vld [vmem:[%s0 + $0x60] sm:$0xff]
          %v649 = vld [vmem:[%s0 + $0x68] sm:$0xff]
          %v650 = vld [vmem:[%s0 + $0x70] sm:$0xff]
          %v651 = vld [vmem:[%s0 + $0x78] sm:$0xff]
          %v652 = vld [vmem:[%s0 + $0x80] sm:$0xff]
          %v653 = vld [vmem:[%s0 + $0x88] sm:$0xff]
          %v654 = vld [vmem:[%s0 + $0x90] sm:$0xff]
          %v655 = vld [vmem:[%s0 + $0x98] sm:$0xff]
          %v656 = vld [vmem:[%s0 + $0xa0] sm:$0xff]
          %v657 = vld [vmem:[%s0 + $0xa8] sm:$0xff]
          %v658 = vld [vmem:[%s0 + $0xb0] sm:$0xff]
          %v659 = vld [vmem:[%s0 + $0xb8] sm:$0xff]
          %v660 = vld [vmem:[%s0 + $0xc0] sm:$0xff]
          %v661 = vld [vmem:[%s0 + $0xc8] sm:$0xff]
          %v662 = vld [vmem:[%s0 + $0xd0] sm:$0xff]
          %v663 = vld [vmem:[%s0 + $0xd8] sm:$0xff]
          %v664 = vld [vmem:[%s0 + $0xe0] sm:$0xff]
          %v665 = vld [vmem:[%s0 + $0xe8] sm:$0xff]
          %v666 = vld [vmem:[%s0 + $0xf0] sm:$0xff]
          %v667 = vld [vmem:[%s0 + $0xf8] sm:$0xff]
          %668 = vst [vmem:[%s11] sm:$0xff] %v636
          %669 = vst [vmem:[%s11 + $0x8] sm:$0xff] %v637
          %670 = vst [vmem:[%s11 + $0x10] sm:$0xff] %v638
          %671 = vst [vmem:[%s11 + $0x18] sm:$0xff] %v639
          %672 = vst [vmem:[%s11 + $0x20] sm:$0xff] %v640
          %673 = vst [vmem:[%s11 + $0x28] sm:$0xff] %v641
          %674 = vst [vmem:[%s11 + $0x30] sm:$0xff] %v642
          %675 = vst [vmem:[%s11 + $0x38] sm:$0xff] %v643
          %676 = vst [vmem:[%s11 + $0x40] sm:$0xff] %v644
          %677 = vst [vmem:[%s11 + $0x48] sm:$0xff] %v645
          %678 = vst [vmem:[%s11 + $0x50] sm:$0xff] %v646
          %679 = vst [vmem:[%s11 + $0x58] sm:$0xff] %v647
          %680 = vst [vmem:[%s11 + $0x60] sm:$0xff] %v648
          %681 = vst [vmem:[%s11 + $0x68] sm:$0xff] %v649
          %682 = vst [vmem:[%s11 + $0x70] sm:$0xff] %v650
          %683 = vst [vmem:[%s11 + $0x78] sm:$0xff] %v651
          %684 = vst [vmem:[%s11 + $0x80] sm:$0xff] %v652
          %685 = vst [vmem:[%s11 + $0x88] sm:$0xff] %v653
          %686 = vst [vmem:[%s11 + $0x90] sm:$0xff] %v654
          %687 = vst [vmem:[%s11 + $0x98] sm:$0xff] %v655
          %688 = vst [vmem:[%s11 + $0xa0] sm:$0xff] %v656
          %689 = vst [vmem:[%s11 + $0xa8] sm:$0xff] %v657
          %690 = vst [vmem:[%s11 + $0xb0] sm:$0xff] %v658
          %691 = vst [vmem:[%s11 + $0xb8] sm:$0xff] %v659
          %692 = vst [vmem:[%s11 + $0xc0] sm:$0xff] %v660
          %693 = vst [vmem:[%s11 + $0xc8] sm:$0xff] %v661
          %694 = vst [vmem:[%s11 + $0xd0] sm:$0xff] %v662
          %695 = vst [vmem:[%s11 + $0xd8] sm:$0xff] %v663
          %696 = vst [vmem:[%s11 + $0xe0] sm:$0xff] %v664
          %697 = vst [vmem:[%s11 + $0xe8] sm:$0xff] %v665
          %698 = vst [vmem:[%s11 + $0xf0] sm:$0xff] %v666
          %699 = vst [vmem:[%s11 + $0xf8] sm:$0xff] %v667
        $region92: #{node_emb_forward.1} parent=63 // pred_fallthru
          _
        // Predicated region
        $region93: #{node_emb_forward.1} parent=63 // pred_check
          %p700 = pneg %p631
        $region94: #{node_emb_forward.1} parent=63 // pred_check_branch
          %702 = sbr.rel (%p700) target = $region96
        $region95: #{node_emb_forward.1} parent=63 // pred_region
          %703 = vst [vmem:[#allocation2] sm:$0xff] 0.0
          %704 = vst [vmem:[#allocation2 + $0x8] sm:$0xff] 0.0
          %705 = vst [vmem:[#allocation2 + $0x10] sm:$0xff] 0.0
          %706 = vst [vmem:[#allocation2 + $0x18] sm:$0xff] 0.0
          %707 = vst [vmem:[#allocation2 + $0x20] sm:$0xff] 0.0
          %708 = vst [vmem:[#allocation2 + $0x28] sm:$0xff] 0.0
          %709 = vst [vmem:[#allocation2 + $0x30] sm:$0xff] 0.0
          %710 = vst [vmem:[#allocation2 + $0x38] sm:$0xff] 0.0
          %711 = vst [vmem:[#allocation2 + $0x40] sm:$0xff] 0.0
          %712 = vst [vmem:[#allocation2 + $0x48] sm:$0xff] 0.0
          %713 = vst [vmem:[#allocation2 + $0x50] sm:$0xff] 0.0
          %714 = vst [vmem:[#allocation2 + $0x58] sm:$0xff] 0.0
          %715 = vst [vmem:[#allocation2 + $0x60] sm:$0xff] 0.0
          %716 = vst [vmem:[#allocation2 + $0x68] sm:$0xff] 0.0
          %717 = vst [vmem:[#allocation2 + $0x70] sm:$0xff] 0.0
          %718 = vst [vmem:[#allocation2 + $0x78] sm:$0xff] 0.0
          %719 = vst [vmem:[#allocation2 + $0x80] sm:$0xff] 0.0
          %720 = vst [vmem:[#allocation2 + $0x88] sm:$0xff] 0.0
          %721 = vst [vmem:[#allocation2 + $0x90] sm:$0xff] 0.0
          %722 = vst [vmem:[#allocation2 + $0x98] sm:$0xff] 0.0
          %723 = vst [vmem:[#allocation2 + $0xa0] sm:$0xff] 0.0
          %724 = vst [vmem:[#allocation2 + $0xa8] sm:$0xff] 0.0
          %725 = vst [vmem:[#allocation2 + $0xb0] sm:$0xff] 0.0
          %726 = vst [vmem:[#allocation2 + $0xb8] sm:$0xff] 0.0
          %727 = vst [vmem:[#allocation2 + $0xc0] sm:$0xff] 0.0
          %728 = vst [vmem:[#allocation2 + $0xc8] sm:$0xff] 0.0
          %729 = vst [vmem:[#allocation2 + $0xd0] sm:$0xff] 0.0
          %730 = vst [vmem:[#allocation2 + $0xd8] sm:$0xff] 0.0
          %731 = vst [vmem:[#allocation2 + $0xe0] sm:$0xff] 0.0
          %732 = vst [vmem:[#allocation2 + $0xe8] sm:$0xff] 0.0
          %733 = vst [vmem:[#allocation2 + $0xf0] sm:$0xff] 0.0
          %734 = vst [vmem:[#allocation2 + $0xf8] sm:$0xff] 0.0
          %735 = vst [vmem:[#allocation2 + $0x100] sm:$0xff] 0.0
          %736 = vst [vmem:[#allocation2 + $0x108] sm:$0xff] 0.0
          %737 = vst [vmem:[#allocation2 + $0x110] sm:$0xff] 0.0
          %738 = vst [vmem:[#allocation2 + $0x118] sm:$0xff] 0.0
          %739 = vst [vmem:[#allocation2 + $0x120] sm:$0xff] 0.0
          %740 = vst [vmem:[#allocation2 + $0x128] sm:$0xff] 0.0
          %741 = vst [vmem:[#allocation2 + $0x130] sm:$0xff] 0.0
          %742 = vst [vmem:[#allocation2 + $0x138] sm:$0xff] 0.0
          %743 = vst [vmem:[#allocation2 + $0x140] sm:$0xff] 0.0
          %744 = vst [vmem:[#allocation2 + $0x148] sm:$0xff] 0.0
          %745 = vst [vmem:[#allocation2 + $0x150] sm:$0xff] 0.0
          %746 = vst [vmem:[#allocation2 + $0x158] sm:$0xff] 0.0
          %747 = vst [vmem:[#allocation2 + $0x160] sm:$0xff] 0.0
          %748 = vst [vmem:[#allocation2 + $0x168] sm:$0xff] 0.0
          %749 = vst [vmem:[#allocation2 + $0x170] sm:$0xff] 0.0
          %750 = vst [vmem:[#allocation2 + $0x178] sm:$0xff] 0.0
          %751 = vst [vmem:[#allocation2 + $0x180] sm:$0xff] 0.0
          %752 = vst [vmem:[#allocation2 + $0x188] sm:$0xff] 0.0
          %753 = vst [vmem:[#allocation2 + $0x190] sm:$0xff] 0.0
          %754 = vst [vmem:[#allocation2 + $0x198] sm:$0xff] 0.0
          %755 = vst [vmem:[#allocation2 + $0x1a0] sm:$0xff] 0.0
          %756 = vst [vmem:[#allocation2 + $0x1a8] sm:$0xff] 0.0
          %757 = vst [vmem:[#allocation2 + $0x1b0] sm:$0xff] 0.0
          %758 = vst [vmem:[#allocation2 + $0x1b8] sm:$0xff] 0.0
          %759 = vst [vmem:[#allocation2 + $0x1c0] sm:$0xff] 0.0
          %760 = vst [vmem:[#allocation2 + $0x1c8] sm:$0xff] 0.0
          %761 = vst [vmem:[#allocation2 + $0x1d0] sm:$0xff] 0.0
          %762 = vst [vmem:[#allocation2 + $0x1d8] sm:$0xff] 0.0
          %763 = vst [vmem:[#allocation2 + $0x1e0] sm:$0xff] 0.0
          %764 = vst [vmem:[#allocation2 + $0x1e8] sm:$0xff] 0.0
          %765 = vst [vmem:[#allocation2 + $0x1f0] sm:$0xff] 0.0
          %766 = vst [vmem:[#allocation2 + $0x1f8] sm:$0xff] 0.0
        $region96: #{node_emb_forward.1} parent=63 // pred_fallthru
          _
        %v767 = vld [vmem:[%s11] sm:$0xff]
        %v768 = vld [vmem:[%s11 + $0x8] sm:$0xff]
        %v769 = vld [vmem:[%s11 + $0x10] sm:$0xff]
        %v770 = vld [vmem:[%s11 + $0x18] sm:$0xff]
        %v771 = vld [vmem:[%s11 + $0x20] sm:$0xff]
        %v772 = vld [vmem:[%s11 + $0x28] sm:$0xff]
        %v773 = vld [vmem:[%s11 + $0x30] sm:$0xff]
        %v774 = vld [vmem:[%s11 + $0x38] sm:$0xff]
        %v775 = vld [vmem:[%s11 + $0x40] sm:$0xff]
        %v776 = vld [vmem:[%s11 + $0x48] sm:$0xff]
        %v777 = vld [vmem:[%s11 + $0x50] sm:$0xff]
        %v778 = vld [vmem:[%s11 + $0x58] sm:$0xff]
        %v779 = vld [vmem:[%s11 + $0x60] sm:$0xff]
        %v780 = vld [vmem:[%s11 + $0x68] sm:$0xff]
        %v781 = vld [vmem:[%s11 + $0x70] sm:$0xff]
        %v782 = vld [vmem:[%s11 + $0x78] sm:$0xff]
        %v783 = vld [vmem:[%s11 + $0x80] sm:$0xff]
        %v784 = vld [vmem:[%s11 + $0x88] sm:$0xff]
        %v785 = vld [vmem:[%s11 + $0x90] sm:$0xff]
        %v786 = vld [vmem:[%s11 + $0x98] sm:$0xff]
        %v787 = vld [vmem:[%s11 + $0xa0] sm:$0xff]
        %v788 = vld [vmem:[%s11 + $0xa8] sm:$0xff]
        %v789 = vld [vmem:[%s11 + $0xb0] sm:$0xff]
        %v790 = vld [vmem:[%s11 + $0xb8] sm:$0xff]
        %v791 = vld [vmem:[%s11 + $0xc0] sm:$0xff]
        %v792 = vld [vmem:[%s11 + $0xc8] sm:$0xff]
        %v793 = vld [vmem:[%s11 + $0xd0] sm:$0xff]
        %v794 = vld [vmem:[%s11 + $0xd8] sm:$0xff]
        %v795 = vld [vmem:[%s11 + $0xe0] sm:$0xff]
        %v796 = vld [vmem:[%s11 + $0xe8] sm:$0xff]
        %v797 = vld [vmem:[%s11 + $0xf0] sm:$0xff]
        %v798 = vld [vmem:[%s11 + $0xf8] sm:$0xff]
        %v799 = vpack.c.bf16 %v768, %v767
        %v800 = vpack.c.bf16 %v770, %v769
        %v801 = vpack.c.bf16 %v772, %v771
        %v802 = vpack.c.bf16 %v774, %v773
        %v803 = vpack.c.bf16 %v776, %v775
        %v804 = vpack.c.bf16 %v778, %v777
        %v805 = vpack.c.bf16 %v780, %v779
        %v806 = vpack.c.bf16 %v782, %v781
        %v807 = vpack.c.bf16 %v784, %v783
        %v808 = vpack.c.bf16 %v786, %v785
        %v809 = vpack.c.bf16 %v788, %v787
        %v810 = vpack.c.bf16 %v790, %v789
        %v811 = vpack.c.bf16 %v792, %v791
        %v812 = vpack.c.bf16 %v794, %v793
        %v813 = vpack.c.bf16 %v796, %v795
        %v814 = vpack.c.bf16 %v798, %v797
        %v815 = vld [vmem:[%s612] sm:$0xff]
        %v816 = vld [vmem:[%s612 + $0x8] sm:$0xff]
        %v817 = vld [vmem:[%s612 + $0x10] sm:$0xff]
        %v818 = vld [vmem:[%s612 + $0x18] sm:$0xff]
        %v819 = vld [vmem:[%s612 + $0x20] sm:$0xff]
        %v820 = vld [vmem:[%s612 + $0x28] sm:$0xff]
        %v821 = vld [vmem:[%s612 + $0x30] sm:$0xff]
        %v822 = vld [vmem:[%s612 + $0x38] sm:$0xff]
        %v823 = vld [vmem:[%s612 + $0x40] sm:$0xff]
        %v824 = vld [vmem:[%s612 + $0x48] sm:$0xff]
        %v825 = vld [vmem:[%s612 + $0x50] sm:$0xff]
        %v826 = vld [vmem:[%s612 + $0x58] sm:$0xff]
        %v827 = vld [vmem:[%s612 + $0x60] sm:$0xff]
        %v828 = vld [vmem:[%s612 + $0x68] sm:$0xff]
        %v829 = vld [vmem:[%s612 + $0x70] sm:$0xff]
        %v830 = vld [vmem:[%s612 + $0x78] sm:$0xff]
        %v831 = vld [vmem:[%s612 + $0x80] sm:$0xff]
        %v832 = vld [vmem:[%s612 + $0x88] sm:$0xff]
        %v833 = vld [vmem:[%s612 + $0x90] sm:$0xff]
        %v834 = vld [vmem:[%s612 + $0x98] sm:$0xff]
        %v835 = vld [vmem:[%s612 + $0xa0] sm:$0xff]
        %v836 = vld [vmem:[%s612 + $0xa8] sm:$0xff]
        %v837 = vld [vmem:[%s612 + $0xb0] sm:$0xff]
        %v838 = vld [vmem:[%s612 + $0xb8] sm:$0xff]
        %v839 = vld [vmem:[%s612 + $0xc0] sm:$0xff]
        %v840 = vld [vmem:[%s612 + $0xc8] sm:$0xff]
        %v841 = vld [vmem:[%s612 + $0xd0] sm:$0xff]
        %v842 = vld [vmem:[%s612 + $0xd8] sm:$0xff]
        %v843 = vld [vmem:[%s612 + $0xe0] sm:$0xff]
        %v844 = vld [vmem:[%s612 + $0xe8] sm:$0xff]
        %v845 = vld [vmem:[%s612 + $0xf0] sm:$0xff]
        %v846 = vld [vmem:[%s612 + $0xf8] sm:$0xff]
        %v879 = vunpack.c.l.b16 %v815
        %v880 = vunpack.c.h.b16 %v815
        %v881 = vunpack.c.l.b16 %v816
        %v882 = vunpack.c.h.b16 %v816
        %v883 = vunpack.c.l.b16 %v817
        %v884 = vunpack.c.h.b16 %v817
        %v885 = vunpack.c.l.b16 %v818
        %v886 = vunpack.c.h.b16 %v818
        %v887 = vunpack.c.l.b16 %v819
        %v888 = vunpack.c.h.b16 %v819
        %v889 = vunpack.c.l.b16 %v820
        %v890 = vunpack.c.h.b16 %v820
        %v891 = vunpack.c.l.b16 %v821
        %v892 = vunpack.c.h.b16 %v821
        %v893 = vunpack.c.l.b16 %v822
        %v894 = vunpack.c.h.b16 %v822
        %v895 = vunpack.c.l.b16 %v823
        %v896 = vunpack.c.h.b16 %v823
        %v897 = vunpack.c.l.b16 %v824
        %v898 = vunpack.c.h.b16 %v824
        %v899 = vunpack.c.l.b16 %v825
        %v900 = vunpack.c.h.b16 %v825
        %v901 = vunpack.c.l.b16 %v826
        %v902 = vunpack.c.h.b16 %v826
        %v903 = vunpack.c.l.b16 %v827
        %v904 = vunpack.c.h.b16 %v827
        %v905 = vunpack.c.l.b16 %v828
        %v906 = vunpack.c.h.b16 %v828
        %v907 = vunpack.c.l.b16 %v829
        %v908 = vunpack.c.h.b16 %v829
        %v909 = vunpack.c.l.b16 %v830
        %v910 = vunpack.c.h.b16 %v830
        %v911 = vunpack.c.l.b16 %v831
        %v912 = vunpack.c.h.b16 %v831
        %v913 = vunpack.c.l.b16 %v832
        %v914 = vunpack.c.h.b16 %v832
        %v915 = vunpack.c.l.b16 %v833
        %v916 = vunpack.c.h.b16 %v833
        %v917 = vunpack.c.l.b16 %v834
        %v918 = vunpack.c.h.b16 %v834
        %v919 = vunpack.c.l.b16 %v835
        %v920 = vunpack.c.h.b16 %v835
        %v921 = vunpack.c.l.b16 %v836
        %v922 = vunpack.c.h.b16 %v836
        %v923 = vunpack.c.l.b16 %v837
        %v924 = vunpack.c.h.b16 %v837
        %v925 = vunpack.c.l.b16 %v838
        %v926 = vunpack.c.h.b16 %v838
        %v927 = vunpack.c.l.b16 %v839
        %v928 = vunpack.c.h.b16 %v839
        %v929 = vunpack.c.l.b16 %v840
        %v930 = vunpack.c.h.b16 %v840
        %v931 = vunpack.c.l.b16 %v841
        %v932 = vunpack.c.h.b16 %v841
        %v933 = vunpack.c.l.b16 %v842
        %v934 = vunpack.c.h.b16 %v842
        %v935 = vunpack.c.l.b16 %v843
        %v936 = vunpack.c.h.b16 %v843
        %v937 = vunpack.c.l.b16 %v844
        %v938 = vunpack.c.h.b16 %v844
        %v939 = vunpack.c.l.b16 %v845
        %v940 = vunpack.c.h.b16 %v845
        %v941 = vunpack.c.l.b16 %v846
        %v942 = vunpack.c.h.b16 %v846
        %v943 = vpack.c.b16 %v881, %v879
        %v944 = vpack.c.b16 %v882, %v880
        %v945 = vpack.c.b16 %v885, %v883
        %v946 = vpack.c.b16 %v886, %v884
        %v947 = vpack.c.b16 %v889, %v887
        %v948 = vpack.c.b16 %v890, %v888
        %v949 = vpack.c.b16 %v893, %v891
        %v950 = vpack.c.b16 %v894, %v892
        %v951 = vpack.c.b16 %v897, %v895
        %v952 = vpack.c.b16 %v898, %v896
        %v953 = vpack.c.b16 %v901, %v899
        %v954 = vpack.c.b16 %v902, %v900
        %v955 = vpack.c.b16 %v905, %v903
        %v956 = vpack.c.b16 %v906, %v904
        %v957 = vpack.c.b16 %v909, %v907
        %v958 = vpack.c.b16 %v910, %v908
        %v959 = vpack.c.b16 %v913, %v911
        %v960 = vpack.c.b16 %v914, %v912
        %v961 = vpack.c.b16 %v917, %v915
        %v962 = vpack.c.b16 %v918, %v916
        %v963 = vpack.c.b16 %v921, %v919
        %v964 = vpack.c.b16 %v922, %v920
        %v965 = vpack.c.b16 %v925, %v923
        %v966 = vpack.c.b16 %v926, %v924
        %v967 = vpack.c.b16 %v929, %v927
        %v968 = vpack.c.b16 %v930, %v928
        %v969 = vpack.c.b16 %v933, %v931
        %v970 = vpack.c.b16 %v934, %v932
        %v971 = vpack.c.b16 %v937, %v935
        %v972 = vpack.c.b16 %v938, %v936
        %v973 = vpack.c.b16 %v941, %v939
        %v974 = vpack.c.b16 %v942, %v940
        %1007 = vmatprep.subr.bf16.mxu0 0
        %1008 = vmatpush1.bf16.msra.mxu0 %v799
        %1009 = vmatprep.subr.bf16.mxu0 0
        %1010 = vmatpush1.bf16.msra.mxu0 %v800
        %1011 = vmatprep.subr.bf16.mxu0 0
        %1012 = vmatpush1.bf16.msra.mxu0 %v801
        %1013 = vmatprep.subr.bf16.mxu0 0
        %1014 = vmatpush1.bf16.msra.mxu0 %v802
        %1015 = vmatprep.subr.bf16.mxu0 0
        %1016 = vmatpush1.bf16.msra.mxu0 %v803
        %1017 = vmatprep.subr.bf16.mxu0 0
        %1018 = vmatpush1.bf16.msra.mxu0 %v804
        %1019 = vmatprep.subr.bf16.mxu0 0
        %1020 = vmatpush1.bf16.msra.mxu0 %v805
        %1021 = vmatprep.subr.bf16.mxu0 0
        %1022 = vmatpush1.bf16.msra.mxu0 %v806
        %1023 = vmatprep.subr.bf16.mxu0 0
        %1024 = vmatpush1.bf16.msra.mxu0 %v807
        %1025 = vmatprep.subr.bf16.mxu0 0
        %1026 = vmatpush1.bf16.msra.mxu0 %v808
        %1027 = vmatprep.subr.bf16.mxu0 0
        %1028 = vmatpush1.bf16.msra.mxu0 %v809
        %1029 = vmatprep.subr.bf16.mxu0 0
        %1030 = vmatpush1.bf16.msra.mxu0 %v810
        %1031 = vmatprep.subr.bf16.mxu0 0
        %1032 = vmatpush1.bf16.msra.mxu0 %v811
        %1033 = vmatprep.subr.bf16.mxu0 0
        %1034 = vmatpush1.bf16.msra.mxu0 %v812
        %1035 = vmatprep.subr.bf16.mxu0 0
        %1036 = vmatpush1.bf16.msra.mxu0 %v813
        %1037 = vmatprep.subr.bf16.mxu0 0
        %1038 = vmatpush1.bf16.msra.mxu0 %v814
        %1039 = vmatprep.mubr.bf16.mxu0 %v944
        %1040 = vmatmul.mubr.bf16.gmra.mrb[0].mxu0 %v943
        %v1041 = vpop.f32.mrb[0].mxu0
        %v1042 = vadd.f32 0.0, %v1041
        %v1043 = vpop.f32.mrb[0].mxu0
        %v1044 = vpop.f32.mrb[0].mxu0
        %v1045 = vadd.f32 0.0, %v1044
        %v1046 = vpop.f32.mrb[0].mxu0
        %1047 = vmatprep.mubr.bf16.mxu0 %v946
        %1048 = vmatmul.mubr.bf16.gmra.mrb[0].mxu0 %v945
        %v1049 = vpop.f32.mrb[0].mxu0
        %v1050 = vadd.f32 0.0, %v1049
        %v1051 = vpop.f32.mrb[0].mxu0
        %v1052 = vpop.f32.mrb[0].mxu0
        %v1053 = vadd.f32 0.0, %v1052
        %v1054 = vpop.f32.mrb[0].mxu0
        %1055 = vmatprep.mubr.bf16.mxu0 %v948
        %1056 = vmatmul.mubr.bf16.gmra.mrb[0].mxu0 %v947
        %v1057 = vpop.f32.mrb[0].mxu0
        %v1058 = vadd.f32 0.0, %v1057
        %v1059 = vpop.f32.mrb[0].mxu0
        %v1060 = vpop.f32.mrb[0].mxu0
        %v1061 = vadd.f32 0.0, %v1060
        %v1062 = vpop.f32.mrb[0].mxu0
        %1063 = vmatprep.mubr.bf16.mxu0 %v950
        %1064 = vmatmul.mubr.bf16.gmra.mrb[0].mxu0 %v949
        %v1065 = vpop.f32.mrb[0].mxu0
        %v1066 = vadd.f32 0.0, %v1065
        %v1067 = vpop.f32.mrb[0].mxu0
        %v1068 = vpop.f32.mrb[0].mxu0
        %v1069 = vadd.f32 0.0, %v1068
        %v1070 = vpop.f32.mrb[0].mxu0
        %1071 = vmatprep.mubr.bf16.mxu0 %v952
        %1072 = vmatmul.mubr.bf16.gmra.mrb[0].mxu0 %v951
        %v1073 = vpop.f32.mrb[0].mxu0
        %v1074 = vadd.f32 0.0, %v1073
        %v1075 = vpop.f32.mrb[0].mxu0
        %v1076 = vpop.f32.mrb[0].mxu0
        %v1077 = vadd.f32 0.0, %v1076
        %v1078 = vpop.f32.mrb[0].mxu0
        %1079 = vmatprep.mubr.bf16.mxu0 %v954
        %1080 = vmatmul.mubr.bf16.gmra.mrb[0].mxu0 %v953
        %v1081 = vpop.f32.mrb[0].mxu0
        %v1082 = vadd.f32 0.0, %v1081
        %v1083 = vpop.f32.mrb[0].mxu0
        %v1084 = vpop.f32.mrb[0].mxu0
        %v1085 = vadd.f32 0.0, %v1084
        %v1086 = vpop.f32.mrb[0].mxu0
        %1087 = vmatprep.mubr.bf16.mxu0 %v956
        %1088 = vmatmul.mubr.bf16.gmra.mrb[0].mxu0 %v955
        %v1089 = vpop.f32.mrb[0].mxu0
        %v1090 = vadd.f32 0.0, %v1089
        %v1091 = vpop.f32.mrb[0].mxu0
        %v1092 = vpop.f32.mrb[0].mxu0
        %v1093 = vadd.f32 0.0, %v1092
        %v1094 = vpop.f32.mrb[0].mxu0
        %1095 = vmatprep.mubr.bf16.mxu0 %v958
        %1096 = vmatmul.mubr.bf16.gmra.mrb[0].mxu0 %v957
        %v1097 = vpop.f32.mrb[0].mxu0
        %v1098 = vadd.f32 0.0, %v1097
        %v1099 = vpop.f32.mrb[0].mxu0
        %v1100 = vpop.f32.mrb[0].mxu0
        %v1101 = vadd.f32 0.0, %v1100
        %v1102 = vpop.f32.mrb[0].mxu0
        %1103 = vmatprep.mubr.bf16.mxu0 %v960
        %1104 = vmatmul.mubr.bf16.gmra.mrb[0].mxu0 %v959
        %v1105 = vpop.f32.mrb[0].mxu0
        %v1106 = vadd.f32 0.0, %v1105
        %v1107 = vpop.f32.mrb[0].mxu0
        %v1108 = vpop.f32.mrb[0].mxu0
        %v1109 = vadd.f32 0.0, %v1108
        %v1110 = vpop.f32.mrb[0].mxu0
        %1111 = vmatprep.mubr.bf16.mxu0 %v962
        %1112 = vmatmul.mubr.bf16.gmra.mrb[0].mxu0 %v961
        %v1113 = vpop.f32.mrb[0].mxu0
        %v1114 = vadd.f32 0.0, %v1113
        %v1115 = vpop.f32.mrb[0].mxu0
        %v1116 = vpop.f32.mrb[0].mxu0
        %v1117 = vadd.f32 0.0, %v1116
        %v1118 = vpop.f32.mrb[0].mxu0
        %1119 = vmatprep.mubr.bf16.mxu0 %v964
        %1120 = vmatmul.mubr.bf16.gmra.mrb[0].mxu0 %v963
        %v1121 = vpop.f32.mrb[0].mxu0
        %v1122 = vadd.f32 0.0, %v1121
        %v1123 = vpop.f32.mrb[0].mxu0
        %v1124 = vpop.f32.mrb[0].mxu0
        %v1125 = vadd.f32 0.0, %v1124
        %v1126 = vpop.f32.mrb[0].mxu0
        %1127 = vmatprep.mubr.bf16.mxu0 %v966
        %1128 = vmatmul.mubr.bf16.gmra.mrb[0].mxu0 %v965
        %v1129 = vpop.f32.mrb[0].mxu0
        %v1130 = vadd.f32 0.0, %v1129
        %v1131 = vpop.f32.mrb[0].mxu0
        %v1132 = vpop.f32.mrb[0].mxu0
        %v1133 = vadd.f32 0.0, %v1132
        %v1134 = vpop.f32.mrb[0].mxu0
        %1135 = vmatprep.mubr.bf16.mxu0 %v968
        %1136 = vmatmul.mubr.bf16.gmra.mrb[0].mxu0 %v967
        %v1137 = vpop.f32.mrb[0].mxu0
        %v1138 = vadd.f32 0.0, %v1137
        %v1139 = vpop.f32.mrb[0].mxu0
        %v1140 = vpop.f32.mrb[0].mxu0
        %v1141 = vadd.f32 0.0, %v1140
        %v1142 = vpop.f32.mrb[0].mxu0
        %1143 = vmatprep.mubr.bf16.mxu0 %v970
        %1144 = vmatmul.mubr.bf16.gmra.mrb[0].mxu0 %v969
        %v1145 = vpop.f32.mrb[0].mxu0
        %v1146 = vadd.f32 0.0, %v1145
        %v1147 = vpop.f32.mrb[0].mxu0
        %v1148 = vpop.f32.mrb[0].mxu0
        %v1149 = vadd.f32 0.0, %v1148
        %v1150 = vpop.f32.mrb[0].mxu0
        %1151 = vmatprep.mubr.bf16.mxu0 %v972
        %1152 = vmatmul.mubr.bf16.gmra.mrb[0].mxu0 %v971
        %v1153 = vpop.f32.mrb[0].mxu0
        %v1154 = vadd.f32 0.0, %v1153
        %v1155 = vpop.f32.mrb[0].mxu0
        %v1156 = vpop.f32.mrb[0].mxu0
        %v1157 = vadd.f32 0.0, %v1156
        %v1158 = vpop.f32.mrb[0].mxu0
        %1159 = vmatprep.mubr.bf16.mxu0 %v974
        %1160 = vmatmul.mubr.bf16.gmra.mrb[0].mxu0 %v973
        %v1161 = vpop.f32.mrb[0].mxu0
        %v1162 = vadd.f32 0.0, %v1161
        %v1163 = vpop.f32.mrb[0].mxu0
        %v1164 = vpop.f32.mrb[0].mxu0
        %v1165 = vadd.f32 0.0, %v1164
        %v1166 = vpop.f32.mrb[0].mxu0
        %1167 = vdwg.mxu0
        %v1168 = vld [vmem:[#allocation3] sm:$0xff]
        %v1169 = vld [vmem:[#allocation3 + $0x8] sm:$0xff]
        %v1170 = vld [vmem:[#allocation3 + $0x10] sm:$0xff]
        %v1171 = vld [vmem:[#allocation3 + $0x18] sm:$0xff]
        %v1172 = vld [vmem:[#allocation3 + $0x20] sm:$0xff]
        %v1173 = vld [vmem:[#allocation3 + $0x28] sm:$0xff]
        %v1174 = vld [vmem:[#allocation3 + $0x30] sm:$0xff]
        %v1175 = vld [vmem:[#allocation3 + $0x38] sm:$0xff]
        %v1176 = vld [vmem:[#allocation3 + $0x40] sm:$0xff]
        %v1177 = vld [vmem:[#allocation3 + $0x48] sm:$0xff]
        %v1178 = vld [vmem:[#allocation3 + $0x50] sm:$0xff]
        %v1179 = vld [vmem:[#allocation3 + $0x58] sm:$0xff]
        %v1180 = vld [vmem:[#allocation3 + $0x60] sm:$0xff]
        %v1181 = vld [vmem:[#allocation3 + $0x68] sm:$0xff]
        %v1182 = vld [vmem:[#allocation3 + $0x70] sm:$0xff]
        %v1183 = vld [vmem:[#allocation3 + $0x78] sm:$0xff]
        %v1184 = vld [vmem:[#allocation3 + $0x80] sm:$0xff]
        %v1185 = vld [vmem:[#allocation3 + $0x88] sm:$0xff]
        %v1186 = vld [vmem:[#allocation3 + $0x90] sm:$0xff]
        %v1187 = vld [vmem:[#allocation3 + $0x98] sm:$0xff]
        %v1188 = vld [vmem:[#allocation3 + $0xa0] sm:$0xff]
        %v1189 = vld [vmem:[#allocation3 + $0xa8] sm:$0xff]
        %v1190 = vld [vmem:[#allocation3 + $0xb0] sm:$0xff]
        %v1191 = vld [vmem:[#allocation3 + $0xb8] sm:$0xff]
        %v1192 = vld [vmem:[#allocation3 + $0xc0] sm:$0xff]
        %v1193 = vld [vmem:[#allocation3 + $0xc8] sm:$0xff]
        %v1194 = vld [vmem:[#allocation3 + $0xd0] sm:$0xff]
        %v1195 = vld [vmem:[#allocation3 + $0xd8] sm:$0xff]
        %v1196 = vld [vmem:[#allocation3 + $0xe0] sm:$0xff]
        %v1197 = vld [vmem:[#allocation3 + $0xe8] sm:$0xff]
        %v1198 = vld [vmem:[#allocation3 + $0xf0] sm:$0xff]
        %v1199 = vld [vmem:[#allocation3 + $0xf8] sm:$0xff]
        %v1232 = vunpack.c.l.b16 %v1168
        %v1233 = vunpack.c.h.b16 %v1168
        %v1234 = vunpack.c.l.b16 %v1169
        %v1235 = vunpack.c.h.b16 %v1169
        %v1236 = vunpack.c.l.b16 %v1170
        %v1237 = vunpack.c.h.b16 %v1170
        %v1238 = vunpack.c.l.b16 %v1171
        %v1239 = vunpack.c.h.b16 %v1171
        %v1240 = vunpack.c.l.b16 %v1172
        %v1241 = vunpack.c.h.b16 %v1172
        %v1242 = vunpack.c.l.b16 %v1173
        %v1243 = vunpack.c.h.b16 %v1173
        %v1244 = vunpack.c.l.b16 %v1174
        %v1245 = vunpack.c.h.b16 %v1174
        %v1246 = vunpack.c.l.b16 %v1175
        %v1247 = vunpack.c.h.b16 %v1175
        %v1248 = vunpack.c.l.b16 %v1176
        %v1249 = vunpack.c.h.b16 %v1176
        %v1250 = vunpack.c.l.b16 %v1177
        %v1251 = vunpack.c.h.b16 %v1177
        %v1252 = vunpack.c.l.b16 %v1178
        %v1253 = vunpack.c.h.b16 %v1178
        %v1254 = vunpack.c.l.b16 %v1179
        %v1255 = vunpack.c.h.b16 %v1179
        %v1256 = vunpack.c.l.b16 %v1180
        %v1257 = vunpack.c.h.b16 %v1180
        %v1258 = vunpack.c.l.b16 %v1181
        %v1259 = vunpack.c.h.b16 %v1181
        %v1260 = vunpack.c.l.b16 %v1182
        %v1261 = vunpack.c.h.b16 %v1182
        %v1262 = vunpack.c.l.b16 %v1183
        %v1263 = vunpack.c.h.b16 %v1183
        %v1264 = vunpack.c.l.b16 %v1184
        %v1265 = vunpack.c.h.b16 %v1184
        %v1266 = vunpack.c.l.b16 %v1185
        %v1267 = vunpack.c.h.b16 %v1185
        %v1268 = vunpack.c.l.b16 %v1186
        %v1269 = vunpack.c.h.b16 %v1186
        %v1270 = vunpack.c.l.b16 %v1187
        %v1271 = vunpack.c.h.b16 %v1187
        %v1272 = vunpack.c.l.b16 %v1188
        %v1273 = vunpack.c.h.b16 %v1188
        %v1274 = vunpack.c.l.b16 %v1189
        %v1275 = vunpack.c.h.b16 %v1189
        %v1276 = vunpack.c.l.b16 %v1190
        %v1277 = vunpack.c.h.b16 %v1190
        %v1278 = vunpack.c.l.b16 %v1191
        %v1279 = vunpack.c.h.b16 %v1191
        %v1280 = vunpack.c.l.b16 %v1192
        %v1281 = vunpack.c.h.b16 %v1192
        %v1282 = vunpack.c.l.b16 %v1193
        %v1283 = vunpack.c.h.b16 %v1193
        %v1284 = vunpack.c.l.b16 %v1194
        %v1285 = vunpack.c.h.b16 %v1194
        %v1286 = vunpack.c.l.b16 %v1195
        %v1287 = vunpack.c.h.b16 %v1195
        %v1288 = vunpack.c.l.b16 %v1196
        %v1289 = vunpack.c.h.b16 %v1196
        %v1290 = vunpack.c.l.b16 %v1197
        %v1291 = vunpack.c.h.b16 %v1197
        %v1292 = vunpack.c.l.b16 %v1198
        %v1293 = vunpack.c.h.b16 %v1198
        %v1294 = vunpack.c.l.b16 %v1199
        %v1295 = vunpack.c.h.b16 %v1199
        %v1296 = vpack.c.b16 %v1234, %v1232
        %v1297 = vpack.c.b16 %v1235, %v1233
        %v1298 = vpack.c.b16 %v1238, %v1236
        %v1299 = vpack.c.b16 %v1239, %v1237
        %v1300 = vpack.c.b16 %v1242, %v1240
        %v1301 = vpack.c.b16 %v1243, %v1241
        %v1302 = vpack.c.b16 %v1246, %v1244
        %v1303 = vpack.c.b16 %v1247, %v1245
        %v1304 = vpack.c.b16 %v1250, %v1248
        %v1305 = vpack.c.b16 %v1251, %v1249
        %v1306 = vpack.c.b16 %v1254, %v1252
        %v1307 = vpack.c.b16 %v1255, %v1253
        %v1308 = vpack.c.b16 %v1258, %v1256
        %v1309 = vpack.c.b16 %v1259, %v1257
        %v1310 = vpack.c.b16 %v1262, %v1260
        %v1311 = vpack.c.b16 %v1263, %v1261
        %v1312 = vpack.c.b16 %v1266, %v1264
        %v1313 = vpack.c.b16 %v1267, %v1265
        %v1314 = vpack.c.b16 %v1270, %v1268
        %v1315 = vpack.c.b16 %v1271, %v1269
        %v1316 = vpack.c.b16 %v1274, %v1272
        %v1317 = vpack.c.b16 %v1275, %v1273
        %v1318 = vpack.c.b16 %v1278, %v1276
        %v1319 = vpack.c.b16 %v1279, %v1277
        %v1320 = vpack.c.b16 %v1282, %v1280
        %v1321 = vpack.c.b16 %v1283, %v1281
        %v1322 = vpack.c.b16 %v1286, %v1284
        %v1323 = vpack.c.b16 %v1287, %v1285
        %v1324 = vpack.c.b16 %v1290, %v1288
        %v1325 = vpack.c.b16 %v1291, %v1289
        %v1326 = vpack.c.b16 %v1294, %v1292
        %v1327 = vpack.c.b16 %v1295, %v1293
        %1360 = vmatprep.subr.bf16.mxu0 0
        %1361 = vmatpush1.bf16.msra.mxu0 %v799
        %1362 = vmatprep.subr.bf16.mxu0 0
        %1363 = vmatpush1.bf16.msra.mxu0 %v800
        %1364 = vmatprep.subr.bf16.mxu0 0
        %1365 = vmatpush1.bf16.msra.mxu0 %v801
        %1366 = vmatprep.subr.bf16.mxu0 0
        %1367 = vmatpush1.bf16.msra.mxu0 %v802
        %1368 = vmatprep.subr.bf16.mxu0 0
        %1369 = vmatpush1.bf16.msra.mxu0 %v803
        %1370 = vmatprep.subr.bf16.mxu0 0
        %1371 = vmatpush1.bf16.msra.mxu0 %v804
        %1372 = vmatprep.subr.bf16.mxu0 0
        %1373 = vmatpush1.bf16.msra.mxu0 %v805
        %1374 = vmatprep.subr.bf16.mxu0 0
        %1375 = vmatpush1.bf16.msra.mxu0 %v806
        %1376 = vmatprep.subr.bf16.mxu0 0
        %1377 = vmatpush1.bf16.msra.mxu0 %v807
        %1378 = vmatprep.subr.bf16.mxu0 0
        %1379 = vmatpush1.bf16.msra.mxu0 %v808
        %1380 = vmatprep.subr.bf16.mxu0 0
        %1381 = vmatpush1.bf16.msra.mxu0 %v809
        %1382 = vmatprep.subr.bf16.mxu0 0
        %1383 = vmatpush1.bf16.msra.mxu0 %v810
        %1384 = vmatprep.subr.bf16.mxu0 0
        %1385 = vmatpush1.bf16.msra.mxu0 %v811
        %1386 = vmatprep.subr.bf16.mxu0 0
        %1387 = vmatpush1.bf16.msra.mxu0 %v812
        %1388 = vmatprep.subr.bf16.mxu0 0
        %1389 = vmatpush1.bf16.msra.mxu0 %v813
        %1390 = vmatprep.subr.bf16.mxu0 0
        %1391 = vmatpush1.bf16.msra.mxu0 %v814
        %1392 = vmatprep.mubr.bf16.mxu0 %v1297
        %1393 = vmatmul.mubr.bf16.gmra.mrb[0].mxu0 %v1296
        %v1394 = vpop.f32.mrb[0].mxu0
        %v1395 = vadd.f32 0.0, %v1394
        %v1396 = vpop.f32.mrb[0].mxu0
        %v1397 = vpop.f32.mrb[0].mxu0
        %v1398 = vadd.f32 0.0, %v1397
        %v1399 = vpop.f32.mrb[0].mxu0
        %1400 = vmatprep.mubr.bf16.mxu0 %v1299
        %1401 = vmatmul.mubr.bf16.gmra.mrb[0].mxu0 %v1298
        %v1402 = vpop.f32.mrb[0].mxu0
        %v1403 = vadd.f32 0.0, %v1402
        %v1404 = vpop.f32.mrb[0].mxu0
        %v1405 = vpop.f32.mrb[0].mxu0
        %v1406 = vadd.f32 0.0, %v1405
        %v1407 = vpop.f32.mrb[0].mxu0
        %1408 = vmatprep.mubr.bf16.mxu0 %v1301
        %1409 = vmatmul.mubr.bf16.gmra.mrb[0].mxu0 %v1300
        %v1410 = vpop.f32.mrb[0].mxu0
        %v1411 = vadd.f32 0.0, %v1410
        %v1412 = vpop.f32.mrb[0].mxu0
        %v1413 = vpop.f32.mrb[0].mxu0
        %v1414 = vadd.f32 0.0, %v1413
        %v1415 = vpop.f32.mrb[0].mxu0
        %1416 = vmatprep.mubr.bf16.mxu0 %v1303
        %1417 = vmatmul.mubr.bf16.gmra.mrb[0].mxu0 %v1302
        %v1418 = vpop.f32.mrb[0].mxu0
        %v1419 = vadd.f32 0.0, %v1418
        %v1420 = vpop.f32.mrb[0].mxu0
        %v1421 = vpop.f32.mrb[0].mxu0
        %v1422 = vadd.f32 0.0, %v1421
        %v1423 = vpop.f32.mrb[0].mxu0
        %1424 = vmatprep.mubr.bf16.mxu0 %v1305
        %1425 = vmatmul.mubr.bf16.gmra.mrb[0].mxu0 %v1304
        %v1426 = vpop.f32.mrb[0].mxu0
        %v1427 = vadd.f32 0.0, %v1426
        %v1428 = vpop.f32.mrb[0].mxu0
        %v1429 = vpop.f32.mrb[0].mxu0
        %v1430 = vadd.f32 0.0, %v1429
        %v1431 = vpop.f32.mrb[0].mxu0
        %1432 = vmatprep.mubr.bf16.mxu0 %v1307
        %1433 = vmatmul.mubr.bf16.gmra.mrb[0].mxu0 %v1306
        %v1434 = vpop.f32.mrb[0].mxu0
        %v1435 = vadd.f32 0.0, %v1434
        %v1436 = vpop.f32.mrb[0].mxu0
        %v1437 = vpop.f32.mrb[0].mxu0
        %v1438 = vadd.f32 0.0, %v1437
        %v1439 = vpop.f32.mrb[0].mxu0
        %1440 = vmatprep.mubr.bf16.mxu0 %v1309
        %1441 = vmatmul.mubr.bf16.gmra.mrb[0].mxu0 %v1308
        %v1442 = vpop.f32.mrb[0].mxu0
        %v1443 = vadd.f32 0.0, %v1442
        %v1444 = vpop.f32.mrb[0].mxu0
        %v1445 = vpop.f32.mrb[0].mxu0
        %v1446 = vadd.f32 0.0, %v1445
        %v1447 = vpop.f32.mrb[0].mxu0
        %1448 = vmatprep.mubr.bf16.mxu0 %v1311
        %1449 = vmatmul.mubr.bf16.gmra.mrb[0].mxu0 %v1310
        %v1450 = vpop.f32.mrb[0].mxu0
        %v1451 = vadd.f32 0.0, %v1450
        %v1452 = vpop.f32.mrb[0].mxu0
        %v1453 = vpop.f32.mrb[0].mxu0
        %v1454 = vadd.f32 0.0, %v1453
        %v1455 = vpop.f32.mrb[0].mxu0
        %1456 = vmatprep.mubr.bf16.mxu0 %v1313
        %1457 = vmatmul.mubr.bf16.gmra.mrb[0].mxu0 %v1312
        %v1458 = vpop.f32.mrb[0].mxu0
        %v1459 = vadd.f32 0.0, %v1458
        %v1460 = vpop.f32.mrb[0].mxu0
        %v1461 = vpop.f32.mrb[0].mxu0
        %v1462 = vadd.f32 0.0, %v1461
        %v1463 = vpop.f32.mrb[0].mxu0
        %1464 = vmatprep.mubr.bf16.mxu0 %v1315
        %1465 = vmatmul.mubr.bf16.gmra.mrb[0].mxu0 %v1314
        %v1466 = vpop.f32.mrb[0].mxu0
        %v1467 = vadd.f32 0.0, %v1466
        %v1468 = vpop.f32.mrb[0].mxu0
        %v1469 = vpop.f32.mrb[0].mxu0
        %v1470 = vadd.f32 0.0, %v1469
        %v1471 = vpop.f32.mrb[0].mxu0
        %1472 = vmatprep.mubr.bf16.mxu0 %v1317
        %1473 = vmatmul.mubr.bf16.gmra.mrb[0].mxu0 %v1316
        %v1474 = vpop.f32.mrb[0].mxu0
        %v1475 = vadd.f32 0.0, %v1474
        %v1476 = vpop.f32.mrb[0].mxu0
        %v1477 = vpop.f32.mrb[0].mxu0
        %v1478 = vadd.f32 0.0, %v1477
        %v1479 = vpop.f32.mrb[0].mxu0
        %1480 = vmatprep.mubr.bf16.mxu0 %v1319
        %1481 = vmatmul.mubr.bf16.gmra.mrb[0].mxu0 %v1318
        %v1482 = vpop.f32.mrb[0].mxu0
        %v1483 = vadd.f32 0.0, %v1482
        %v1484 = vpop.f32.mrb[0].mxu0
        %v1485 = vpop.f32.mrb[0].mxu0
        %v1486 = vadd.f32 0.0, %v1485
        %v1487 = vpop.f32.mrb[0].mxu0
        %1488 = vmatprep.mubr.bf16.mxu0 %v1321
        %1489 = vmatmul.mubr.bf16.gmra.mrb[0].mxu0 %v1320
        %v1490 = vpop.f32.mrb[0].mxu0
        %v1491 = vadd.f32 0.0, %v1490
        %v1492 = vpop.f32.mrb[0].mxu0
        %v1493 = vpop.f32.mrb[0].mxu0
        %v1494 = vadd.f32 0.0, %v1493
        %v1495 = vpop.f32.mrb[0].mxu0
        %1496 = vmatprep.mubr.bf16.mxu0 %v1323
        %1497 = vmatmul.mubr.bf16.gmra.mrb[0].mxu0 %v1322
        %v1498 = vpop.f32.mrb[0].mxu0
        %v1499 = vadd.f32 0.0, %v1498
        %v1500 = vpop.f32.mrb[0].mxu0
        %v1501 = vpop.f32.mrb[0].mxu0
        %v1502 = vadd.f32 0.0, %v1501
        %v1503 = vpop.f32.mrb[0].mxu0
        %1504 = vmatprep.mubr.bf16.mxu0 %v1325
        %1505 = vmatmul.mubr.bf16.gmra.mrb[0].mxu0 %v1324
        %v1506 = vpop.f32.mrb[0].mxu0
        %v1507 = vadd.f32 0.0, %v1506
        %v1508 = vpop.f32.mrb[0].mxu0
        %v1509 = vpop.f32.mrb[0].mxu0
        %v1510 = vadd.f32 0.0, %v1509
        %v1511 = vpop.f32.mrb[0].mxu0
        %1512 = vmatprep.mubr.bf16.mxu0 %v1327
        %1513 = vmatmul.mubr.bf16.gmra.mrb[0].mxu0 %v1326
        %v1514 = vpop.f32.mrb[0].mxu0
        %v1515 = vadd.f32 0.0, %v1514
        %v1516 = vpop.f32.mrb[0].mxu0
        %v1517 = vpop.f32.mrb[0].mxu0
        %v1518 = vadd.f32 0.0, %v1517
        %v1519 = vpop.f32.mrb[0].mxu0
        %1520 = vdwg.mxu0
        %v1521 = vpack.c.bf16 %v1045, %v1042
        %v1522 = vpack.c.bf16 %v1398, %v1395
        %v1523 = vpack.c.bf16 %v1053, %v1050
        %v1524 = vpack.c.bf16 %v1406, %v1403
        %v1525 = vpack.c.bf16 %v1061, %v1058
        %v1526 = vpack.c.bf16 %v1414, %v1411
        %v1527 = vpack.c.bf16 %v1069, %v1066
        %v1528 = vpack.c.bf16 %v1422, %v1419
        %v1529 = vpack.c.bf16 %v1077, %v1074
        %v1530 = vpack.c.bf16 %v1430, %v1427
        %v1531 = vpack.c.bf16 %v1085, %v1082
        %v1532 = vpack.c.bf16 %v1438, %v1435
        %v1533 = vpack.c.bf16 %v1093, %v1090
        %v1534 = vpack.c.bf16 %v1446, %v1443
        %v1535 = vpack.c.bf16 %v1101, %v1098
        %v1536 = vpack.c.bf16 %v1454, %v1451
        %v1537 = vpack.c.bf16 %v1109, %v1106
        %v1538 = vpack.c.bf16 %v1462, %v1459
        %v1539 = vpack.c.bf16 %v1117, %v1114
        %v1540 = vpack.c.bf16 %v1470, %v1467
        %v1541 = vpack.c.bf16 %v1125, %v1122
        %v1542 = vpack.c.bf16 %v1478, %v1475
        %v1543 = vpack.c.bf16 %v1133, %v1130
        %v1544 = vpack.c.bf16 %v1486, %v1483
        %v1545 = vpack.c.bf16 %v1141, %v1138
        %v1546 = vpack.c.bf16 %v1494, %v1491
        %v1547 = vpack.c.bf16 %v1149, %v1146
        %v1548 = vpack.c.bf16 %v1502, %v1499
        %v1549 = vpack.c.bf16 %v1157, %v1154
        %v1550 = vpack.c.bf16 %v1510, %v1507
        %v1551 = vpack.c.bf16 %v1165, %v1162
        %v1552 = vpack.c.bf16 %v1518, %v1515
        %v1553 = vld [vmem:[%s527] sm:$0xff]
        %v1554 = vld [vmem:[%s527 + $0x8] sm:$0xff]
        %v1555 = vld [vmem:[%s527 + $0x10] sm:$0xff]
        %v1556 = vld [vmem:[%s527 + $0x18] sm:$0xff]
        %v1557 = vld [vmem:[%s527 + $0x20] sm:$0xff]
        %v1558 = vld [vmem:[%s527 + $0x28] sm:$0xff]
        %v1559 = vld [vmem:[%s527 + $0x30] sm:$0xff]
        %v1560 = vld [vmem:[%s527 + $0x38] sm:$0xff]
        %v1561 = vld [vmem:[%s527 + $0x40] sm:$0xff]
        %v1562 = vld [vmem:[%s527 + $0x48] sm:$0xff]
        %v1563 = vld [vmem:[%s527 + $0x50] sm:$0xff]
        %v1564 = vld [vmem:[%s527 + $0x58] sm:$0xff]
        %v1565 = vld [vmem:[%s527 + $0x60] sm:$0xff]
        %v1566 = vld [vmem:[%s527 + $0x68] sm:$0xff]
        %v1567 = vld [vmem:[%s527 + $0x70] sm:$0xff]
        %v1568 = vld [vmem:[%s527 + $0x78] sm:$0xff]
        %v1569 = vld [vmem:[%s527 + $0x80] sm:$0xff]
        %v1570 = vld [vmem:[%s527 + $0x88] sm:$0xff]
        %v1571 = vld [vmem:[%s527 + $0x90] sm:$0xff]
        %v1572 = vld [vmem:[%s527 + $0x98] sm:$0xff]
        %v1573 = vld [vmem:[%s527 + $0xa0] sm:$0xff]
        %v1574 = vld [vmem:[%s527 + $0xa8] sm:$0xff]
        %v1575 = vld [vmem:[%s527 + $0xb0] sm:$0xff]
        %v1576 = vld [vmem:[%s527 + $0xb8] sm:$0xff]
        %v1577 = vld [vmem:[%s527 + $0xc0] sm:$0xff]
        %v1578 = vld [vmem:[%s527 + $0xc8] sm:$0xff]
        %v1579 = vld [vmem:[%s527 + $0xd0] sm:$0xff]
        %v1580 = vld [vmem:[%s527 + $0xd8] sm:$0xff]
        %v1581 = vld [vmem:[%s527 + $0xe0] sm:$0xff]
        %v1582 = vld [vmem:[%s527 + $0xe8] sm:$0xff]
        %v1583 = vld [vmem:[%s527 + $0xf0] sm:$0xff]
        %v1584 = vld [vmem:[%s527 + $0xf8] sm:$0xff]
        %v1585 = vld [vmem:[%s527 + $0x100] sm:$0xff]
        %v1586 = vld [vmem:[%s527 + $0x108] sm:$0xff]
        %v1587 = vld [vmem:[%s527 + $0x110] sm:$0xff]
        %v1588 = vld [vmem:[%s527 + $0x118] sm:$0xff]
        %v1589 = vld [vmem:[%s527 + $0x120] sm:$0xff]
        %v1590 = vld [vmem:[%s527 + $0x128] sm:$0xff]
        %v1591 = vld [vmem:[%s527 + $0x130] sm:$0xff]
        %v1592 = vld [vmem:[%s527 + $0x138] sm:$0xff]
        %v1593 = vld [vmem:[%s527 + $0x140] sm:$0xff]
        %v1594 = vld [vmem:[%s527 + $0x148] sm:$0xff]
        %v1595 = vld [vmem:[%s527 + $0x150] sm:$0xff]
        %v1596 = vld [vmem:[%s527 + $0x158] sm:$0xff]
        %v1597 = vld [vmem:[%s527 + $0x160] sm:$0xff]
        %v1598 = vld [vmem:[%s527 + $0x168] sm:$0xff]
        %v1599 = vld [vmem:[%s527 + $0x170] sm:$0xff]
        %v1600 = vld [vmem:[%s527 + $0x178] sm:$0xff]
        %v1601 = vld [vmem:[%s527 + $0x180] sm:$0xff]
        %v1602 = vld [vmem:[%s527 + $0x188] sm:$0xff]
        %v1603 = vld [vmem:[%s527 + $0x190] sm:$0xff]
        %v1604 = vld [vmem:[%s527 + $0x198] sm:$0xff]
        %v1605 = vld [vmem:[%s527 + $0x1a0] sm:$0xff]
        %v1606 = vld [vmem:[%s527 + $0x1a8] sm:$0xff]
        %v1607 = vld [vmem:[%s527 + $0x1b0] sm:$0xff]
        %v1608 = vld [vmem:[%s527 + $0x1b8] sm:$0xff]
        %v1609 = vld [vmem:[%s527 + $0x1c0] sm:$0xff]
        %v1610 = vld [vmem:[%s527 + $0x1c8] sm:$0xff]
        %v1611 = vld [vmem:[%s527 + $0x1d0] sm:$0xff]
        %v1612 = vld [vmem:[%s527 + $0x1d8] sm:$0xff]
        %v1613 = vld [vmem:[%s527 + $0x1e0] sm:$0xff]
        %v1614 = vld [vmem:[%s527 + $0x1e8] sm:$0xff]
        %v1615 = vld [vmem:[%s527 + $0x1f0] sm:$0xff]
        %v1616 = vld [vmem:[%s527 + $0x1f8] sm:$0xff]
        %v1617 = vld [vmem:[%s620] sm:$0xf]
        %v1619 = vlaneseq
        %v1620 = vshrl.u32 %v1619, 7
        %v1621 = vsub.s32 0, %v1620
        %v1622 = vrot.slane %v1617, %v1621
        %v1623 = vlaneseq
        %v1624 = vshrl.u32 %v1623, 7
        %v1625 = vsub.s32 1, %v1624
        %v1626 = vrot.slane %v1617, %v1625
        %v1627 = vlaneseq
        %v1628 = vshrl.u32 %v1627, 7
        %v1629 = vsub.s32 2, %v1628
        %v1630 = vrot.slane %v1617, %v1629
        %v1631 = vlaneseq
        %v1632 = vshrl.u32 %v1631, 7
        %v1633 = vsub.s32 3, %v1632
        %v1634 = vrot.slane %v1617, %v1633
        %v1703 = vunpack.c.l.b16 %v1553
        %v1704 = vunpack.c.h.b16 %v1553
        %v1705 = vunpack.c.l.b16 %v1554
        %v1706 = vunpack.c.h.b16 %v1554
        %v1707 = vunpack.c.l.b16 %v1555
        %v1708 = vunpack.c.h.b16 %v1555
        %v1709 = vunpack.c.l.b16 %v1556
        %v1710 = vunpack.c.h.b16 %v1556
        %v1711 = vunpack.c.l.b16 %v1557
        %v1712 = vunpack.c.h.b16 %v1557
        %v1713 = vunpack.c.l.b16 %v1558
        %v1714 = vunpack.c.h.b16 %v1558
        %v1715 = vunpack.c.l.b16 %v1559
        %v1716 = vunpack.c.h.b16 %v1559
        %v1717 = vunpack.c.l.b16 %v1560
        %v1718 = vunpack.c.h.b16 %v1560
        %v1719 = vunpack.c.l.b16 %v1561
        %v1720 = vunpack.c.h.b16 %v1561
        %v1721 = vunpack.c.l.b16 %v1562
        %v1722 = vunpack.c.h.b16 %v1562
        %v1723 = vunpack.c.l.b16 %v1563
        %v1724 = vunpack.c.h.b16 %v1563
        %v1725 = vunpack.c.l.b16 %v1564
        %v1726 = vunpack.c.h.b16 %v1564
        %v1727 = vunpack.c.l.b16 %v1565
        %v1728 = vunpack.c.h.b16 %v1565
        %v1729 = vunpack.c.l.b16 %v1566
        %v1730 = vunpack.c.h.b16 %v1566
        %v1731 = vunpack.c.l.b16 %v1567
        %v1732 = vunpack.c.h.b16 %v1567
        %v1733 = vunpack.c.l.b16 %v1568
        %v1734 = vunpack.c.h.b16 %v1568
        %v1735 = vunpack.c.l.b16 %v1569
        %v1736 = vunpack.c.h.b16 %v1569
        %v1737 = vunpack.c.l.b16 %v1570
        %v1738 = vunpack.c.h.b16 %v1570
        %v1739 = vunpack.c.l.b16 %v1571
        %v1740 = vunpack.c.h.b16 %v1571
        %v1741 = vunpack.c.l.b16 %v1572
        %v1742 = vunpack.c.h.b16 %v1572
        %v1743 = vunpack.c.l.b16 %v1573
        %v1744 = vunpack.c.h.b16 %v1573
        %v1745 = vunpack.c.l.b16 %v1574
        %v1746 = vunpack.c.h.b16 %v1574
        %v1747 = vunpack.c.l.b16 %v1575
        %v1748 = vunpack.c.h.b16 %v1575
        %v1749 = vunpack.c.l.b16 %v1576
        %v1750 = vunpack.c.h.b16 %v1576
        %v1751 = vunpack.c.l.b16 %v1577
        %v1752 = vunpack.c.h.b16 %v1577
        %v1753 = vunpack.c.l.b16 %v1578
        %v1754 = vunpack.c.h.b16 %v1578
        %v1755 = vunpack.c.l.b16 %v1579
        %v1756 = vunpack.c.h.b16 %v1579
        %v1757 = vunpack.c.l.b16 %v1580
        %v1758 = vunpack.c.h.b16 %v1580
        %v1759 = vunpack.c.l.b16 %v1581
        %v1760 = vunpack.c.h.b16 %v1581
        %v1761 = vunpack.c.l.b16 %v1582
        %v1762 = vunpack.c.h.b16 %v1582
        %v1763 = vunpack.c.l.b16 %v1583
        %v1764 = vunpack.c.h.b16 %v1583
        %v1765 = vunpack.c.l.b16 %v1584
        %v1766 = vunpack.c.h.b16 %v1584
        %v1767 = vunpack.c.l.b16 %v1585
        %v1768 = vunpack.c.h.b16 %v1585
        %v1769 = vunpack.c.l.b16 %v1586
        %v1770 = vunpack.c.h.b16 %v1586
        %v1771 = vunpack.c.l.b16 %v1587
        %v1772 = vunpack.c.h.b16 %v1587
        %v1773 = vunpack.c.l.b16 %v1588
        %v1774 = vunpack.c.h.b16 %v1588
        %v1775 = vunpack.c.l.b16 %v1589
        %v1776 = vunpack.c.h.b16 %v1589
        %v1777 = vunpack.c.l.b16 %v1590
        %v1778 = vunpack.c.h.b16 %v1590
        %v1779 = vunpack.c.l.b16 %v1591
        %v1780 = vunpack.c.h.b16 %v1591
        %v1781 = vunpack.c.l.b16 %v1592
        %v1782 = vunpack.c.h.b16 %v1592
        %v1783 = vunpack.c.l.b16 %v1593
        %v1784 = vunpack.c.h.b16 %v1593
        %v1785 = vunpack.c.l.b16 %v1594
        %v1786 = vunpack.c.h.b16 %v1594
        %v1787 = vunpack.c.l.b16 %v1595
        %v1788 = vunpack.c.h.b16 %v1595
        %v1789 = vunpack.c.l.b16 %v1596
        %v1790 = vunpack.c.h.b16 %v1596
        %v1791 = vunpack.c.l.b16 %v1597
        %v1792 = vunpack.c.h.b16 %v1597
        %v1793 = vunpack.c.l.b16 %v1598
        %v1794 = vunpack.c.h.b16 %v1598
        %v1795 = vunpack.c.l.b16 %v1599
        %v1796 = vunpack.c.h.b16 %v1599
        %v1797 = vunpack.c.l.b16 %v1600
        %v1798 = vunpack.c.h.b16 %v1600
        %v1799 = vunpack.c.l.b16 %v1601
        %v1800 = vunpack.c.h.b16 %v1601
        %v1801 = vunpack.c.l.b16 %v1602
        %v1802 = vunpack.c.h.b16 %v1602
        %v1803 = vunpack.c.l.b16 %v1603
        %v1804 = vunpack.c.h.b16 %v1603
        %v1805 = vunpack.c.l.b16 %v1604
        %v1806 = vunpack.c.h.b16 %v1604
        %v1807 = vunpack.c.l.b16 %v1605
        %v1808 = vunpack.c.h.b16 %v1605
        %v1809 = vunpack.c.l.b16 %v1606
        %v1810 = vunpack.c.h.b16 %v1606
        %v1811 = vunpack.c.l.b16 %v1607
        %v1812 = vunpack.c.h.b16 %v1607
        %v1813 = vunpack.c.l.b16 %v1608
        %v1814 = vunpack.c.h.b16 %v1608
        %v1815 = vunpack.c.l.b16 %v1609
        %v1816 = vunpack.c.h.b16 %v1609
        %v1817 = vunpack.c.l.b16 %v1610
        %v1818 = vunpack.c.h.b16 %v1610
        %v1819 = vunpack.c.l.b16 %v1611
        %v1820 = vunpack.c.h.b16 %v1611
        %v1821 = vunpack.c.l.b16 %v1612
        %v1822 = vunpack.c.h.b16 %v1612
        %v1823 = vunpack.c.l.b16 %v1613
        %v1824 = vunpack.c.h.b16 %v1613
        %v1825 = vunpack.c.l.b16 %v1614
        %v1826 = vunpack.c.h.b16 %v1614
        %v1827 = vunpack.c.l.b16 %v1615
        %v1828 = vunpack.c.h.b16 %v1615
        %v1829 = vunpack.c.l.b16 %v1616
        %v1830 = vunpack.c.h.b16 %v1616
        %v1831 = vpack.c.b16 %v1707, %v1703
        %v1832 = vpack.c.b16 %v1708, %v1704
        %v1833 = vpack.c.b16 %v1709, %v1705
        %v1834 = vpack.c.b16 %v1710, %v1706
        %v1835 = vpack.c.b16 %v1715, %v1711
        %v1836 = vpack.c.b16 %v1716, %v1712
        %v1837 = vpack.c.b16 %v1717, %v1713
        %v1838 = vpack.c.b16 %v1718, %v1714
        %v1839 = vpack.c.b16 %v1723, %v1719
        %v1840 = vpack.c.b16 %v1724, %v1720
        %v1841 = vpack.c.b16 %v1725, %v1721
        %v1842 = vpack.c.b16 %v1726, %v1722
        %v1843 = vpack.c.b16 %v1731, %v1727
        %v1844 = vpack.c.b16 %v1732, %v1728
        %v1845 = vpack.c.b16 %v1733, %v1729
        %v1846 = vpack.c.b16 %v1734, %v1730
        %v1847 = vpack.c.b16 %v1739, %v1735
        %v1848 = vpack.c.b16 %v1740, %v1736
        %v1849 = vpack.c.b16 %v1741, %v1737
        %v1850 = vpack.c.b16 %v1742, %v1738
        %v1851 = vpack.c.b16 %v1747, %v1743
        %v1852 = vpack.c.b16 %v1748, %v1744
        %v1853 = vpack.c.b16 %v1749, %v1745
        %v1854 = vpack.c.b16 %v1750, %v1746
        %v1855 = vpack.c.b16 %v1755, %v1751
        %v1856 = vpack.c.b16 %v1756, %v1752
        %v1857 = vpack.c.b16 %v1757, %v1753
        %v1858 = vpack.c.b16 %v1758, %v1754
        %v1859 = vpack.c.b16 %v1763, %v1759
        %v1860 = vpack.c.b16 %v1764, %v1760
        %v1861 = vpack.c.b16 %v1765, %v1761
        %v1862 = vpack.c.b16 %v1766, %v1762
        %v1863 = vpack.c.b16 %v1771, %v1767
        %v1864 = vpack.c.b16 %v1772, %v1768
        %v1865 = vpack.c.b16 %v1773, %v1769
        %v1866 = vpack.c.b16 %v1774, %v1770
        %v1867 = vpack.c.b16 %v1779, %v1775
        %v1868 = vpack.c.b16 %v1780, %v1776
        %v1869 = vpack.c.b16 %v1781, %v1777
        %v1870 = vpack.c.b16 %v1782, %v1778
        %v1871 = vpack.c.b16 %v1787, %v1783
        %v1872 = vpack.c.b16 %v1788, %v1784
        %v1873 = vpack.c.b16 %v1789, %v1785
        %v1874 = vpack.c.b16 %v1790, %v1786
        %v1875 = vpack.c.b16 %v1795, %v1791
        %v1876 = vpack.c.b16 %v1796, %v1792
        %v1877 = vpack.c.b16 %v1797, %v1793
        %v1878 = vpack.c.b16 %v1798, %v1794
        %v1879 = vpack.c.b16 %v1803, %v1799
        %v1880 = vpack.c.b16 %v1804, %v1800
        %v1881 = vpack.c.b16 %v1805, %v1801
        %v1882 = vpack.c.b16 %v1806, %v1802
        %v1883 = vpack.c.b16 %v1811, %v1807
        %v1884 = vpack.c.b16 %v1812, %v1808
        %v1885 = vpack.c.b16 %v1813, %v1809
        %v1886 = vpack.c.b16 %v1814, %v1810
        %v1887 = vpack.c.b16 %v1819, %v1815
        %v1888 = vpack.c.b16 %v1820, %v1816
        %v1889 = vpack.c.b16 %v1821, %v1817
        %v1890 = vpack.c.b16 %v1822, %v1818
        %v1891 = vpack.c.b16 %v1827, %v1823
        %v1892 = vpack.c.b16 %v1828, %v1824
        %v1893 = vpack.c.b16 %v1829, %v1825
        %v1894 = vpack.c.b16 %v1830, %v1826
        %1959 = vmatprep.subr.bf16.mxu0 %v1832
        %1960 = vmatpush1.bf16.msra.mxu0 %v1831
        %1961 = vmatprep.subr.bf16.mxu0 %v1836
        %1962 = vmatpush1.bf16.msra.mxu0 %v1835
        %1963 = vmatprep.subr.bf16.mxu0 %v1840
        %1964 = vmatpush1.bf16.msra.mxu0 %v1839
        %1965 = vmatprep.subr.bf16.mxu0 %v1844
        %1966 = vmatpush1.bf16.msra.mxu0 %v1843
        %1967 = vmatprep.subr.bf16.mxu0 %v1848
        %1968 = vmatpush1.bf16.msra.mxu0 %v1847
        %1969 = vmatprep.subr.bf16.mxu0 %v1852
        %1970 = vmatpush1.bf16.msra.mxu0 %v1851
        %1971 = vmatprep.subr.bf16.mxu0 %v1856
        %1972 = vmatpush1.bf16.msra.mxu0 %v1855
        %1973 = vmatprep.subr.bf16.mxu0 %v1860
        %1974 = vmatpush1.bf16.msra.mxu0 %v1859
        %1975 = vmatprep.subr.bf16.mxu0 %v1864
        %1976 = vmatpush1.bf16.msra.mxu0 %v1863
        %1977 = vmatprep.subr.bf16.mxu0 %v1868
        %1978 = vmatpush1.bf16.msra.mxu0 %v1867
        %1979 = vmatprep.subr.bf16.mxu0 %v1872
        %1980 = vmatpush1.bf16.msra.mxu0 %v1871
        %1981 = vmatprep.subr.bf16.mxu0 %v1876
        %1982 = vmatpush1.bf16.msra.mxu0 %v1875
        %1983 = vmatprep.subr.bf16.mxu0 %v1880
        %1984 = vmatpush1.bf16.msra.mxu0 %v1879
        %1985 = vmatprep.subr.bf16.mxu0 %v1884
        %1986 = vmatpush1.bf16.msra.mxu0 %v1883
        %1987 = vmatprep.subr.bf16.mxu0 %v1888
        %1988 = vmatpush1.bf16.msra.mxu0 %v1887
        %1989 = vmatprep.subr.bf16.mxu0 %v1892
        %1990 = vmatpush1.bf16.msra.mxu0 %v1891
        %1991 = vmatprep.mubr.bf16.mxu0 %v1522
        %1992 = vmatmul.mubr.bf16.gmra.mrb[0].mxu0 %v1521
        %v1993 = vpop.f32.mrb[0].mxu0
        %v1994 = vadd.f32 %v1622, %v1993
        %v1995 = vpop.f32.mrb[0].mxu0
        %v1996 = vadd.f32 %v1626, %v1995
        %v1997 = vpop.f32.mrb[0].mxu0
        %v1998 = vadd.f32 %v1622, %v1997
        %v1999 = vpop.f32.mrb[0].mxu0
        %v2000 = vadd.f32 %v1626, %v1999
        %2001 = vmatprep.mubr.bf16.mxu0 %v1524
        %2002 = vmatmul.mubr.bf16.gmra.mrb[0].mxu0 %v1523
        %v2003 = vpop.f32.mrb[0].mxu0
        %v2004 = vadd.f32 %v1622, %v2003
        %v2005 = vpop.f32.mrb[0].mxu0
        %v2006 = vadd.f32 %v1626, %v2005
        %v2007 = vpop.f32.mrb[0].mxu0
        %v2008 = vadd.f32 %v1622, %v2007
        %v2009 = vpop.f32.mrb[0].mxu0
        %v2010 = vadd.f32 %v1626, %v2009
        %2011 = vmatprep.mubr.bf16.mxu0 %v1526
        %2012 = vmatmul.mubr.bf16.gmra.mrb[0].mxu0 %v1525
        %v2013 = vpop.f32.mrb[0].mxu0
        %v2014 = vadd.f32 %v1622, %v2013
        %v2015 = vpop.f32.mrb[0].mxu0
        %v2016 = vadd.f32 %v1626, %v2015
        %v2017 = vpop.f32.mrb[0].mxu0
        %v2018 = vadd.f32 %v1622, %v2017
        %v2019 = vpop.f32.mrb[0].mxu0
        %v2020 = vadd.f32 %v1626, %v2019
        %2021 = vmatprep.mubr.bf16.mxu0 %v1528
        %2022 = vmatmul.mubr.bf16.gmra.mrb[0].mxu0 %v1527
        %v2023 = vpop.f32.mrb[0].mxu0
        %v2024 = vadd.f32 %v1622, %v2023
        %v2025 = vpop.f32.mrb[0].mxu0
        %v2026 = vadd.f32 %v1626, %v2025
        %v2027 = vpop.f32.mrb[0].mxu0
        %v2028 = vadd.f32 %v1622, %v2027
        %v2029 = vpop.f32.mrb[0].mxu0
        %v2030 = vadd.f32 %v1626, %v2029
        %2031 = vmatprep.mubr.bf16.mxu0 %v1530
        %2032 = vmatmul.mubr.bf16.gmra.mrb[0].mxu0 %v1529
        %v2033 = vpop.f32.mrb[0].mxu0
        %v2034 = vadd.f32 %v1622, %v2033
        %v2035 = vpop.f32.mrb[0].mxu0
        %v2036 = vadd.f32 %v1626, %v2035
        %v2037 = vpop.f32.mrb[0].mxu0
        %v2038 = vadd.f32 %v1622, %v2037
        %v2039 = vpop.f32.mrb[0].mxu0
        %v2040 = vadd.f32 %v1626, %v2039
        %2041 = vmatprep.mubr.bf16.mxu0 %v1532
        %2042 = vmatmul.mubr.bf16.gmra.mrb[0].mxu0 %v1531
        %v2043 = vpop.f32.mrb[0].mxu0
        %v2044 = vadd.f32 %v1622, %v2043
        %v2045 = vpop.f32.mrb[0].mxu0
        %v2046 = vadd.f32 %v1626, %v2045
        %v2047 = vpop.f32.mrb[0].mxu0
        %v2048 = vadd.f32 %v1622, %v2047
        %v2049 = vpop.f32.mrb[0].mxu0
        %v2050 = vadd.f32 %v1626, %v2049
        %2051 = vmatprep.mubr.bf16.mxu0 %v1534
        %2052 = vmatmul.mubr.bf16.gmra.mrb[0].mxu0 %v1533
        %v2053 = vpop.f32.mrb[0].mxu0
        %v2054 = vadd.f32 %v1622, %v2053
        %v2055 = vpop.f32.mrb[0].mxu0
        %v2056 = vadd.f32 %v1626, %v2055
        %v2057 = vpop.f32.mrb[0].mxu0
        %v2058 = vadd.f32 %v1622, %v2057
        %v2059 = vpop.f32.mrb[0].mxu0
        %v2060 = vadd.f32 %v1626, %v2059
        %2061 = vmatprep.mubr.bf16.mxu0 %v1536
        %2062 = vmatmul.mubr.bf16.gmra.mrb[0].mxu0 %v1535
        %v2063 = vpop.f32.mrb[0].mxu0
        %v2064 = vadd.f32 %v1622, %v2063
        %v2065 = vpop.f32.mrb[0].mxu0
        %v2066 = vadd.f32 %v1626, %v2065
        %v2067 = vpop.f32.mrb[0].mxu0
        %v2068 = vadd.f32 %v1622, %v2067
        %v2069 = vpop.f32.mrb[0].mxu0
        %v2070 = vadd.f32 %v1626, %v2069
        %2071 = vmatprep.mubr.bf16.mxu0 %v1538
        %2072 = vmatmul.mubr.bf16.gmra.mrb[0].mxu0 %v1537
        %v2073 = vpop.f32.mrb[0].mxu0
        %v2074 = vadd.f32 %v1622, %v2073
        %v2075 = vpop.f32.mrb[0].mxu0
        %v2076 = vadd.f32 %v1626, %v2075
        %v2077 = vpop.f32.mrb[0].mxu0
        %v2078 = vadd.f32 %v1622, %v2077
        %v2079 = vpop.f32.mrb[0].mxu0
        %v2080 = vadd.f32 %v1626, %v2079
        %2081 = vmatprep.mubr.bf16.mxu0 %v1540
        %2082 = vmatmul.mubr.bf16.gmra.mrb[0].mxu0 %v1539
        %v2083 = vpop.f32.mrb[0].mxu0
        %v2084 = vadd.f32 %v1622, %v2083
        %v2085 = vpop.f32.mrb[0].mxu0
        %v2086 = vadd.f32 %v1626, %v2085
        %v2087 = vpop.f32.mrb[0].mxu0
        %v2088 = vadd.f32 %v1622, %v2087
        %v2089 = vpop.f32.mrb[0].mxu0
        %v2090 = vadd.f32 %v1626, %v2089
        %2091 = vmatprep.mubr.bf16.mxu0 %v1542
        %2092 = vmatmul.mubr.bf16.gmra.mrb[0].mxu0 %v1541
        %v2093 = vpop.f32.mrb[0].mxu0
        %v2094 = vadd.f32 %v1622, %v2093
        %v2095 = vpop.f32.mrb[0].mxu0
        %v2096 = vadd.f32 %v1626, %v2095
        %v2097 = vpop.f32.mrb[0].mxu0
        %v2098 = vadd.f32 %v1622, %v2097
        %v2099 = vpop.f32.mrb[0].mxu0
        %v2100 = vadd.f32 %v1626, %v2099
        %2101 = vmatprep.mubr.bf16.mxu0 %v1544
        %2102 = vmatmul.mubr.bf16.gmra.mrb[0].mxu0 %v1543
        %v2103 = vpop.f32.mrb[0].mxu0
        %v2104 = vadd.f32 %v1622, %v2103
        %v2105 = vpop.f32.mrb[0].mxu0
        %v2106 = vadd.f32 %v1626, %v2105
        %v2107 = vpop.f32.mrb[0].mxu0
        %v2108 = vadd.f32 %v1622, %v2107
        %v2109 = vpop.f32.mrb[0].mxu0
        %v2110 = vadd.f32 %v1626, %v2109
        %2111 = vmatprep.mubr.bf16.mxu0 %v1546
        %2112 = vmatmul.mubr.bf16.gmra.mrb[0].mxu0 %v1545
        %v2113 = vpop.f32.mrb[0].mxu0
        %v2114 = vadd.f32 %v1622, %v2113
        %v2115 = vpop.f32.mrb[0].mxu0
        %v2116 = vadd.f32 %v1626, %v2115
        %v2117 = vpop.f32.mrb[0].mxu0
        %v2118 = vadd.f32 %v1622, %v2117
        %v2119 = vpop.f32.mrb[0].mxu0
        %v2120 = vadd.f32 %v1626, %v2119
        %2121 = vmatprep.mubr.bf16.mxu0 %v1548
        %2122 = vmatmul.mubr.bf16.gmra.mrb[0].mxu0 %v1547
        %v2123 = vpop.f32.mrb[0].mxu0
        %v2124 = vadd.f32 %v1622, %v2123
        %v2125 = vpop.f32.mrb[0].mxu0
        %v2126 = vadd.f32 %v1626, %v2125
        %v2127 = vpop.f32.mrb[0].mxu0
        %v2128 = vadd.f32 %v1622, %v2127
        %v2129 = vpop.f32.mrb[0].mxu0
        %v2130 = vadd.f32 %v1626, %v2129
        %2131 = vmatprep.mubr.bf16.mxu0 %v1550
        %2132 = vmatmul.mubr.bf16.gmra.mrb[0].mxu0 %v1549
        %v2133 = vpop.f32.mrb[0].mxu0
        %v2134 = vadd.f32 %v1622, %v2133
        %v2135 = vpop.f32.mrb[0].mxu0
        %v2136 = vadd.f32 %v1626, %v2135
        %v2137 = vpop.f32.mrb[0].mxu0
        %v2138 = vadd.f32 %v1622, %v2137
        %v2139 = vpop.f32.mrb[0].mxu0
        %v2140 = vadd.f32 %v1626, %v2139
        %2141 = vmatprep.mubr.bf16.mxu0 %v1552
        %2142 = vmatmul.mubr.bf16.gmra.mrb[0].mxu0 %v1551
        %v2143 = vpop.f32.mrb[0].mxu0
        %v2144 = vadd.f32 %v1622, %v2143
        %v2145 = vpop.f32.mrb[0].mxu0
        %v2146 = vadd.f32 %v1626, %v2145
        %v2147 = vpop.f32.mrb[0].mxu0
        %v2148 = vadd.f32 %v1622, %v2147
        %v2149 = vpop.f32.mrb[0].mxu0
        %v2150 = vadd.f32 %v1626, %v2149
        %2151 = vdwg.mxu0
        %2152 = vmatprep.subr.bf16.mxu0 %v1834
        %2153 = vmatpush1.bf16.msra.mxu0 %v1833
        %2154 = vmatprep.subr.bf16.mxu0 %v1838
        %2155 = vmatpush1.bf16.msra.mxu0 %v1837
        %2156 = vmatprep.subr.bf16.mxu0 %v1842
        %2157 = vmatpush1.bf16.msra.mxu0 %v1841
        %2158 = vmatprep.subr.bf16.mxu0 %v1846
        %2159 = vmatpush1.bf16.msra.mxu0 %v1845
        %2160 = vmatprep.subr.bf16.mxu0 %v1850
        %2161 = vmatpush1.bf16.msra.mxu0 %v1849
        %2162 = vmatprep.subr.bf16.mxu0 %v1854
        %2163 = vmatpush1.bf16.msra.mxu0 %v1853
        %2164 = vmatprep.subr.bf16.mxu0 %v1858
        %2165 = vmatpush1.bf16.msra.mxu0 %v1857
        %2166 = vmatprep.subr.bf16.mxu0 %v1862
        %2167 = vmatpush1.bf16.msra.mxu0 %v1861
        %2168 = vmatprep.subr.bf16.mxu0 %v1866
        %2169 = vmatpush1.bf16.msra.mxu0 %v1865
        %2170 = vmatprep.subr.bf16.mxu0 %v1870
        %2171 = vmatpush1.bf16.msra.mxu0 %v1869
        %2172 = vmatprep.subr.bf16.mxu0 %v1874
        %2173 = vmatpush1.bf16.msra.mxu0 %v1873
        %2174 = vmatprep.subr.bf16.mxu0 %v1878
        %2175 = vmatpush1.bf16.msra.mxu0 %v1877
        %2176 = vmatprep.subr.bf16.mxu0 %v1882
        %2177 = vmatpush1.bf16.msra.mxu0 %v1881
        %2178 = vmatprep.subr.bf16.mxu0 %v1886
        %2179 = vmatpush1.bf16.msra.mxu0 %v1885
        %2180 = vmatprep.subr.bf16.mxu0 %v1890
        %2181 = vmatpush1.bf16.msra.mxu0 %v1889
        %2182 = vmatprep.subr.bf16.mxu0 %v1894
        %2183 = vmatpush1.bf16.msra.mxu0 %v1893
        %2184 = vmatprep.mubr.bf16.mxu0 %v1522
        %2185 = vmatmul.mubr.bf16.gmra.mrb[0].mxu0 %v1521
        %v2186 = vpop.f32.mrb[0].mxu0
        %v2187 = vadd.f32 %v1630, %v2186
        %v2188 = vpop.f32.mrb[0].mxu0
        %v2189 = vadd.f32 %v1634, %v2188
        %v2190 = vpop.f32.mrb[0].mxu0
        %v2191 = vadd.f32 %v1630, %v2190
        %v2192 = vpop.f32.mrb[0].mxu0
        %v2193 = vadd.f32 %v1634, %v2192
        %2194 = vmatprep.mubr.bf16.mxu0 %v1524
        %2195 = vmatmul.mubr.bf16.gmra.mrb[0].mxu0 %v1523
        %v2196 = vpop.f32.mrb[0].mxu0
        %v2197 = vadd.f32 %v1630, %v2196
        %v2198 = vpop.f32.mrb[0].mxu0
        %v2199 = vadd.f32 %v1634, %v2198
        %v2200 = vpop.f32.mrb[0].mxu0
        %v2201 = vadd.f32 %v1630, %v2200
        %v2202 = vpop.f32.mrb[0].mxu0
        %v2203 = vadd.f32 %v1634, %v2202
        %2204 = vmatprep.mubr.bf16.mxu0 %v1526
        %2205 = vmatmul.mubr.bf16.gmra.mrb[0].mxu0 %v1525
        %v2206 = vpop.f32.mrb[0].mxu0
        %v2207 = vadd.f32 %v1630, %v2206
        %v2208 = vpop.f32.mrb[0].mxu0
        %v2209 = vadd.f32 %v1634, %v2208
        %v2210 = vpop.f32.mrb[0].mxu0
        %v2211 = vadd.f32 %v1630, %v2210
        %v2212 = vpop.f32.mrb[0].mxu0
        %v2213 = vadd.f32 %v1634, %v2212
        %2214 = vmatprep.mubr.bf16.mxu0 %v1528
        %2215 = vmatmul.mubr.bf16.gmra.mrb[0].mxu0 %v1527
        %v2216 = vpop.f32.mrb[0].mxu0
        %v2217 = vadd.f32 %v1630, %v2216
        %v2218 = vpop.f32.mrb[0].mxu0
        %v2219 = vadd.f32 %v1634, %v2218
        %v2220 = vpop.f32.mrb[0].mxu0
        %v2221 = vadd.f32 %v1630, %v2220
        %v2222 = vpop.f32.mrb[0].mxu0
        %v2223 = vadd.f32 %v1634, %v2222
        %2224 = vmatprep.mubr.bf16.mxu0 %v1530
        %2225 = vmatmul.mubr.bf16.gmra.mrb[0].mxu0 %v1529
        %v2226 = vpop.f32.mrb[0].mxu0
        %v2227 = vadd.f32 %v1630, %v2226
        %v2228 = vpop.f32.mrb[0].mxu0
        %v2229 = vadd.f32 %v1634, %v2228
        %v2230 = vpop.f32.mrb[0].mxu0
        %v2231 = vadd.f32 %v1630, %v2230
        %v2232 = vpop.f32.mrb[0].mxu0
        %v2233 = vadd.f32 %v1634, %v2232
        %2234 = vmatprep.mubr.bf16.mxu0 %v1532
        %2235 = vmatmul.mubr.bf16.gmra.mrb[0].mxu0 %v1531
        %v2236 = vpop.f32.mrb[0].mxu0
        %v2237 = vadd.f32 %v1630, %v2236
        %v2238 = vpop.f32.mrb[0].mxu0
        %v2239 = vadd.f32 %v1634, %v2238
        %v2240 = vpop.f32.mrb[0].mxu0
        %v2241 = vadd.f32 %v1630, %v2240
        %v2242 = vpop.f32.mrb[0].mxu0
        %v2243 = vadd.f32 %v1634, %v2242
        %2244 = vmatprep.mubr.bf16.mxu0 %v1534
        %2245 = vmatmul.mubr.bf16.gmra.mrb[0].mxu0 %v1533
        %v2246 = vpop.f32.mrb[0].mxu0
        %v2247 = vadd.f32 %v1630, %v2246
        %v2248 = vpop.f32.mrb[0].mxu0
        %v2249 = vadd.f32 %v1634, %v2248
        %v2250 = vpop.f32.mrb[0].mxu0
        %v2251 = vadd.f32 %v1630, %v2250
        %v2252 = vpop.f32.mrb[0].mxu0
        %v2253 = vadd.f32 %v1634, %v2252
        %2254 = vmatprep.mubr.bf16.mxu0 %v1536
        %2255 = vmatmul.mubr.bf16.gmra.mrb[0].mxu0 %v1535
        %v2256 = vpop.f32.mrb[0].mxu0
        %v2257 = vadd.f32 %v1630, %v2256
        %v2258 = vpop.f32.mrb[0].mxu0
        %v2259 = vadd.f32 %v1634, %v2258
        %v2260 = vpop.f32.mrb[0].mxu0
        %v2261 = vadd.f32 %v1630, %v2260
        %v2262 = vpop.f32.mrb[0].mxu0
        %v2263 = vadd.f32 %v1634, %v2262
        %2264 = vmatprep.mubr.bf16.mxu0 %v1538
        %2265 = vmatmul.mubr.bf16.gmra.mrb[0].mxu0 %v1537
        %v2266 = vpop.f32.mrb[0].mxu0
        %v2267 = vadd.f32 %v1630, %v2266
        %v2268 = vpop.f32.mrb[0].mxu0
        %v2269 = vadd.f32 %v1634, %v2268
        %v2270 = vpop.f32.mrb[0].mxu0
        %v2271 = vadd.f32 %v1630, %v2270
        %v2272 = vpop.f32.mrb[0].mxu0
        %v2273 = vadd.f32 %v1634, %v2272
        %2274 = vmatprep.mubr.bf16.mxu0 %v1540
        %2275 = vmatmul.mubr.bf16.gmra.mrb[0].mxu0 %v1539
        %v2276 = vpop.f32.mrb[0].mxu0
        %v2277 = vadd.f32 %v1630, %v2276
        %v2278 = vpop.f32.mrb[0].mxu0
        %v2279 = vadd.f32 %v1634, %v2278
        %v2280 = vpop.f32.mrb[0].mxu0
        %v2281 = vadd.f32 %v1630, %v2280
        %v2282 = vpop.f32.mrb[0].mxu0
        %v2283 = vadd.f32 %v1634, %v2282
        %2284 = vmatprep.mubr.bf16.mxu0 %v1542
        %2285 = vmatmul.mubr.bf16.gmra.mrb[0].mxu0 %v1541
        %v2286 = vpop.f32.mrb[0].mxu0
        %v2287 = vadd.f32 %v1630, %v2286
        %v2288 = vpop.f32.mrb[0].mxu0
        %v2289 = vadd.f32 %v1634, %v2288
        %v2290 = vpop.f32.mrb[0].mxu0
        %v2291 = vadd.f32 %v1630, %v2290
        %v2292 = vpop.f32.mrb[0].mxu0
        %v2293 = vadd.f32 %v1634, %v2292
        %2294 = vmatprep.mubr.bf16.mxu0 %v1544
        %2295 = vmatmul.mubr.bf16.gmra.mrb[0].mxu0 %v1543
        %v2296 = vpop.f32.mrb[0].mxu0
        %v2297 = vadd.f32 %v1630, %v2296
        %v2298 = vpop.f32.mrb[0].mxu0
        %v2299 = vadd.f32 %v1634, %v2298
        %v2300 = vpop.f32.mrb[0].mxu0
        %v2301 = vadd.f32 %v1630, %v2300
        %v2302 = vpop.f32.mrb[0].mxu0
        %v2303 = vadd.f32 %v1634, %v2302
        %2304 = vmatprep.mubr.bf16.mxu0 %v1546
        %2305 = vmatmul.mubr.bf16.gmra.mrb[0].mxu0 %v1545
        %v2306 = vpop.f32.mrb[0].mxu0
        %v2307 = vadd.f32 %v1630, %v2306
        %v2308 = vpop.f32.mrb[0].mxu0
        %v2309 = vadd.f32 %v1634, %v2308
        %v2310 = vpop.f32.mrb[0].mxu0
        %v2311 = vadd.f32 %v1630, %v2310
        %v2312 = vpop.f32.mrb[0].mxu0
        %v2313 = vadd.f32 %v1634, %v2312
        %2314 = vmatprep.mubr.bf16.mxu0 %v1548
        %2315 = vmatmul.mubr.bf16.gmra.mrb[0].mxu0 %v1547
        %v2316 = vpop.f32.mrb[0].mxu0
        %v2317 = vadd.f32 %v1630, %v2316
        %v2318 = vpop.f32.mrb[0].mxu0
        %v2319 = vadd.f32 %v1634, %v2318
        %v2320 = vpop.f32.mrb[0].mxu0
        %v2321 = vadd.f32 %v1630, %v2320
        %v2322 = vpop.f32.mrb[0].mxu0
        %v2323 = vadd.f32 %v1634, %v2322
        %2324 = vmatprep.mubr.bf16.mxu0 %v1550
        %2325 = vmatmul.mubr.bf16.gmra.mrb[0].mxu0 %v1549
        %v2326 = vpop.f32.mrb[0].mxu0
        %v2327 = vadd.f32 %v1630, %v2326
        %v2328 = vpop.f32.mrb[0].mxu0
        %v2329 = vadd.f32 %v1634, %v2328
        %v2330 = vpop.f32.mrb[0].mxu0
        %v2331 = vadd.f32 %v1630, %v2330
        %v2332 = vpop.f32.mrb[0].mxu0
        %v2333 = vadd.f32 %v1634, %v2332
        %2334 = vmatprep.mubr.bf16.mxu0 %v1552
        %2335 = vmatmul.mubr.bf16.gmra.mrb[0].mxu0 %v1551
        %v2336 = vpop.f32.mrb[0].mxu0
        %v2337 = vadd.f32 %v1630, %v2336
        %v2338 = vpop.f32.mrb[0].mxu0
        %v2339 = vadd.f32 %v1634, %v2338
        %v2340 = vpop.f32.mrb[0].mxu0
        %v2341 = vadd.f32 %v1630, %v2340
        %v2342 = vpop.f32.mrb[0].mxu0
        %v2343 = vadd.f32 %v1634, %v2342
        %2344 = vdwg.mxu0
        %v2345 = vpack.c.bf16 %v1998, %v1994
        %v2346 = vpack.c.bf16 %v2000, %v1996
        %v2347 = vpack.c.bf16 %v2191, %v2187
        %v2348 = vpack.c.bf16 %v2193, %v2189
        %v2349 = vpack.c.bf16 %v2008, %v2004
        %v2350 = vpack.c.bf16 %v2010, %v2006
        %v2351 = vpack.c.bf16 %v2201, %v2197
        %v2352 = vpack.c.bf16 %v2203, %v2199
        %v2353 = vpack.c.bf16 %v2018, %v2014
        %v2354 = vpack.c.bf16 %v2020, %v2016
        %v2355 = vpack.c.bf16 %v2211, %v2207
        %v2356 = vpack.c.bf16 %v2213, %v2209
        %v2357 = vpack.c.bf16 %v2028, %v2024
        %v2358 = vpack.c.bf16 %v2030, %v2026
        %v2359 = vpack.c.bf16 %v2221, %v2217
        %v2360 = vpack.c.bf16 %v2223, %v2219
        %v2361 = vpack.c.bf16 %v2038, %v2034
        %v2362 = vpack.c.bf16 %v2040, %v2036
        %v2363 = vpack.c.bf16 %v2231, %v2227
        %v2364 = vpack.c.bf16 %v2233, %v2229
        %v2365 = vpack.c.bf16 %v2048, %v2044
        %v2366 = vpack.c.bf16 %v2050, %v2046
        %v2367 = vpack.c.bf16 %v2241, %v2237
        %v2368 = vpack.c.bf16 %v2243, %v2239
        %v2369 = vpack.c.bf16 %v2058, %v2054
        %v2370 = vpack.c.bf16 %v2060, %v2056
        %v2371 = vpack.c.bf16 %v2251, %v2247
        %v2372 = vpack.c.bf16 %v2253, %v2249
        %v2373 = vpack.c.bf16 %v2068, %v2064
        %v2374 = vpack.c.bf16 %v2070, %v2066
        %v2375 = vpack.c.bf16 %v2261, %v2257
        %v2376 = vpack.c.bf16 %v2263, %v2259
        %v2377 = vpack.c.bf16 %v2078, %v2074
        %v2378 = vpack.c.bf16 %v2080, %v2076
        %v2379 = vpack.c.bf16 %v2271, %v2267
        %v2380 = vpack.c.bf16 %v2273, %v2269
        %v2381 = vpack.c.bf16 %v2088, %v2084
        %v2382 = vpack.c.bf16 %v2090, %v2086
        %v2383 = vpack.c.bf16 %v2281, %v2277
        %v2384 = vpack.c.bf16 %v2283, %v2279
        %v2385 = vpack.c.bf16 %v2098, %v2094
        %v2386 = vpack.c.bf16 %v2100, %v2096
        %v2387 = vpack.c.bf16 %v2291, %v2287
        %v2388 = vpack.c.bf16 %v2293, %v2289
        %v2389 = vpack.c.bf16 %v2108, %v2104
        %v2390 = vpack.c.bf16 %v2110, %v2106
        %v2391 = vpack.c.bf16 %v2301, %v2297
        %v2392 = vpack.c.bf16 %v2303, %v2299
        %v2393 = vpack.c.bf16 %v2118, %v2114
        %v2394 = vpack.c.bf16 %v2120, %v2116
        %v2395 = vpack.c.bf16 %v2311, %v2307
        %v2396 = vpack.c.bf16 %v2313, %v2309
        %v2397 = vpack.c.bf16 %v2128, %v2124
        %v2398 = vpack.c.bf16 %v2130, %v2126
        %v2399 = vpack.c.bf16 %v2321, %v2317
        %v2400 = vpack.c.bf16 %v2323, %v2319
        %v2401 = vpack.c.bf16 %v2138, %v2134
        %v2402 = vpack.c.bf16 %v2140, %v2136
        %v2403 = vpack.c.bf16 %v2331, %v2327
        %v2404 = vpack.c.bf16 %v2333, %v2329
        %v2405 = vpack.c.bf16 %v2148, %v2144
        %v2406 = vpack.c.bf16 %v2150, %v2146
        %v2407 = vpack.c.bf16 %v2341, %v2337
        %v2408 = vpack.c.bf16 %v2343, %v2339
        %v2409 = vld [vmem:[#allocation2] sm:$0xff]
        %v2410 = vld [vmem:[#allocation2 + $0x8] sm:$0xff]
        %v2411 = vld [vmem:[#allocation2 + $0x10] sm:$0xff]
        %v2412 = vld [vmem:[#allocation2 + $0x18] sm:$0xff]
        %v2413 = vld [vmem:[#allocation2 + $0x20] sm:$0xff]
        %v2414 = vld [vmem:[#allocation2 + $0x28] sm:$0xff]
        %v2415 = vld [vmem:[#allocation2 + $0x30] sm:$0xff]
        %v2416 = vld [vmem:[#allocation2 + $0x38] sm:$0xff]
        %v2417 = vld [vmem:[#allocation2 + $0x40] sm:$0xff]
        %v2418 = vld [vmem:[#allocation2 + $0x48] sm:$0xff]
        %v2419 = vld [vmem:[#allocation2 + $0x50] sm:$0xff]
        %v2420 = vld [vmem:[#allocation2 + $0x58] sm:$0xff]
        %v2421 = vld [vmem:[#allocation2 + $0x60] sm:$0xff]
        %v2422 = vld [vmem:[#allocation2 + $0x68] sm:$0xff]
        %v2423 = vld [vmem:[#allocation2 + $0x70] sm:$0xff]
        %v2424 = vld [vmem:[#allocation2 + $0x78] sm:$0xff]
        %v2425 = vld [vmem:[#allocation2 + $0x80] sm:$0xff]
        %v2426 = vld [vmem:[#allocation2 + $0x88] sm:$0xff]
        %v2427 = vld [vmem:[#allocation2 + $0x90] sm:$0xff]
        %v2428 = vld [vmem:[#allocation2 + $0x98] sm:$0xff]
        %v2429 = vld [vmem:[#allocation2 + $0xa0] sm:$0xff]
        %v2430 = vld [vmem:[#allocation2 + $0xa8] sm:$0xff]
        %v2431 = vld [vmem:[#allocation2 + $0xb0] sm:$0xff]
        %v2432 = vld [vmem:[#allocation2 + $0xb8] sm:$0xff]
        %v2433 = vld [vmem:[#allocation2 + $0xc0] sm:$0xff]
        %v2434 = vld [vmem:[#allocation2 + $0xc8] sm:$0xff]
        %v2435 = vld [vmem:[#allocation2 + $0xd0] sm:$0xff]
        %v2436 = vld [vmem:[#allocation2 + $0xd8] sm:$0xff]
        %v2437 = vld [vmem:[#allocation2 + $0xe0] sm:$0xff]
        %v2438 = vld [vmem:[#allocation2 + $0xe8] sm:$0xff]
        %v2439 = vld [vmem:[#allocation2 + $0xf0] sm:$0xff]
        %v2440 = vld [vmem:[#allocation2 + $0xf8] sm:$0xff]
        %v2441 = vld [vmem:[#allocation2 + $0x100] sm:$0xff]
        %v2442 = vld [vmem:[#allocation2 + $0x108] sm:$0xff]
        %v2443 = vld [vmem:[#allocation2 + $0x110] sm:$0xff]
        %v2444 = vld [vmem:[#allocation2 + $0x118] sm:$0xff]
        %v2445 = vld [vmem:[#allocation2 + $0x120] sm:$0xff]
        %v2446 = vld [vmem:[#allocation2 + $0x128] sm:$0xff]
        %v2447 = vld [vmem:[#allocation2 + $0x130] sm:$0xff]
        %v2448 = vld [vmem:[#allocation2 + $0x138] sm:$0xff]
        %v2449 = vld [vmem:[#allocation2 + $0x140] sm:$0xff]
        %v2450 = vld [vmem:[#allocation2 + $0x148] sm:$0xff]
        %v2451 = vld [vmem:[#allocation2 + $0x150] sm:$0xff]
        %v2452 = vld [vmem:[#allocation2 + $0x158] sm:$0xff]
        %v2453 = vld [vmem:[#allocation2 + $0x160] sm:$0xff]
        %v2454 = vld [vmem:[#allocation2 + $0x168] sm:$0xff]
        %v2455 = vld [vmem:[#allocation2 + $0x170] sm:$0xff]
        %v2456 = vld [vmem:[#allocation2 + $0x178] sm:$0xff]
        %v2457 = vld [vmem:[#allocation2 + $0x180] sm:$0xff]
        %v2458 = vld [vmem:[#allocation2 + $0x188] sm:$0xff]
        %v2459 = vld [vmem:[#allocation2 + $0x190] sm:$0xff]
        %v2460 = vld [vmem:[#allocation2 + $0x198] sm:$0xff]
        %v2461 = vld [vmem:[#allocation2 + $0x1a0] sm:$0xff]
        %v2462 = vld [vmem:[#allocation2 + $0x1a8] sm:$0xff]
        %v2463 = vld [vmem:[#allocation2 + $0x1b0] sm:$0xff]
        %v2464 = vld [vmem:[#allocation2 + $0x1b8] sm:$0xff]
        %v2465 = vld [vmem:[#allocation2 + $0x1c0] sm:$0xff]
        %v2466 = vld [vmem:[#allocation2 + $0x1c8] sm:$0xff]
        %v2467 = vld [vmem:[#allocation2 + $0x1d0] sm:$0xff]
        %v2468 = vld [vmem:[#allocation2 + $0x1d8] sm:$0xff]
        %v2469 = vld [vmem:[#allocation2 + $0x1e0] sm:$0xff]
        %v2470 = vld [vmem:[#allocation2 + $0x1e8] sm:$0xff]
        %v2471 = vld [vmem:[#allocation2 + $0x1f0] sm:$0xff]
        %v2472 = vld [vmem:[#allocation2 + $0x1f8] sm:$0xff]
        %v2473 = vld [vmem:[#allocation5] sm:$0xff]
        %v2474 = vld [vmem:[#allocation5 + $0x8] sm:$0xff]
        %v2475 = vld [vmem:[#allocation5 + $0x10] sm:$0xff]
        %v2476 = vld [vmem:[#allocation5 + $0x18] sm:$0xff]
        %v2477 = vld [vmem:[#allocation5 + $0x20] sm:$0xff]
        %v2478 = vld [vmem:[#allocation5 + $0x28] sm:$0xff]
        %v2479 = vld [vmem:[#allocation5 + $0x30] sm:$0xff]
        %v2480 = vld [vmem:[#allocation5 + $0x38] sm:$0xff]
        %v2481 = vld [vmem:[#allocation5 + $0x40] sm:$0xff]
        %v2482 = vld [vmem:[#allocation5 + $0x48] sm:$0xff]
        %v2483 = vld [vmem:[#allocation5 + $0x50] sm:$0xff]
        %v2484 = vld [vmem:[#allocation5 + $0x58] sm:$0xff]
        %v2485 = vld [vmem:[#allocation5 + $0x60] sm:$0xff]
        %v2486 = vld [vmem:[#allocation5 + $0x68] sm:$0xff]
        %v2487 = vld [vmem:[#allocation5 + $0x70] sm:$0xff]
        %v2488 = vld [vmem:[#allocation5 + $0x78] sm:$0xff]
        %v2489 = vld [vmem:[#allocation5 + $0x80] sm:$0xff]
        %v2490 = vld [vmem:[#allocation5 + $0x88] sm:$0xff]
        %v2491 = vld [vmem:[#allocation5 + $0x90] sm:$0xff]
        %v2492 = vld [vmem:[#allocation5 + $0x98] sm:$0xff]
        %v2493 = vld [vmem:[#allocation5 + $0xa0] sm:$0xff]
        %v2494 = vld [vmem:[#allocation5 + $0xa8] sm:$0xff]
        %v2495 = vld [vmem:[#allocation5 + $0xb0] sm:$0xff]
        %v2496 = vld [vmem:[#allocation5 + $0xb8] sm:$0xff]
        %v2497 = vld [vmem:[#allocation5 + $0xc0] sm:$0xff]
        %v2498 = vld [vmem:[#allocation5 + $0xc8] sm:$0xff]
        %v2499 = vld [vmem:[#allocation5 + $0xd0] sm:$0xff]
        %v2500 = vld [vmem:[#allocation5 + $0xd8] sm:$0xff]
        %v2501 = vld [vmem:[#allocation5 + $0xe0] sm:$0xff]
        %v2502 = vld [vmem:[#allocation5 + $0xe8] sm:$0xff]
        %v2503 = vld [vmem:[#allocation5 + $0xf0] sm:$0xff]
        %v2504 = vld [vmem:[#allocation5 + $0xf8] sm:$0xff]
        %v2505 = vld [vmem:[#allocation7] sm:$0xff]
        %v2506 = vld [vmem:[#allocation7 + $0x8] sm:$0xff]
        %v2507 = vld [vmem:[#allocation7 + $0x10] sm:$0xff]
        %v2508 = vld [vmem:[#allocation7 + $0x18] sm:$0xff]
        %v2509 = vld [vmem:[#allocation7 + $0x20] sm:$0xff]
        %v2510 = vld [vmem:[#allocation7 + $0x28] sm:$0xff]
        %v2511 = vld [vmem:[#allocation7 + $0x30] sm:$0xff]
        %v2512 = vld [vmem:[#allocation7 + $0x38] sm:$0xff]
        %v2513 = vld [vmem:[#allocation7 + $0x40] sm:$0xff]
        %v2514 = vld [vmem:[#allocation7 + $0x48] sm:$0xff]
        %v2515 = vld [vmem:[#allocation7 + $0x50] sm:$0xff]
        %v2516 = vld [vmem:[#allocation7 + $0x58] sm:$0xff]
        %v2517 = vld [vmem:[#allocation7 + $0x60] sm:$0xff]
        %v2518 = vld [vmem:[#allocation7 + $0x68] sm:$0xff]
        %v2519 = vld [vmem:[#allocation7 + $0x70] sm:$0xff]
        %v2520 = vld [vmem:[#allocation7 + $0x78] sm:$0xff]
        %v2521 = vld [vmem:[#allocation7 + $0x80] sm:$0xff]
        %v2522 = vld [vmem:[#allocation7 + $0x88] sm:$0xff]
        %v2523 = vld [vmem:[#allocation7 + $0x90] sm:$0xff]
        %v2524 = vld [vmem:[#allocation7 + $0x98] sm:$0xff]
        %v2525 = vld [vmem:[#allocation7 + $0xa0] sm:$0xff]
        %v2526 = vld [vmem:[#allocation7 + $0xa8] sm:$0xff]
        %v2527 = vld [vmem:[#allocation7 + $0xb0] sm:$0xff]
        %v2528 = vld [vmem:[#allocation7 + $0xb8] sm:$0xff]
        %v2529 = vld [vmem:[#allocation7 + $0xc0] sm:$0xff]
        %v2530 = vld [vmem:[#allocation7 + $0xc8] sm:$0xff]
        %v2531 = vld [vmem:[#allocation7 + $0xd0] sm:$0xff]
        %v2532 = vld [vmem:[#allocation7 + $0xd8] sm:$0xff]
        %v2533 = vld [vmem:[#allocation7 + $0xe0] sm:$0xff]
        %v2534 = vld [vmem:[#allocation7 + $0xe8] sm:$0xff]
        %v2535 = vld [vmem:[#allocation7 + $0xf0] sm:$0xff]
        %v2536 = vld [vmem:[#allocation7 + $0xf8] sm:$0xff]
        %v2569 = vunpack.c.l.b16 %v2505
        %v2570 = vunpack.c.h.b16 %v2505
        %v2571 = vunpack.c.l.b16 %v2506
        %v2572 = vunpack.c.h.b16 %v2506
        %v2573 = vunpack.c.l.b16 %v2507
        %v2574 = vunpack.c.h.b16 %v2507
        %v2575 = vunpack.c.l.b16 %v2508
        %v2576 = vunpack.c.h.b16 %v2508
        %v2577 = vunpack.c.l.b16 %v2509
        %v2578 = vunpack.c.h.b16 %v2509
        %v2579 = vunpack.c.l.b16 %v2510
        %v2580 = vunpack.c.h.b16 %v2510
        %v2581 = vunpack.c.l.b16 %v2511
        %v2582 = vunpack.c.h.b16 %v2511
        %v2583 = vunpack.c.l.b16 %v2512
        %v2584 = vunpack.c.h.b16 %v2512
        %v2585 = vunpack.c.l.b16 %v2513
        %v2586 = vunpack.c.h.b16 %v2513
        %v2587 = vunpack.c.l.b16 %v2514
        %v2588 = vunpack.c.h.b16 %v2514
        %v2589 = vunpack.c.l.b16 %v2515
        %v2590 = vunpack.c.h.b16 %v2515
        %v2591 = vunpack.c.l.b16 %v2516
        %v2592 = vunpack.c.h.b16 %v2516
        %v2593 = vunpack.c.l.b16 %v2517
        %v2594 = vunpack.c.h.b16 %v2517
        %v2595 = vunpack.c.l.b16 %v2518
        %v2596 = vunpack.c.h.b16 %v2518
        %v2597 = vunpack.c.l.b16 %v2519
        %v2598 = vunpack.c.h.b16 %v2519
        %v2599 = vunpack.c.l.b16 %v2520
        %v2600 = vunpack.c.h.b16 %v2520
        %v2601 = vunpack.c.l.b16 %v2521
        %v2602 = vunpack.c.h.b16 %v2521
        %v2603 = vunpack.c.l.b16 %v2522
        %v2604 = vunpack.c.h.b16 %v2522
        %v2605 = vunpack.c.l.b16 %v2523
        %v2606 = vunpack.c.h.b16 %v2523
        %v2607 = vunpack.c.l.b16 %v2524
        %v2608 = vunpack.c.h.b16 %v2524
        %v2609 = vunpack.c.l.b16 %v2525
        %v2610 = vunpack.c.h.b16 %v2525
        %v2611 = vunpack.c.l.b16 %v2526
        %v2612 = vunpack.c.h.b16 %v2526
        %v2613 = vunpack.c.l.b16 %v2527
        %v2614 = vunpack.c.h.b16 %v2527
        %v2615 = vunpack.c.l.b16 %v2528
        %v2616 = vunpack.c.h.b16 %v2528
        %v2617 = vunpack.c.l.b16 %v2529
        %v2618 = vunpack.c.h.b16 %v2529
        %v2619 = vunpack.c.l.b16 %v2530
        %v2620 = vunpack.c.h.b16 %v2530
        %v2621 = vunpack.c.l.b16 %v2531
        %v2622 = vunpack.c.h.b16 %v2531
        %v2623 = vunpack.c.l.b16 %v2532
        %v2624 = vunpack.c.h.b16 %v2532
        %v2625 = vunpack.c.l.b16 %v2533
        %v2626 = vunpack.c.h.b16 %v2533
        %v2627 = vunpack.c.l.b16 %v2534
        %v2628 = vunpack.c.h.b16 %v2534
        %v2629 = vunpack.c.l.b16 %v2535
        %v2630 = vunpack.c.h.b16 %v2535
        %v2631 = vunpack.c.l.b16 %v2536
        %v2632 = vunpack.c.h.b16 %v2536
        %v2633 = vpack.c.b16 %v2571, %v2569
        %v2634 = vpack.c.b16 %v2572, %v2570
        %v2635 = vpack.c.b16 %v2575, %v2573
        %v2636 = vpack.c.b16 %v2576, %v2574
        %v2637 = vpack.c.b16 %v2579, %v2577
        %v2638 = vpack.c.b16 %v2580, %v2578
        %v2639 = vpack.c.b16 %v2583, %v2581
        %v2640 = vpack.c.b16 %v2584, %v2582
        %v2641 = vpack.c.b16 %v2587, %v2585
        %v2642 = vpack.c.b16 %v2588, %v2586
        %v2643 = vpack.c.b16 %v2591, %v2589
        %v2644 = vpack.c.b16 %v2592, %v2590
        %v2645 = vpack.c.b16 %v2595, %v2593
        %v2646 = vpack.c.b16 %v2596, %v2594
        %v2647 = vpack.c.b16 %v2599, %v2597
        %v2648 = vpack.c.b16 %v2600, %v2598
        %v2649 = vpack.c.b16 %v2603, %v2601
        %v2650 = vpack.c.b16 %v2604, %v2602
        %v2651 = vpack.c.b16 %v2607, %v2605
        %v2652 = vpack.c.b16 %v2608, %v2606
        %v2653 = vpack.c.b16 %v2611, %v2609
        %v2654 = vpack.c.b16 %v2612, %v2610
        %v2655 = vpack.c.b16 %v2615, %v2613
        %v2656 = vpack.c.b16 %v2616, %v2614
        %v2657 = vpack.c.b16 %v2619, %v2617
        %v2658 = vpack.c.b16 %v2620, %v2618
        %v2659 = vpack.c.b16 %v2623, %v2621
        %v2660 = vpack.c.b16 %v2624, %v2622
        %v2661 = vpack.c.b16 %v2627, %v2625
        %v2662 = vpack.c.b16 %v2628, %v2626
        %v2663 = vpack.c.b16 %v2631, %v2629
        %v2664 = vpack.c.b16 %v2632, %v2630
        %2697 = vmatprep.subr.bf16.mxu0 %v2348
        %2698 = vmatpush1.bf16.msra.mxu0 %v2347
        %2699 = vmatprep.subr.bf16.mxu0 %v2352
        %2700 = vmatpush1.bf16.msra.mxu0 %v2351
        %2701 = vmatprep.subr.bf16.mxu0 %v2356
        %2702 = vmatpush1.bf16.msra.mxu0 %v2355
        %2703 = vmatprep.subr.bf16.mxu0 %v2360
        %2704 = vmatpush1.bf16.msra.mxu0 %v2359
        %2705 = vmatprep.subr.bf16.mxu0 %v2364
        %2706 = vmatpush1.bf16.msra.mxu0 %v2363
        %2707 = vmatprep.subr.bf16.mxu0 %v2368
        %2708 = vmatpush1.bf16.msra.mxu0 %v2367
        %2709 = vmatprep.subr.bf16.mxu0 %v2372
        %2710 = vmatpush1.bf16.msra.mxu0 %v2371
        %2711 = vmatprep.subr.bf16.mxu0 %v2376
        %2712 = vmatpush1.bf16.msra.mxu0 %v2375
        %2713 = vmatprep.subr.bf16.mxu0 %v2380
        %2714 = vmatpush1.bf16.msra.mxu0 %v2379
        %2715 = vmatprep.subr.bf16.mxu0 %v2384
        %2716 = vmatpush1.bf16.msra.mxu0 %v2383
        %2717 = vmatprep.subr.bf16.mxu0 %v2388
        %2718 = vmatpush1.bf16.msra.mxu0 %v2387
        %2719 = vmatprep.subr.bf16.mxu0 %v2392
        %2720 = vmatpush1.bf16.msra.mxu0 %v2391
        %2721 = vmatprep.subr.bf16.mxu0 %v2396
        %2722 = vmatpush1.bf16.msra.mxu0 %v2395
        %2723 = vmatprep.subr.bf16.mxu0 %v2400
        %2724 = vmatpush1.bf16.msra.mxu0 %v2399
        %2725 = vmatprep.subr.bf16.mxu0 %v2404
        %2726 = vmatpush1.bf16.msra.mxu0 %v2403
        %2727 = vmatprep.subr.bf16.mxu0 %v2408
        %2728 = vmatpush1.bf16.msra.mxu0 %v2407
        %2729 = vmatprep.mubr.bf16.mxu0 %v2634
        %2730 = vmatmul.mubr.bf16.gmra.mrb[0].mxu0 %v2633
        %v2731 = vpop.f32.mrb[0].mxu0
        %v2732 = vadd.f32 0.0, %v2731
        %v2733 = vpop.f32.mrb[0].mxu0
        %v2734 = vadd.f32 0.0, %v2733
        %v2735 = vpop.f32.mrb[0].mxu0
        %v2736 = vadd.f32 0.0, %v2735
        %v2737 = vpop.f32.mrb[0].mxu0
        %v2738 = vadd.f32 0.0, %v2737
        %2739 = vmatprep.mubr.bf16.mxu0 %v2636
        %2740 = vmatmul.mubr.bf16.gmra.mrb[0].mxu0 %v2635
        %v2741 = vpop.f32.mrb[0].mxu0
        %v2742 = vadd.f32 0.0, %v2741
        %v2743 = vpop.f32.mrb[0].mxu0
        %v2744 = vadd.f32 0.0, %v2743
        %v2745 = vpop.f32.mrb[0].mxu0
        %v2746 = vadd.f32 0.0, %v2745
        %v2747 = vpop.f32.mrb[0].mxu0
        %v2748 = vadd.f32 0.0, %v2747
        %2749 = vmatprep.mubr.bf16.mxu0 %v2638
        %2750 = vmatmul.mubr.bf16.gmra.mrb[0].mxu0 %v2637
        %v2751 = vpop.f32.mrb[0].mxu0
        %v2752 = vadd.f32 0.0, %v2751
        %v2753 = vpop.f32.mrb[0].mxu0
        %v2754 = vadd.f32 0.0, %v2753
        %v2755 = vpop.f32.mrb[0].mxu0
        %v2756 = vadd.f32 0.0, %v2755
        %v2757 = vpop.f32.mrb[0].mxu0
        %v2758 = vadd.f32 0.0, %v2757
        %2759 = vmatprep.mubr.bf16.mxu0 %v2640
        %2760 = vmatmul.mubr.bf16.gmra.mrb[0].mxu0 %v2639
        %v2761 = vpop.f32.mrb[0].mxu0
        %v2762 = vadd.f32 0.0, %v2761
        %v2763 = vpop.f32.mrb[0].mxu0
        %v2764 = vadd.f32 0.0, %v2763
        %v2765 = vpop.f32.mrb[0].mxu0
        %v2766 = vadd.f32 0.0, %v2765
        %v2767 = vpop.f32.mrb[0].mxu0
        %v2768 = vadd.f32 0.0, %v2767
        %2769 = vmatprep.mubr.bf16.mxu0 %v2642
        %2770 = vmatmul.mubr.bf16.gmra.mrb[0].mxu0 %v2641
        %v2771 = vpop.f32.mrb[0].mxu0
        %v2772 = vadd.f32 0.0, %v2771
        %v2773 = vpop.f32.mrb[0].mxu0
        %v2774 = vadd.f32 0.0, %v2773
        %v2775 = vpop.f32.mrb[0].mxu0
        %v2776 = vadd.f32 0.0, %v2775
        %v2777 = vpop.f32.mrb[0].mxu0
        %v2778 = vadd.f32 0.0, %v2777
        %2779 = vmatprep.mubr.bf16.mxu0 %v2644
        %2780 = vmatmul.mubr.bf16.gmra.mrb[0].mxu0 %v2643
        %v2781 = vpop.f32.mrb[0].mxu0
        %v2782 = vadd.f32 0.0, %v2781
        %v2783 = vpop.f32.mrb[0].mxu0
        %v2784 = vadd.f32 0.0, %v2783
        %v2785 = vpop.f32.mrb[0].mxu0
        %v2786 = vadd.f32 0.0, %v2785
        %v2787 = vpop.f32.mrb[0].mxu0
        %v2788 = vadd.f32 0.0, %v2787
        %2789 = vmatprep.mubr.bf16.mxu0 %v2646
        %2790 = vmatmul.mubr.bf16.gmra.mrb[0].mxu0 %v2645
        %v2791 = vpop.f32.mrb[0].mxu0
        %v2792 = vadd.f32 0.0, %v2791
        %v2793 = vpop.f32.mrb[0].mxu0
        %v2794 = vadd.f32 0.0, %v2793
        %v2795 = vpop.f32.mrb[0].mxu0
        %v2796 = vadd.f32 0.0, %v2795
        %v2797 = vpop.f32.mrb[0].mxu0
        %v2798 = vadd.f32 0.0, %v2797
        %2799 = vmatprep.mubr.bf16.mxu0 %v2648
        %2800 = vmatmul.mubr.bf16.gmra.mrb[0].mxu0 %v2647
        %v2801 = vpop.f32.mrb[0].mxu0
        %v2802 = vadd.f32 0.0, %v2801
        %v2803 = vpop.f32.mrb[0].mxu0
        %v2804 = vadd.f32 0.0, %v2803
        %v2805 = vpop.f32.mrb[0].mxu0
        %v2806 = vadd.f32 0.0, %v2805
        %v2807 = vpop.f32.mrb[0].mxu0
        %v2808 = vadd.f32 0.0, %v2807
        %2809 = vmatprep.mubr.bf16.mxu0 %v2650
        %2810 = vmatmul.mubr.bf16.gmra.mrb[0].mxu0 %v2649
        %v2811 = vpop.f32.mrb[0].mxu0
        %v2812 = vadd.f32 0.0, %v2811
        %v2813 = vpop.f32.mrb[0].mxu0
        %v2814 = vadd.f32 0.0, %v2813
        %v2815 = vpop.f32.mrb[0].mxu0
        %v2816 = vadd.f32 0.0, %v2815
        %v2817 = vpop.f32.mrb[0].mxu0
        %v2818 = vadd.f32 0.0, %v2817
        %2819 = vmatprep.mubr.bf16.mxu0 %v2652
        %2820 = vmatmul.mubr.bf16.gmra.mrb[0].mxu0 %v2651
        %v2821 = vpop.f32.mrb[0].mxu0
        %v2822 = vadd.f32 0.0, %v2821
        %v2823 = vpop.f32.mrb[0].mxu0
        %v2824 = vadd.f32 0.0, %v2823
        %v2825 = vpop.f32.mrb[0].mxu0
        %v2826 = vadd.f32 0.0, %v2825
        %v2827 = vpop.f32.mrb[0].mxu0
        %v2828 = vadd.f32 0.0, %v2827
        %2829 = vmatprep.mubr.bf16.mxu0 %v2654
        %2830 = vmatmul.mubr.bf16.gmra.mrb[0].mxu0 %v2653
        %v2831 = vpop.f32.mrb[0].mxu0
        %v2832 = vadd.f32 0.0, %v2831
        %v2833 = vpop.f32.mrb[0].mxu0
        %v2834 = vadd.f32 0.0, %v2833
        %v2835 = vpop.f32.mrb[0].mxu0
        %v2836 = vadd.f32 0.0, %v2835
        %v2837 = vpop.f32.mrb[0].mxu0
        %v2838 = vadd.f32 0.0, %v2837
        %2839 = vmatprep.mubr.bf16.mxu0 %v2656
        %2840 = vmatmul.mubr.bf16.gmra.mrb[0].mxu0 %v2655
        %v2841 = vpop.f32.mrb[0].mxu0
        %v2842 = vadd.f32 0.0, %v2841
        %v2843 = vpop.f32.mrb[0].mxu0
        %v2844 = vadd.f32 0.0, %v2843
        %v2845 = vpop.f32.mrb[0].mxu0
        %v2846 = vadd.f32 0.0, %v2845
        %v2847 = vpop.f32.mrb[0].mxu0
        %v2848 = vadd.f32 0.0, %v2847
        %2849 = vmatprep.mubr.bf16.mxu0 %v2658
        %2850 = vmatmul.mubr.bf16.gmra.mrb[0].mxu0 %v2657
        %v2851 = vpop.f32.mrb[0].mxu0
        %v2852 = vadd.f32 0.0, %v2851
        %v2853 = vpop.f32.mrb[0].mxu0
        %v2854 = vadd.f32 0.0, %v2853
        %v2855 = vpop.f32.mrb[0].mxu0
        %v2856 = vadd.f32 0.0, %v2855
        %v2857 = vpop.f32.mrb[0].mxu0
        %v2858 = vadd.f32 0.0, %v2857
        %2859 = vmatprep.mubr.bf16.mxu0 %v2660
        %2860 = vmatmul.mubr.bf16.gmra.mrb[0].mxu0 %v2659
        %v2861 = vpop.f32.mrb[0].mxu0
        %v2862 = vadd.f32 0.0, %v2861
        %v2863 = vpop.f32.mrb[0].mxu0
        %v2864 = vadd.f32 0.0, %v2863
        %v2865 = vpop.f32.mrb[0].mxu0
        %v2866 = vadd.f32 0.0, %v2865
        %v2867 = vpop.f32.mrb[0].mxu0
        %v2868 = vadd.f32 0.0, %v2867
        %2869 = vmatprep.mubr.bf16.mxu0 %v2662
        %2870 = vmatmul.mubr.bf16.gmra.mrb[0].mxu0 %v2661
        %v2871 = vpop.f32.mrb[0].mxu0
        %v2872 = vadd.f32 0.0, %v2871
        %v2873 = vpop.f32.mrb[0].mxu0
        %v2874 = vadd.f32 0.0, %v2873
        %v2875 = vpop.f32.mrb[0].mxu0
        %v2876 = vadd.f32 0.0, %v2875
        %v2877 = vpop.f32.mrb[0].mxu0
        %v2878 = vadd.f32 0.0, %v2877
        %2879 = vmatprep.mubr.bf16.mxu0 %v2664
        %2880 = vmatmul.mubr.bf16.gmra.mrb[0].mxu0 %v2663
        %v2881 = vpop.f32.mrb[0].mxu0
        %v2882 = vadd.f32 0.0, %v2881
        %v2883 = vpop.f32.mrb[0].mxu0
        %v2884 = vadd.f32 0.0, %v2883
        %v2885 = vpop.f32.mrb[0].mxu0
        %v2886 = vadd.f32 0.0, %v2885
        %v2887 = vpop.f32.mrb[0].mxu0
        %v2888 = vadd.f32 0.0, %v2887
        %2889 = vdwg.mxu0
        %v2922 = vunpack.c.l.b16 %v2473
        %v2923 = vunpack.c.h.b16 %v2473
        %v2924 = vunpack.c.l.b16 %v2474
        %v2925 = vunpack.c.h.b16 %v2474
        %v2926 = vunpack.c.l.b16 %v2475
        %v2927 = vunpack.c.h.b16 %v2475
        %v2928 = vunpack.c.l.b16 %v2476
        %v2929 = vunpack.c.h.b16 %v2476
        %v2930 = vunpack.c.l.b16 %v2477
        %v2931 = vunpack.c.h.b16 %v2477
        %v2932 = vunpack.c.l.b16 %v2478
        %v2933 = vunpack.c.h.b16 %v2478
        %v2934 = vunpack.c.l.b16 %v2479
        %v2935 = vunpack.c.h.b16 %v2479
        %v2936 = vunpack.c.l.b16 %v2480
        %v2937 = vunpack.c.h.b16 %v2480
        %v2938 = vunpack.c.l.b16 %v2481
        %v2939 = vunpack.c.h.b16 %v2481
        %v2940 = vunpack.c.l.b16 %v2482
        %v2941 = vunpack.c.h.b16 %v2482
        %v2942 = vunpack.c.l.b16 %v2483
        %v2943 = vunpack.c.h.b16 %v2483
        %v2944 = vunpack.c.l.b16 %v2484
        %v2945 = vunpack.c.h.b16 %v2484
        %v2946 = vunpack.c.l.b16 %v2485
        %v2947 = vunpack.c.h.b16 %v2485
        %v2948 = vunpack.c.l.b16 %v2486
        %v2949 = vunpack.c.h.b16 %v2486
        %v2950 = vunpack.c.l.b16 %v2487
        %v2951 = vunpack.c.h.b16 %v2487
        %v2952 = vunpack.c.l.b16 %v2488
        %v2953 = vunpack.c.h.b16 %v2488
        %v2954 = vunpack.c.l.b16 %v2489
        %v2955 = vunpack.c.h.b16 %v2489
        %v2956 = vunpack.c.l.b16 %v2490
        %v2957 = vunpack.c.h.b16 %v2490
        %v2958 = vunpack.c.l.b16 %v2491
        %v2959 = vunpack.c.h.b16 %v2491
        %v2960 = vunpack.c.l.b16 %v2492
        %v2961 = vunpack.c.h.b16 %v2492
        %v2962 = vunpack.c.l.b16 %v2493
        %v2963 = vunpack.c.h.b16 %v2493
        %v2964 = vunpack.c.l.b16 %v2494
        %v2965 = vunpack.c.h.b16 %v2494
        %v2966 = vunpack.c.l.b16 %v2495
        %v2967 = vunpack.c.h.b16 %v2495
        %v2968 = vunpack.c.l.b16 %v2496
        %v2969 = vunpack.c.h.b16 %v2496
        %v2970 = vunpack.c.l.b16 %v2497
        %v2971 = vunpack.c.h.b16 %v2497
        %v2972 = vunpack.c.l.b16 %v2498
        %v2973 = vunpack.c.h.b16 %v2498
        %v2974 = vunpack.c.l.b16 %v2499
        %v2975 = vunpack.c.h.b16 %v2499
        %v2976 = vunpack.c.l.b16 %v2500
        %v2977 = vunpack.c.h.b16 %v2500
        %v2978 = vunpack.c.l.b16 %v2501
        %v2979 = vunpack.c.h.b16 %v2501
        %v2980 = vunpack.c.l.b16 %v2502
        %v2981 = vunpack.c.h.b16 %v2502
        %v2982 = vunpack.c.l.b16 %v2503
        %v2983 = vunpack.c.h.b16 %v2503
        %v2984 = vunpack.c.l.b16 %v2504
        %v2985 = vunpack.c.h.b16 %v2504
        %v2986 = vpack.c.b16 %v2924, %v2922
        %v2987 = vpack.c.b16 %v2925, %v2923
        %v2988 = vpack.c.b16 %v2928, %v2926
        %v2989 = vpack.c.b16 %v2929, %v2927
        %v2990 = vpack.c.b16 %v2932, %v2930
        %v2991 = vpack.c.b16 %v2933, %v2931
        %v2992 = vpack.c.b16 %v2936, %v2934
        %v2993 = vpack.c.b16 %v2937, %v2935
        %v2994 = vpack.c.b16 %v2940, %v2938
        %v2995 = vpack.c.b16 %v2941, %v2939
        %v2996 = vpack.c.b16 %v2944, %v2942
        %v2997 = vpack.c.b16 %v2945, %v2943
        %v2998 = vpack.c.b16 %v2948, %v2946
        %v2999 = vpack.c.b16 %v2949, %v2947
        %v3000 = vpack.c.b16 %v2952, %v2950
        %v3001 = vpack.c.b16 %v2953, %v2951
        %v3002 = vpack.c.b16 %v2956, %v2954
        %v3003 = vpack.c.b16 %v2957, %v2955
        %v3004 = vpack.c.b16 %v2960, %v2958
        %v3005 = vpack.c.b16 %v2961, %v2959
        %v3006 = vpack.c.b16 %v2964, %v2962
        %v3007 = vpack.c.b16 %v2965, %v2963
        %v3008 = vpack.c.b16 %v2968, %v2966
        %v3009 = vpack.c.b16 %v2969, %v2967
        %v3010 = vpack.c.b16 %v2972, %v2970
        %v3011 = vpack.c.b16 %v2973, %v2971
        %v3012 = vpack.c.b16 %v2976, %v2974
        %v3013 = vpack.c.b16 %v2977, %v2975
        %v3014 = vpack.c.b16 %v2980, %v2978
        %v3015 = vpack.c.b16 %v2981, %v2979
        %v3016 = vpack.c.b16 %v2984, %v2982
        %v3017 = vpack.c.b16 %v2985, %v2983
        %3050 = vmatprep.subr.bf16.mxu0 %v2346
        %3051 = vmatpush1.bf16.msra.mxu0 %v2345
        %3052 = vmatprep.subr.bf16.mxu0 %v2350
        %3053 = vmatpush1.bf16.msra.mxu0 %v2349
        %3054 = vmatprep.subr.bf16.mxu0 %v2354
        %3055 = vmatpush1.bf16.msra.mxu0 %v2353
        %3056 = vmatprep.subr.bf16.mxu0 %v2358
        %3057 = vmatpush1.bf16.msra.mxu0 %v2357
        %3058 = vmatprep.subr.bf16.mxu0 %v2362
        %3059 = vmatpush1.bf16.msra.mxu0 %v2361
        %3060 = vmatprep.subr.bf16.mxu0 %v2366
        %3061 = vmatpush1.bf16.msra.mxu0 %v2365
        %3062 = vmatprep.subr.bf16.mxu0 %v2370
        %3063 = vmatpush1.bf16.msra.mxu0 %v2369
        %3064 = vmatprep.subr.bf16.mxu0 %v2374
        %3065 = vmatpush1.bf16.msra.mxu0 %v2373
        %3066 = vmatprep.subr.bf16.mxu0 %v2378
        %3067 = vmatpush1.bf16.msra.mxu0 %v2377
        %3068 = vmatprep.subr.bf16.mxu0 %v2382
        %3069 = vmatpush1.bf16.msra.mxu0 %v2381
        %3070 = vmatprep.subr.bf16.mxu0 %v2386
        %3071 = vmatpush1.bf16.msra.mxu0 %v2385
        %3072 = vmatprep.subr.bf16.mxu0 %v2390
        %3073 = vmatpush1.bf16.msra.mxu0 %v2389
        %3074 = vmatprep.subr.bf16.mxu0 %v2394
        %3075 = vmatpush1.bf16.msra.mxu0 %v2393
        %3076 = vmatprep.subr.bf16.mxu0 %v2398
        %3077 = vmatpush1.bf16.msra.mxu0 %v2397
        %3078 = vmatprep.subr.bf16.mxu0 %v2402
        %3079 = vmatpush1.bf16.msra.mxu0 %v2401
        %3080 = vmatprep.subr.bf16.mxu0 %v2406
        %3081 = vmatpush1.bf16.msra.mxu0 %v2405
        %3082 = vmatprep.mubr.bf16.mxu0 %v2987
        %3083 = vmatmul.mubr.bf16.gmra.mrb[0].mxu0 %v2986
        %v3084 = vpop.f32.mrb[0].mxu0
        %v3085 = vadd.f32 %v2732, %v3084
        %v3086 = vpop.f32.mrb[0].mxu0
        %v3087 = vadd.f32 %v2734, %v3086
        %v3088 = vpop.f32.mrb[0].mxu0
        %v3089 = vadd.f32 %v2736, %v3088
        %v3090 = vpop.f32.mrb[0].mxu0
        %v3091 = vadd.f32 %v2738, %v3090
        %3092 = vmatprep.mubr.bf16.mxu0 %v2989
        %3093 = vmatmul.mubr.bf16.gmra.mrb[0].mxu0 %v2988
        %v3094 = vpop.f32.mrb[0].mxu0
        %v3095 = vadd.f32 %v2742, %v3094
        %v3096 = vpop.f32.mrb[0].mxu0
        %v3097 = vadd.f32 %v2744, %v3096
        %v3098 = vpop.f32.mrb[0].mxu0
        %v3099 = vadd.f32 %v2746, %v3098
        %v3100 = vpop.f32.mrb[0].mxu0
        %v3101 = vadd.f32 %v2748, %v3100
        %3102 = vmatprep.mubr.bf16.mxu0 %v2991
        %3103 = vmatmul.mubr.bf16.gmra.mrb[0].mxu0 %v2990
        %v3104 = vpop.f32.mrb[0].mxu0
        %v3105 = vadd.f32 %v2752, %v3104
        %v3106 = vpop.f32.mrb[0].mxu0
        %v3107 = vadd.f32 %v2754, %v3106
        %v3108 = vpop.f32.mrb[0].mxu0
        %v3109 = vadd.f32 %v2756, %v3108
        %v3110 = vpop.f32.mrb[0].mxu0
        %v3111 = vadd.f32 %v2758, %v3110
        %3112 = vmatprep.mubr.bf16.mxu0 %v2993
        %3113 = vmatmul.mubr.bf16.gmra.mrb[0].mxu0 %v2992
        %v3114 = vpop.f32.mrb[0].mxu0
        %v3115 = vadd.f32 %v2762, %v3114
        %v3116 = vpop.f32.mrb[0].mxu0
        %v3117 = vadd.f32 %v2764, %v3116
        %v3118 = vpop.f32.mrb[0].mxu0
        %v3119 = vadd.f32 %v2766, %v3118
        %v3120 = vpop.f32.mrb[0].mxu0
        %v3121 = vadd.f32 %v2768, %v3120
        %3122 = vmatprep.mubr.bf16.mxu0 %v2995
        %3123 = vmatmul.mubr.bf16.gmra.mrb[0].mxu0 %v2994
        %v3124 = vpop.f32.mrb[0].mxu0
        %v3125 = vadd.f32 %v2772, %v3124
        %v3126 = vpop.f32.mrb[0].mxu0
        %v3127 = vadd.f32 %v2774, %v3126
        %v3128 = vpop.f32.mrb[0].mxu0
        %v3129 = vadd.f32 %v2776, %v3128
        %v3130 = vpop.f32.mrb[0].mxu0
        %v3131 = vadd.f32 %v2778, %v3130
        %3132 = vmatprep.mubr.bf16.mxu0 %v2997
        %3133 = vmatmul.mubr.bf16.gmra.mrb[0].mxu0 %v2996
        %v3134 = vpop.f32.mrb[0].mxu0
        %v3135 = vadd.f32 %v2782, %v3134
        %v3136 = vpop.f32.mrb[0].mxu0
        %v3137 = vadd.f32 %v2784, %v3136
        %v3138 = vpop.f32.mrb[0].mxu0
        %v3139 = vadd.f32 %v2786, %v3138
        %v3140 = vpop.f32.mrb[0].mxu0
        %v3141 = vadd.f32 %v2788, %v3140
        %3142 = vmatprep.mubr.bf16.mxu0 %v2999
        %3143 = vmatmul.mubr.bf16.gmra.mrb[0].mxu0 %v2998
        %v3144 = vpop.f32.mrb[0].mxu0
        %v3145 = vadd.f32 %v2792, %v3144
        %v3146 = vpop.f32.mrb[0].mxu0
        %v3147 = vadd.f32 %v2794, %v3146
        %v3148 = vpop.f32.mrb[0].mxu0
        %v3149 = vadd.f32 %v2796, %v3148
        %v3150 = vpop.f32.mrb[0].mxu0
        %v3151 = vadd.f32 %v2798, %v3150
        %3152 = vmatprep.mubr.bf16.mxu0 %v3001
        %3153 = vmatmul.mubr.bf16.gmra.mrb[0].mxu0 %v3000
        %v3154 = vpop.f32.mrb[0].mxu0
        %v3155 = vadd.f32 %v2802, %v3154
        %v3156 = vpop.f32.mrb[0].mxu0
        %v3157 = vadd.f32 %v2804, %v3156
        %v3158 = vpop.f32.mrb[0].mxu0
        %v3159 = vadd.f32 %v2806, %v3158
        %v3160 = vpop.f32.mrb[0].mxu0
        %v3161 = vadd.f32 %v2808, %v3160
        %3162 = vmatprep.mubr.bf16.mxu0 %v3003
        %3163 = vmatmul.mubr.bf16.gmra.mrb[0].mxu0 %v3002
        %v3164 = vpop.f32.mrb[0].mxu0
        %v3165 = vadd.f32 %v2812, %v3164
        %v3166 = vpop.f32.mrb[0].mxu0
        %v3167 = vadd.f32 %v2814, %v3166
        %v3168 = vpop.f32.mrb[0].mxu0
        %v3169 = vadd.f32 %v2816, %v3168
        %v3170 = vpop.f32.mrb[0].mxu0
        %v3171 = vadd.f32 %v2818, %v3170
        %3172 = vmatprep.mubr.bf16.mxu0 %v3005
        %3173 = vmatmul.mubr.bf16.gmra.mrb[0].mxu0 %v3004
        %v3174 = vpop.f32.mrb[0].mxu0
        %v3175 = vadd.f32 %v2822, %v3174
        %v3176 = vpop.f32.mrb[0].mxu0
        %v3177 = vadd.f32 %v2824, %v3176
        %v3178 = vpop.f32.mrb[0].mxu0
        %v3179 = vadd.f32 %v2826, %v3178
        %v3180 = vpop.f32.mrb[0].mxu0
        %v3181 = vadd.f32 %v2828, %v3180
        %3182 = vmatprep.mubr.bf16.mxu0 %v3007
        %3183 = vmatmul.mubr.bf16.gmra.mrb[0].mxu0 %v3006
        %v3184 = vpop.f32.mrb[0].mxu0
        %v3185 = vadd.f32 %v2832, %v3184
        %v3186 = vpop.f32.mrb[0].mxu0
        %v3187 = vadd.f32 %v2834, %v3186
        %v3188 = vpop.f32.mrb[0].mxu0
        %v3189 = vadd.f32 %v2836, %v3188
        %v3190 = vpop.f32.mrb[0].mxu0
        %v3191 = vadd.f32 %v2838, %v3190
        %3192 = vmatprep.mubr.bf16.mxu0 %v3009
        %3193 = vmatmul.mubr.bf16.gmra.mrb[0].mxu0 %v3008
        %v3194 = vpop.f32.mrb[0].mxu0
        %v3195 = vadd.f32 %v2842, %v3194
        %v3196 = vpop.f32.mrb[0].mxu0
        %v3197 = vadd.f32 %v2844, %v3196
        %v3198 = vpop.f32.mrb[0].mxu0
        %v3199 = vadd.f32 %v2846, %v3198
        %v3200 = vpop.f32.mrb[0].mxu0
        %v3201 = vadd.f32 %v2848, %v3200
        %3202 = vmatprep.mubr.bf16.mxu0 %v3011
        %3203 = vmatmul.mubr.bf16.gmra.mrb[0].mxu0 %v3010
        %v3204 = vpop.f32.mrb[0].mxu0
        %v3205 = vadd.f32 %v2852, %v3204
        %v3206 = vpop.f32.mrb[0].mxu0
        %v3207 = vadd.f32 %v2854, %v3206
        %v3208 = vpop.f32.mrb[0].mxu0
        %v3209 = vadd.f32 %v2856, %v3208
        %v3210 = vpop.f32.mrb[0].mxu0
        %v3211 = vadd.f32 %v2858, %v3210
        %3212 = vmatprep.mubr.bf16.mxu0 %v3013
        %3213 = vmatmul.mubr.bf16.gmra.mrb[0].mxu0 %v3012
        %v3214 = vpop.f32.mrb[0].mxu0
        %v3215 = vadd.f32 %v2862, %v3214
        %v3216 = vpop.f32.mrb[0].mxu0
        %v3217 = vadd.f32 %v2864, %v3216
        %v3218 = vpop.f32.mrb[0].mxu0
        %v3219 = vadd.f32 %v2866, %v3218
        %v3220 = vpop.f32.mrb[0].mxu0
        %v3221 = vadd.f32 %v2868, %v3220
        %3222 = vmatprep.mubr.bf16.mxu0 %v3015
        %3223 = vmatmul.mubr.bf16.gmra.mrb[0].mxu0 %v3014
        %v3224 = vpop.f32.mrb[0].mxu0
        %v3225 = vadd.f32 %v2872, %v3224
        %v3226 = vpop.f32.mrb[0].mxu0
        %v3227 = vadd.f32 %v2874, %v3226
        %v3228 = vpop.f32.mrb[0].mxu0
        %v3229 = vadd.f32 %v2876, %v3228
        %v3230 = vpop.f32.mrb[0].mxu0
        %v3231 = vadd.f32 %v2878, %v3230
        %3232 = vmatprep.mubr.bf16.mxu0 %v3017
        %3233 = vmatmul.mubr.bf16.gmra.mrb[0].mxu0 %v3016
        %v3234 = vpop.f32.mrb[0].mxu0
        %v3235 = vadd.f32 %v2882, %v3234
        %v3236 = vpop.f32.mrb[0].mxu0
        %v3237 = vadd.f32 %v2884, %v3236
        %v3238 = vpop.f32.mrb[0].mxu0
        %v3239 = vadd.f32 %v2886, %v3238
        %v3240 = vpop.f32.mrb[0].mxu0
        %v3241 = vadd.f32 %v2888, %v3240
        %3242 = vdwg.mxu0
        %v3243 = vadd.f32 %v2409, %v3085
        %v3244 = vadd.f32 %v2410, %v3087
        %v3245 = vadd.f32 %v2411, %v3089
        %v3246 = vadd.f32 %v2412, %v3091
        %v3247 = vadd.f32 %v2413, %v3095
        %v3248 = vadd.f32 %v2414, %v3097
        %v3249 = vadd.f32 %v2415, %v3099
        %v3250 = vadd.f32 %v2416, %v3101
        %v3251 = vadd.f32 %v2417, %v3105
        %v3252 = vadd.f32 %v2418, %v3107
        %v3253 = vadd.f32 %v2419, %v3109
        %v3254 = vadd.f32 %v2420, %v3111
        %v3255 = vadd.f32 %v2421, %v3115
        %v3256 = vadd.f32 %v2422, %v3117
        %v3257 = vadd.f32 %v2423, %v3119
        %v3258 = vadd.f32 %v2424, %v3121
        %v3259 = vadd.f32 %v2425, %v3125
        %v3260 = vadd.f32 %v2426, %v3127
        %v3261 = vadd.f32 %v2427, %v3129
        %v3262 = vadd.f32 %v2428, %v3131
        %v3263 = vadd.f32 %v2429, %v3135
        %v3264 = vadd.f32 %v2430, %v3137
        %v3265 = vadd.f32 %v2431, %v3139
        %v3266 = vadd.f32 %v2432, %v3141
        %v3267 = vadd.f32 %v2433, %v3145
        %v3268 = vadd.f32 %v2434, %v3147
        %v3269 = vadd.f32 %v2435, %v3149
        %v3270 = vadd.f32 %v2436, %v3151
        %v3271 = vadd.f32 %v2437, %v3155
        %v3272 = vadd.f32 %v2438, %v3157
        %v3273 = vadd.f32 %v2439, %v3159
        %v3274 = vadd.f32 %v2440, %v3161
        %v3275 = vadd.f32 %v2441, %v3165
        %v3276 = vadd.f32 %v2442, %v3167
        %v3277 = vadd.f32 %v2443, %v3169
        %v3278 = vadd.f32 %v2444, %v3171
        %v3279 = vadd.f32 %v2445, %v3175
        %v3280 = vadd.f32 %v2446, %v3177
        %v3281 = vadd.f32 %v2447, %v3179
        %v3282 = vadd.f32 %v2448, %v3181
        %v3283 = vadd.f32 %v2449, %v3185
        %v3284 = vadd.f32 %v2450, %v3187
        %v3285 = vadd.f32 %v2451, %v3189
        %v3286 = vadd.f32 %v2452, %v3191
        %v3287 = vadd.f32 %v2453, %v3195
        %v3288 = vadd.f32 %v2454, %v3197
        %v3289 = vadd.f32 %v2455, %v3199
        %v3290 = vadd.f32 %v2456, %v3201
        %v3291 = vadd.f32 %v2457, %v3205
        %v3292 = vadd.f32 %v2458, %v3207
        %v3293 = vadd.f32 %v2459, %v3209
        %v3294 = vadd.f32 %v2460, %v3211
        %v3295 = vadd.f32 %v2461, %v3215
        %v3296 = vadd.f32 %v2462, %v3217
        %v3297 = vadd.f32 %v2463, %v3219
        %v3298 = vadd.f32 %v2464, %v3221
        %v3299 = vadd.f32 %v2465, %v3225
        %v3300 = vadd.f32 %v2466, %v3227
        %v3301 = vadd.f32 %v2467, %v3229
        %v3302 = vadd.f32 %v2468, %v3231
        %v3303 = vadd.f32 %v2469, %v3235
        %v3304 = vadd.f32 %v2470, %v3237
        %v3305 = vadd.f32 %v2471, %v3239
        %v3306 = vadd.f32 %v2472, %v3241
        %3307 = vst [vmem:[#allocation2] sm:$0xff] %v3243
        %3308 = vst [vmem:[#allocation2 + $0x8] sm:$0xff] %v3244
        %3309 = vst [vmem:[#allocation2 + $0x10] sm:$0xff] %v3245
        %3310 = vst [vmem:[#allocation2 + $0x18] sm:$0xff] %v3246
        %3311 = vst [vmem:[#allocation2 + $0x20] sm:$0xff] %v3247
        %3312 = vst [vmem:[#allocation2 + $0x28] sm:$0xff] %v3248
        %3313 = vst [vmem:[#allocation2 + $0x30] sm:$0xff] %v3249
        %3314 = vst [vmem:[#allocation2 + $0x38] sm:$0xff] %v3250
        %3315 = vst [vmem:[#allocation2 + $0x40] sm:$0xff] %v3251
        %3316 = vst [vmem:[#allocation2 + $0x48] sm:$0xff] %v3252
        %3317 = vst [vmem:[#allocation2 + $0x50] sm:$0xff] %v3253
        %3318 = vst [vmem:[#allocation2 + $0x58] sm:$0xff] %v3254
        %3319 = vst [vmem:[#allocation2 + $0x60] sm:$0xff] %v3255
        %3320 = vst [vmem:[#allocation2 + $0x68] sm:$0xff] %v3256
        %3321 = vst [vmem:[#allocation2 + $0x70] sm:$0xff] %v3257
        %3322 = vst [vmem:[#allocation2 + $0x78] sm:$0xff] %v3258
        %3323 = vst [vmem:[#allocation2 + $0x80] sm:$0xff] %v3259
        %3324 = vst [vmem:[#allocation2 + $0x88] sm:$0xff] %v3260
        %3325 = vst [vmem:[#allocation2 + $0x90] sm:$0xff] %v3261
        %3326 = vst [vmem:[#allocation2 + $0x98] sm:$0xff] %v3262
        %3327 = vst [vmem:[#allocation2 + $0xa0] sm:$0xff] %v3263
        %3328 = vst [vmem:[#allocation2 + $0xa8] sm:$0xff] %v3264
        %3329 = vst [vmem:[#allocation2 + $0xb0] sm:$0xff] %v3265
        %3330 = vst [vmem:[#allocation2 + $0xb8] sm:$0xff] %v3266
        %3331 = vst [vmem:[#allocation2 + $0xc0] sm:$0xff] %v3267
        %3332 = vst [vmem:[#allocation2 + $0xc8] sm:$0xff] %v3268
        %3333 = vst [vmem:[#allocation2 + $0xd0] sm:$0xff] %v3269
        %3334 = vst [vmem:[#allocation2 + $0xd8] sm:$0xff] %v3270
        %3335 = vst [vmem:[#allocation2 + $0xe0] sm:$0xff] %v3271
        %3336 = vst [vmem:[#allocation2 + $0xe8] sm:$0xff] %v3272
        %3337 = vst [vmem:[#allocation2 + $0xf0] sm:$0xff] %v3273
        %3338 = vst [vmem:[#allocation2 + $0xf8] sm:$0xff] %v3274
        %3339 = vst [vmem:[#allocation2 + $0x100] sm:$0xff] %v3275
        %3340 = vst [vmem:[#allocation2 + $0x108] sm:$0xff] %v3276
        %3341 = vst [vmem:[#allocation2 + $0x110] sm:$0xff] %v3277
        %3342 = vst [vmem:[#allocation2 + $0x118] sm:$0xff] %v3278
        %3343 = vst [vmem:[#allocation2 + $0x120] sm:$0xff] %v3279
        %3344 = vst [vmem:[#allocation2 + $0x128] sm:$0xff] %v3280
        %3345 = vst [vmem:[#allocation2 + $0x130] sm:$0xff] %v3281
        %3346 = vst [vmem:[#allocation2 + $0x138] sm:$0xff] %v3282
        %3347 = vst [vmem:[#allocation2 + $0x140] sm:$0xff] %v3283
        %3348 = vst [vmem:[#allocation2 + $0x148] sm:$0xff] %v3284
        %3349 = vst [vmem:[#allocation2 + $0x150] sm:$0xff] %v3285
        %3350 = vst [vmem:[#allocation2 + $0x158] sm:$0xff] %v3286
        %3351 = vst [vmem:[#allocation2 + $0x160] sm:$0xff] %v3287
        %3352 = vst [vmem:[#allocation2 + $0x168] sm:$0xff] %v3288
        %3353 = vst [vmem:[#allocation2 + $0x170] sm:$0xff] %v3289
        %3354 = vst [vmem:[#allocation2 + $0x178] sm:$0xff] %v3290
        %3355 = vst [vmem:[#allocation2 + $0x180] sm:$0xff] %v3291
        %3356 = vst [vmem:[#allocation2 + $0x188] sm:$0xff] %v3292
        %3357 = vst [vmem:[#allocation2 + $0x190] sm:$0xff] %v3293
        %3358 = vst [vmem:[#allocation2 + $0x198] sm:$0xff] %v3294
        %3359 = vst [vmem:[#allocation2 + $0x1a0] sm:$0xff] %v3295
        %3360 = vst [vmem:[#allocation2 + $0x1a8] sm:$0xff] %v3296
        %3361 = vst [vmem:[#allocation2 + $0x1b0] sm:$0xff] %v3297
        %3362 = vst [vmem:[#allocation2 + $0x1b8] sm:$0xff] %v3298
        %3363 = vst [vmem:[#allocation2 + $0x1c0] sm:$0xff] %v3299
        %3364 = vst [vmem:[#allocation2 + $0x1c8] sm:$0xff] %v3300
        %3365 = vst [vmem:[#allocation2 + $0x1d0] sm:$0xff] %v3301
        %3366 = vst [vmem:[#allocation2 + $0x1d8] sm:$0xff] %v3302
        %3367 = vst [vmem:[#allocation2 + $0x1e0] sm:$0xff] %v3303
        %3368 = vst [vmem:[#allocation2 + $0x1e8] sm:$0xff] %v3304
        %3369 = vst [vmem:[#allocation2 + $0x1f0] sm:$0xff] %v3305
        %3370 = vst [vmem:[#allocation2 + $0x1f8] sm:$0xff] %v3306
        // Predicated region
        $region97: #{node_emb_forward.1} parent=63 // pred_check
          %p3371 = pneg %p631
        $region98: #{node_emb_forward.1} parent=63 // pred_check_branch
          %3373 = sbr.rel (%p3371) target = $region100
        $region99: #{node_emb_forward.1} parent=63 // pred_region
          %v3374 = vld [vmem:[#allocation2] sm:$0xff]
          %v3375 = vld [vmem:[#allocation2 + $0x8] sm:$0xff]
          %v3376 = vld [vmem:[#allocation2 + $0x10] sm:$0xff]
          %v3377 = vld [vmem:[#allocation2 + $0x18] sm:$0xff]
          %v3378 = vld [vmem:[#allocation2 + $0x20] sm:$0xff]
          %v3379 = vld [vmem:[#allocation2 + $0x28] sm:$0xff]
          %v3380 = vld [vmem:[#allocation2 + $0x30] sm:$0xff]
          %v3381 = vld [vmem:[#allocation2 + $0x38] sm:$0xff]
          %v3382 = vld [vmem:[#allocation2 + $0x40] sm:$0xff]
          %v3383 = vld [vmem:[#allocation2 + $0x48] sm:$0xff]
          %v3384 = vld [vmem:[#allocation2 + $0x50] sm:$0xff]
          %v3385 = vld [vmem:[#allocation2 + $0x58] sm:$0xff]
          %v3386 = vld [vmem:[#allocation2 + $0x60] sm:$0xff]
          %v3387 = vld [vmem:[#allocation2 + $0x68] sm:$0xff]
          %v3388 = vld [vmem:[#allocation2 + $0x70] sm:$0xff]
          %v3389 = vld [vmem:[#allocation2 + $0x78] sm:$0xff]
          %v3390 = vld [vmem:[#allocation2 + $0x80] sm:$0xff]
          %v3391 = vld [vmem:[#allocation2 + $0x88] sm:$0xff]
          %v3392 = vld [vmem:[#allocation2 + $0x90] sm:$0xff]
          %v3393 = vld [vmem:[#allocation2 + $0x98] sm:$0xff]
          %v3394 = vld [vmem:[#allocation2 + $0xa0] sm:$0xff]
          %v3395 = vld [vmem:[#allocation2 + $0xa8] sm:$0xff]
          %v3396 = vld [vmem:[#allocation2 + $0xb0] sm:$0xff]
          %v3397 = vld [vmem:[#allocation2 + $0xb8] sm:$0xff]
          %v3398 = vld [vmem:[#allocation2 + $0xc0] sm:$0xff]
          %v3399 = vld [vmem:[#allocation2 + $0xc8] sm:$0xff]
          %v3400 = vld [vmem:[#allocation2 + $0xd0] sm:$0xff]
          %v3401 = vld [vmem:[#allocation2 + $0xd8] sm:$0xff]
          %v3402 = vld [vmem:[#allocation2 + $0xe0] sm:$0xff]
          %v3403 = vld [vmem:[#allocation2 + $0xe8] sm:$0xff]
          %v3404 = vld [vmem:[#allocation2 + $0xf0] sm:$0xff]
          %v3405 = vld [vmem:[#allocation2 + $0xf8] sm:$0xff]
          %v3406 = vld [vmem:[#allocation2 + $0x100] sm:$0xff]
          %v3407 = vld [vmem:[#allocation2 + $0x108] sm:$0xff]
          %v3408 = vld [vmem:[#allocation2 + $0x110] sm:$0xff]
          %v3409 = vld [vmem:[#allocation2 + $0x118] sm:$0xff]
          %v3410 = vld [vmem:[#allocation2 + $0x120] sm:$0xff]
          %v3411 = vld [vmem:[#allocation2 + $0x128] sm:$0xff]
          %v3412 = vld [vmem:[#allocation2 + $0x130] sm:$0xff]
          %v3413 = vld [vmem:[#allocation2 + $0x138] sm:$0xff]
          %v3414 = vld [vmem:[#allocation2 + $0x140] sm:$0xff]
          %v3415 = vld [vmem:[#allocation2 + $0x148] sm:$0xff]
          %v3416 = vld [vmem:[#allocation2 + $0x150] sm:$0xff]
          %v3417 = vld [vmem:[#allocation2 + $0x158] sm:$0xff]
          %v3418 = vld [vmem:[#allocation2 + $0x160] sm:$0xff]
          %v3419 = vld [vmem:[#allocation2 + $0x168] sm:$0xff]
          %v3420 = vld [vmem:[#allocation2 + $0x170] sm:$0xff]
          %v3421 = vld [vmem:[#allocation2 + $0x178] sm:$0xff]
          %v3422 = vld [vmem:[#allocation2 + $0x180] sm:$0xff]
          %v3423 = vld [vmem:[#allocation2 + $0x188] sm:$0xff]
          %v3424 = vld [vmem:[#allocation2 + $0x190] sm:$0xff]
          %v3425 = vld [vmem:[#allocation2 + $0x198] sm:$0xff]
          %v3426 = vld [vmem:[#allocation2 + $0x1a0] sm:$0xff]
          %v3427 = vld [vmem:[#allocation2 + $0x1a8] sm:$0xff]
          %v3428 = vld [vmem:[#allocation2 + $0x1b0] sm:$0xff]
          %v3429 = vld [vmem:[#allocation2 + $0x1b8] sm:$0xff]
          %v3430 = vld [vmem:[#allocation2 + $0x1c0] sm:$0xff]
          %v3431 = vld [vmem:[#allocation2 + $0x1c8] sm:$0xff]
          %v3432 = vld [vmem:[#allocation2 + $0x1d0] sm:$0xff]
          %v3433 = vld [vmem:[#allocation2 + $0x1d8] sm:$0xff]
          %v3434 = vld [vmem:[#allocation2 + $0x1e0] sm:$0xff]
          %v3435 = vld [vmem:[#allocation2 + $0x1e8] sm:$0xff]
          %v3436 = vld [vmem:[#allocation2 + $0x1f0] sm:$0xff]
          %v3437 = vld [vmem:[#allocation2 + $0x1f8] sm:$0xff]
          %v3438 = vpack.c.bf16 %v3376, %v3374
          %v3439 = vpack.c.bf16 %v3377, %v3375
          %v3440 = vpack.c.bf16 %v3380, %v3378
          %v3441 = vpack.c.bf16 %v3381, %v3379
          %v3442 = vpack.c.bf16 %v3384, %v3382
          %v3443 = vpack.c.bf16 %v3385, %v3383
          %v3444 = vpack.c.bf16 %v3388, %v3386
          %v3445 = vpack.c.bf16 %v3389, %v3387
          %v3446 = vpack.c.bf16 %v3392, %v3390
          %v3447 = vpack.c.bf16 %v3393, %v3391
          %v3448 = vpack.c.bf16 %v3396, %v3394
          %v3449 = vpack.c.bf16 %v3397, %v3395
          %v3450 = vpack.c.bf16 %v3400, %v3398
          %v3451 = vpack.c.bf16 %v3401, %v3399
          %v3452 = vpack.c.bf16 %v3404, %v3402
          %v3453 = vpack.c.bf16 %v3405, %v3403
          %v3454 = vpack.c.bf16 %v3408, %v3406
          %v3455 = vpack.c.bf16 %v3409, %v3407
          %v3456 = vpack.c.bf16 %v3412, %v3410
          %v3457 = vpack.c.bf16 %v3413, %v3411
          %v3458 = vpack.c.bf16 %v3416, %v3414
          %v3459 = vpack.c.bf16 %v3417, %v3415
          %v3460 = vpack.c.bf16 %v3420, %v3418
          %v3461 = vpack.c.bf16 %v3421, %v3419
          %v3462 = vpack.c.bf16 %v3424, %v3422
          %v3463 = vpack.c.bf16 %v3425, %v3423
          %v3464 = vpack.c.bf16 %v3428, %v3426
          %v3465 = vpack.c.bf16 %v3429, %v3427
          %v3466 = vpack.c.bf16 %v3432, %v3430
          %v3467 = vpack.c.bf16 %v3433, %v3431
          %v3468 = vpack.c.bf16 %v3436, %v3434
          %v3469 = vpack.c.bf16 %v3437, %v3435
          %v3470 = vld [vmem:[%s536] sm:$0xff]
          %v3471 = vld [vmem:[%s536 + $0x8] sm:$0xf]
          %v3472 = vld [vmem:[%s536 + $0xc] sm:$0xff]
          %v3473 = vld [vmem:[%s536 + $0x14] sm:$0xf]
          %v3474 = vld [vmem:[%s536 + $0x18] sm:$0xff]
          %v3475 = vld [vmem:[%s536 + $0x20] sm:$0xf]
          %v3476 = vld [vmem:[%s536 + $0x24] sm:$0xff]
          %v3477 = vld [vmem:[%s536 + $0x2c] sm:$0xf]
          %v3478 = vld [vmem:[%s536 + $0x30] sm:$0xff]
          %v3479 = vld [vmem:[%s536 + $0x38] sm:$0xf]
          %v3480 = vld [vmem:[%s536 + $0x3c] sm:$0xff]
          %v3481 = vld [vmem:[%s536 + $0x44] sm:$0xf]
          %v3482 = vld [vmem:[%s536 + $0x48] sm:$0xff]
          %v3483 = vld [vmem:[%s536 + $0x50] sm:$0xf]
          %v3484 = vld [vmem:[%s536 + $0x54] sm:$0xff]
          %v3485 = vld [vmem:[%s536 + $0x5c] sm:$0xf]
          %v3486 = vld [vmem:[%s536 + $0x60] sm:$0xff]
          %v3487 = vld [vmem:[%s536 + $0x68] sm:$0xf]
          %v3488 = vld [vmem:[%s536 + $0x6c] sm:$0xff]
          %v3489 = vld [vmem:[%s536 + $0x74] sm:$0xf]
          %v3490 = vld [vmem:[%s536 + $0x78] sm:$0xff]
          %v3491 = vld [vmem:[%s536 + $0x80] sm:$0xf]
          %v3492 = vld [vmem:[%s536 + $0x84] sm:$0xff]
          %v3493 = vld [vmem:[%s536 + $0x8c] sm:$0xf]
          %v3494 = vld [vmem:[%s536 + $0x90] sm:$0xff]
          %v3495 = vld [vmem:[%s536 + $0x98] sm:$0xf]
          %v3496 = vld [vmem:[%s536 + $0x9c] sm:$0xff]
          %v3497 = vld [vmem:[%s536 + $0xa4] sm:$0xf]
          %v3498 = vld [vmem:[%s536 + $0xa8] sm:$0xff]
          %v3499 = vld [vmem:[%s536 + $0xb0] sm:$0xf]
          %v3500 = vld [vmem:[%s536 + $0xb4] sm:$0xff]
          %v3501 = vld [vmem:[%s536 + $0xbc] sm:$0xf]
          %v3502 = vld [vmem:[%s536 + $0xc0] sm:$0xff]
          %v3503 = vld [vmem:[%s536 + $0xc8] sm:$0xf]
          %v3504 = vld [vmem:[%s536 + $0xcc] sm:$0xff]
          %v3505 = vld [vmem:[%s536 + $0xd4] sm:$0xf]
          %v3506 = vld [vmem:[%s536 + $0xd8] sm:$0xff]
          %v3507 = vld [vmem:[%s536 + $0xe0] sm:$0xf]
          %v3508 = vld [vmem:[%s536 + $0xe4] sm:$0xff]
          %v3509 = vld [vmem:[%s536 + $0xec] sm:$0xf]
          %v3510 = vld [vmem:[%s536 + $0xf0] sm:$0xff]
          %v3511 = vld [vmem:[%s536 + $0xf8] sm:$0xf]
          %v3512 = vld [vmem:[%s536 + $0xfc] sm:$0xff]
          %v3513 = vld [vmem:[%s536 + $0x104] sm:$0xf]
          %v3514 = vld [vmem:[%s536 + $0x108] sm:$0xff]
          %v3515 = vld [vmem:[%s536 + $0x110] sm:$0xf]
          %v3516 = vld [vmem:[%s536 + $0x114] sm:$0xff]
          %v3517 = vld [vmem:[%s536 + $0x11c] sm:$0xf]
          %v3518 = vld [vmem:[%s536 + $0x120] sm:$0xff]
          %v3519 = vld [vmem:[%s536 + $0x128] sm:$0xf]
          %v3520 = vld [vmem:[%s536 + $0x12c] sm:$0xff]
          %v3521 = vld [vmem:[%s536 + $0x134] sm:$0xf]
          %v3522 = vld [vmem:[%s536 + $0x138] sm:$0xff]
          %v3523 = vld [vmem:[%s536 + $0x140] sm:$0xf]
          %v3524 = vld [vmem:[%s536 + $0x144] sm:$0xff]
          %v3525 = vld [vmem:[%s536 + $0x14c] sm:$0xf]
          %v3526 = vld [vmem:[%s536 + $0x150] sm:$0xff]
          %v3527 = vld [vmem:[%s536 + $0x158] sm:$0xf]
          %v3528 = vld [vmem:[%s536 + $0x15c] sm:$0xff]
          %v3529 = vld [vmem:[%s536 + $0x164] sm:$0xf]
          %v3530 = vld [vmem:[%s536 + $0x168] sm:$0xff]
          %v3531 = vld [vmem:[%s536 + $0x170] sm:$0xf]
          %v3532 = vld [vmem:[%s536 + $0x174] sm:$0xff]
          %v3533 = vld [vmem:[%s536 + $0x17c] sm:$0xf]
          %v3534 = vld [vmem:[%s624] sm:$0x7]
          %v3536 = vlaneseq
          %v3537 = vshrl.u32 %v3536, 7
          %v3538 = vsub.s32 0, %v3537
          %v3539 = vrot.slane %v3534, %v3538
          %v3540 = vlaneseq
          %v3541 = vshrl.u32 %v3540, 7
          %v3542 = vsub.s32 1, %v3541
          %v3543 = vrot.slane %v3534, %v3542
          %v3544 = vlaneseq
          %v3545 = vshrl.u32 %v3544, 7
          %v3546 = vsub.s32 2, %v3545
          %v3547 = vrot.slane %v3534, %v3546
          %v3615 = vunpack.c.l.b16 %v3470
          %v3616 = vunpack.c.h.b16 %v3470
          %v3617 = vunpack.c.l.b16 %v3471
          %v3618 = vunpack.c.l.b16 %v3472
          %v3619 = vunpack.c.h.b16 %v3472
          %v3620 = vunpack.c.l.b16 %v3473
          %v3621 = vunpack.c.l.b16 %v3474
          %v3622 = vunpack.c.h.b16 %v3474
          %v3623 = vunpack.c.l.b16 %v3475
          %v3624 = vunpack.c.l.b16 %v3476
          %v3625 = vunpack.c.h.b16 %v3476
          %v3626 = vunpack.c.l.b16 %v3477
          %v3627 = vunpack.c.l.b16 %v3478
          %v3628 = vunpack.c.h.b16 %v3478
          %v3629 = vunpack.c.l.b16 %v3479
          %v3630 = vunpack.c.l.b16 %v3480
          %v3631 = vunpack.c.h.b16 %v3480
          %v3632 = vunpack.c.l.b16 %v3481
          %v3633 = vunpack.c.l.b16 %v3482
          %v3634 = vunpack.c.h.b16 %v3482
          %v3635 = vunpack.c.l.b16 %v3483
          %v3636 = vunpack.c.l.b16 %v3484
          %v3637 = vunpack.c.h.b16 %v3484
          %v3638 = vunpack.c.l.b16 %v3485
          %v3639 = vunpack.c.l.b16 %v3486
          %v3640 = vunpack.c.h.b16 %v3486
          %v3641 = vunpack.c.l.b16 %v3487
          %v3642 = vunpack.c.l.b16 %v3488
          %v3643 = vunpack.c.h.b16 %v3488
          %v3644 = vunpack.c.l.b16 %v3489
          %v3645 = vunpack.c.l.b16 %v3490
          %v3646 = vunpack.c.h.b16 %v3490
          %v3647 = vunpack.c.l.b16 %v3491
          %v3648 = vunpack.c.l.b16 %v3492
          %v3649 = vunpack.c.h.b16 %v3492
          %v3650 = vunpack.c.l.b16 %v3493
          %v3651 = vunpack.c.l.b16 %v3494
          %v3652 = vunpack.c.h.b16 %v3494
          %v3653 = vunpack.c.l.b16 %v3495
          %v3654 = vunpack.c.l.b16 %v3496
          %v3655 = vunpack.c.h.b16 %v3496
          %v3656 = vunpack.c.l.b16 %v3497
          %v3657 = vunpack.c.l.b16 %v3498
          %v3658 = vunpack.c.h.b16 %v3498
          %v3659 = vunpack.c.l.b16 %v3499
          %v3660 = vunpack.c.l.b16 %v3500
          %v3661 = vunpack.c.h.b16 %v3500
          %v3662 = vunpack.c.l.b16 %v3501
          %v3663 = vunpack.c.l.b16 %v3502
          %v3664 = vunpack.c.h.b16 %v3502
          %v3665 = vunpack.c.l.b16 %v3503
          %v3666 = vunpack.c.l.b16 %v3504
          %v3667 = vunpack.c.h.b16 %v3504
          %v3668 = vunpack.c.l.b16 %v3505
          %v3669 = vunpack.c.l.b16 %v3506
          %v3670 = vunpack.c.h.b16 %v3506
          %v3671 = vunpack.c.l.b16 %v3507
          %v3672 = vunpack.c.l.b16 %v3508
          %v3673 = vunpack.c.h.b16 %v3508
          %v3674 = vunpack.c.l.b16 %v3509
          %v3675 = vunpack.c.l.b16 %v3510
          %v3676 = vunpack.c.h.b16 %v3510
          %v3677 = vunpack.c.l.b16 %v3511
          %v3678 = vunpack.c.l.b16 %v3512
          %v3679 = vunpack.c.h.b16 %v3512
          %v3680 = vunpack.c.l.b16 %v3513
          %v3681 = vunpack.c.l.b16 %v3514
          %v3682 = vunpack.c.h.b16 %v3514
          %v3683 = vunpack.c.l.b16 %v3515
          %v3684 = vunpack.c.l.b16 %v3516
          %v3685 = vunpack.c.h.b16 %v3516
          %v3686 = vunpack.c.l.b16 %v3517
          %v3687 = vunpack.c.l.b16 %v3518
          %v3688 = vunpack.c.h.b16 %v3518
          %v3689 = vunpack.c.l.b16 %v3519
          %v3690 = vunpack.c.l.b16 %v3520
          %v3691 = vunpack.c.h.b16 %v3520
          %v3692 = vunpack.c.l.b16 %v3521
          %v3693 = vunpack.c.l.b16 %v3522
          %v3694 = vunpack.c.h.b16 %v3522
          %v3695 = vunpack.c.l.b16 %v3523
          %v3696 = vunpack.c.l.b16 %v3524
          %v3697 = vunpack.c.h.b16 %v3524
          %v3698 = vunpack.c.l.b16 %v3525
          %v3699 = vunpack.c.l.b16 %v3526
          %v3700 = vunpack.c.h.b16 %v3526
          %v3701 = vunpack.c.l.b16 %v3527
          %v3702 = vunpack.c.l.b16 %v3528
          %v3703 = vunpack.c.h.b16 %v3528
          %v3704 = vunpack.c.l.b16 %v3529
          %v3705 = vunpack.c.l.b16 %v3530
          %v3706 = vunpack.c.h.b16 %v3530
          %v3707 = vunpack.c.l.b16 %v3531
          %v3708 = vunpack.c.l.b16 %v3532
          %v3709 = vunpack.c.h.b16 %v3532
          %v3710 = vunpack.c.l.b16 %v3533
          %v3711 = vpack.c.b16 %v3618, %v3615
          %v3712 = vpack.c.b16 %v3619, %v3616
          %v3713 = vpack.c.b16 %v3620, %v3617
          %v3714 = vpack.c.b16 %v3624, %v3621
          %v3715 = vpack.c.b16 %v3625, %v3622
          %v3716 = vpack.c.b16 %v3626, %v3623
          %v3717 = vpack.c.b16 %v3630, %v3627
          %v3718 = vpack.c.b16 %v3631, %v3628
          %v3719 = vpack.c.b16 %v3632, %v3629
          %v3720 = vpack.c.b16 %v3636, %v3633
          %v3721 = vpack.c.b16 %v3637, %v3634
          %v3722 = vpack.c.b16 %v3638, %v3635
          %v3723 = vpack.c.b16 %v3642, %v3639
          %v3724 = vpack.c.b16 %v3643, %v3640
          %v3725 = vpack.c.b16 %v3644, %v3641
          %v3726 = vpack.c.b16 %v3648, %v3645
          %v3727 = vpack.c.b16 %v3649, %v3646
          %v3728 = vpack.c.b16 %v3650, %v3647
          %v3729 = vpack.c.b16 %v3654, %v3651
          %v3730 = vpack.c.b16 %v3655, %v3652
          %v3731 = vpack.c.b16 %v3656, %v3653
          %v3732 = vpack.c.b16 %v3660, %v3657
          %v3733 = vpack.c.b16 %v3661, %v3658
          %v3734 = vpack.c.b16 %v3662, %v3659
          %v3735 = vpack.c.b16 %v3666, %v3663
          %v3736 = vpack.c.b16 %v3667, %v3664
          %v3737 = vpack.c.b16 %v3668, %v3665
          %v3738 = vpack.c.b16 %v3672, %v3669
          %v3739 = vpack.c.b16 %v3673, %v3670
          %v3740 = vpack.c.b16 %v3674, %v3671
          %v3741 = vpack.c.b16 %v3678, %v3675
          %v3742 = vpack.c.b16 %v3679, %v3676
          %v3743 = vpack.c.b16 %v3680, %v3677
          %v3744 = vpack.c.b16 %v3684, %v3681
          %v3745 = vpack.c.b16 %v3685, %v3682
          %v3746 = vpack.c.b16 %v3686, %v3683
          %v3747 = vpack.c.b16 %v3690, %v3687
          %v3748 = vpack.c.b16 %v3691, %v3688
          %v3749 = vpack.c.b16 %v3692, %v3689
          %v3750 = vpack.c.b16 %v3696, %v3693
          %v3751 = vpack.c.b16 %v3697, %v3694
          %v3752 = vpack.c.b16 %v3698, %v3695
          %v3753 = vpack.c.b16 %v3702, %v3699
          %v3754 = vpack.c.b16 %v3703, %v3700
          %v3755 = vpack.c.b16 %v3704, %v3701
          %v3756 = vpack.c.b16 %v3708, %v3705
          %v3757 = vpack.c.b16 %v3709, %v3706
          %v3758 = vpack.c.b16 %v3710, %v3707
          %3807 = vmatprep.subr.bf16.mxu0 %v3712
          %3808 = vmatpush1.bf16.msra.mxu0 %v3711
          %3809 = vmatprep.subr.bf16.mxu0 %v3715
          %3810 = vmatpush1.bf16.msra.mxu0 %v3714
          %3811 = vmatprep.subr.bf16.mxu0 %v3718
          %3812 = vmatpush1.bf16.msra.mxu0 %v3717
          %3813 = vmatprep.subr.bf16.mxu0 %v3721
          %3814 = vmatpush1.bf16.msra.mxu0 %v3720
          %3815 = vmatprep.subr.bf16.mxu0 %v3724
          %3816 = vmatpush1.bf16.msra.mxu0 %v3723
          %3817 = vmatprep.subr.bf16.mxu0 %v3727
          %3818 = vmatpush1.bf16.msra.mxu0 %v3726
          %3819 = vmatprep.subr.bf16.mxu0 %v3730
          %3820 = vmatpush1.bf16.msra.mxu0 %v3729
          %3821 = vmatprep.subr.bf16.mxu0 %v3733
          %3822 = vmatpush1.bf16.msra.mxu0 %v3732
          %3823 = vmatprep.subr.bf16.mxu0 %v3736
          %3824 = vmatpush1.bf16.msra.mxu0 %v3735
          %3825 = vmatprep.subr.bf16.mxu0 %v3739
          %3826 = vmatpush1.bf16.msra.mxu0 %v3738
          %3827 = vmatprep.subr.bf16.mxu0 %v3742
          %3828 = vmatpush1.bf16.msra.mxu0 %v3741
          %3829 = vmatprep.subr.bf16.mxu0 %v3745
          %3830 = vmatpush1.bf16.msra.mxu0 %v3744
          %3831 = vmatprep.subr.bf16.mxu0 %v3748
          %3832 = vmatpush1.bf16.msra.mxu0 %v3747
          %3833 = vmatprep.subr.bf16.mxu0 %v3751
          %3834 = vmatpush1.bf16.msra.mxu0 %v3750
          %3835 = vmatprep.subr.bf16.mxu0 %v3754
          %3836 = vmatpush1.bf16.msra.mxu0 %v3753
          %3837 = vmatprep.subr.bf16.mxu0 %v3757
          %3838 = vmatpush1.bf16.msra.mxu0 %v3756
          %3839 = vmatprep.mubr.bf16.mxu0 %v3439
          %3840 = vmatmul.mubr.bf16.gmra.mrb[0].mxu0 %v3438
          %v3841 = vpop.f32.mrb[0].mxu0
          %v3842 = vadd.f32 %v3539, %v3841
          %v3843 = vpop.f32.mrb[0].mxu0
          %v3844 = vadd.f32 %v3543, %v3843
          %v3845 = vpop.f32.mrb[0].mxu0
          %v3846 = vadd.f32 %v3539, %v3845
          %v3847 = vpop.f32.mrb[0].mxu0
          %v3848 = vadd.f32 %v3543, %v3847
          %3849 = vmatprep.mubr.bf16.mxu0 %v3441
          %3850 = vmatmul.mubr.bf16.gmra.mrb[0].mxu0 %v3440
          %v3851 = vpop.f32.mrb[0].mxu0
          %v3852 = vadd.f32 %v3539, %v3851
          %v3853 = vpop.f32.mrb[0].mxu0
          %v3854 = vadd.f32 %v3543, %v3853
          %v3855 = vpop.f32.mrb[0].mxu0
          %v3856 = vadd.f32 %v3539, %v3855
          %v3857 = vpop.f32.mrb[0].mxu0
          %v3858 = vadd.f32 %v3543, %v3857
          %3859 = vmatprep.mubr.bf16.mxu0 %v3443
          %3860 = vmatmul.mubr.bf16.gmra.mrb[0].mxu0 %v3442
          %v3861 = vpop.f32.mrb[0].mxu0
          %v3862 = vadd.f32 %v3539, %v3861
          %v3863 = vpop.f32.mrb[0].mxu0
          %v3864 = vadd.f32 %v3543, %v3863
          %v3865 = vpop.f32.mrb[0].mxu0
          %v3866 = vadd.f32 %v3539, %v3865
          %v3867 = vpop.f32.mrb[0].mxu0
          %v3868 = vadd.f32 %v3543, %v3867
          %3869 = vmatprep.mubr.bf16.mxu0 %v3445
          %3870 = vmatmul.mubr.bf16.gmra.mrb[0].mxu0 %v3444
          %v3871 = vpop.f32.mrb[0].mxu0
          %v3872 = vadd.f32 %v3539, %v3871
          %v3873 = vpop.f32.mrb[0].mxu0
          %v3874 = vadd.f32 %v3543, %v3873
          %v3875 = vpop.f32.mrb[0].mxu0
          %v3876 = vadd.f32 %v3539, %v3875
          %v3877 = vpop.f32.mrb[0].mxu0
          %v3878 = vadd.f32 %v3543, %v3877
          %3879 = vmatprep.mubr.bf16.mxu0 %v3447
          %3880 = vmatmul.mubr.bf16.gmra.mrb[0].mxu0 %v3446
          %v3881 = vpop.f32.mrb[0].mxu0
          %v3882 = vadd.f32 %v3539, %v3881
          %v3883 = vpop.f32.mrb[0].mxu0
          %v3884 = vadd.f32 %v3543, %v3883
          %v3885 = vpop.f32.mrb[0].mxu0
          %v3886 = vadd.f32 %v3539, %v3885
          %v3887 = vpop.f32.mrb[0].mxu0
          %v3888 = vadd.f32 %v3543, %v3887
          %3889 = vmatprep.mubr.bf16.mxu0 %v3449
          %3890 = vmatmul.mubr.bf16.gmra.mrb[0].mxu0 %v3448
          %v3891 = vpop.f32.mrb[0].mxu0
          %v3892 = vadd.f32 %v3539, %v3891
          %v3893 = vpop.f32.mrb[0].mxu0
          %v3894 = vadd.f32 %v3543, %v3893
          %v3895 = vpop.f32.mrb[0].mxu0
          %v3896 = vadd.f32 %v3539, %v3895
          %v3897 = vpop.f32.mrb[0].mxu0
          %v3898 = vadd.f32 %v3543, %v3897
          %3899 = vmatprep.mubr.bf16.mxu0 %v3451
          %3900 = vmatmul.mubr.bf16.gmra.mrb[0].mxu0 %v3450
          %v3901 = vpop.f32.mrb[0].mxu0
          %v3902 = vadd.f32 %v3539, %v3901
          %v3903 = vpop.f32.mrb[0].mxu0
          %v3904 = vadd.f32 %v3543, %v3903
          %v3905 = vpop.f32.mrb[0].mxu0
          %v3906 = vadd.f32 %v3539, %v3905
          %v3907 = vpop.f32.mrb[0].mxu0
          %v3908 = vadd.f32 %v3543, %v3907
          %3909 = vmatprep.mubr.bf16.mxu0 %v3453
          %3910 = vmatmul.mubr.bf16.gmra.mrb[0].mxu0 %v3452
          %v3911 = vpop.f32.mrb[0].mxu0
          %v3912 = vadd.f32 %v3539, %v3911
          %v3913 = vpop.f32.mrb[0].mxu0
          %v3914 = vadd.f32 %v3543, %v3913
          %v3915 = vpop.f32.mrb[0].mxu0
          %v3916 = vadd.f32 %v3539, %v3915
          %v3917 = vpop.f32.mrb[0].mxu0
          %v3918 = vadd.f32 %v3543, %v3917
          %3919 = vmatprep.mubr.bf16.mxu0 %v3455
          %3920 = vmatmul.mubr.bf16.gmra.mrb[0].mxu0 %v3454
          %v3921 = vpop.f32.mrb[0].mxu0
          %v3922 = vadd.f32 %v3539, %v3921
          %v3923 = vpop.f32.mrb[0].mxu0
          %v3924 = vadd.f32 %v3543, %v3923
          %v3925 = vpop.f32.mrb[0].mxu0
          %v3926 = vadd.f32 %v3539, %v3925
          %v3927 = vpop.f32.mrb[0].mxu0
          %v3928 = vadd.f32 %v3543, %v3927
          %3929 = vmatprep.mubr.bf16.mxu0 %v3457
          %3930 = vmatmul.mubr.bf16.gmra.mrb[0].mxu0 %v3456
          %v3931 = vpop.f32.mrb[0].mxu0
          %v3932 = vadd.f32 %v3539, %v3931
          %v3933 = vpop.f32.mrb[0].mxu0
          %v3934 = vadd.f32 %v3543, %v3933
          %v3935 = vpop.f32.mrb[0].mxu0
          %v3936 = vadd.f32 %v3539, %v3935
          %v3937 = vpop.f32.mrb[0].mxu0
          %v3938 = vadd.f32 %v3543, %v3937
          %3939 = vmatprep.mubr.bf16.mxu0 %v3459
          %3940 = vmatmul.mubr.bf16.gmra.mrb[0].mxu0 %v3458
          %v3941 = vpop.f32.mrb[0].mxu0
          %v3942 = vadd.f32 %v3539, %v3941
          %v3943 = vpop.f32.mrb[0].mxu0
          %v3944 = vadd.f32 %v3543, %v3943
          %v3945 = vpop.f32.mrb[0].mxu0
          %v3946 = vadd.f32 %v3539, %v3945
          %v3947 = vpop.f32.mrb[0].mxu0
          %v3948 = vadd.f32 %v3543, %v3947
          %3949 = vmatprep.mubr.bf16.mxu0 %v3461
          %3950 = vmatmul.mubr.bf16.gmra.mrb[0].mxu0 %v3460
          %v3951 = vpop.f32.mrb[0].mxu0
          %v3952 = vadd.f32 %v3539, %v3951
          %v3953 = vpop.f32.mrb[0].mxu0
          %v3954 = vadd.f32 %v3543, %v3953
          %v3955 = vpop.f32.mrb[0].mxu0
          %v3956 = vadd.f32 %v3539, %v3955
          %v3957 = vpop.f32.mrb[0].mxu0
          %v3958 = vadd.f32 %v3543, %v3957
          %3959 = vmatprep.mubr.bf16.mxu0 %v3463
          %3960 = vmatmul.mubr.bf16.gmra.mrb[0].mxu0 %v3462
          %v3961 = vpop.f32.mrb[0].mxu0
          %v3962 = vadd.f32 %v3539, %v3961
          %v3963 = vpop.f32.mrb[0].mxu0
          %v3964 = vadd.f32 %v3543, %v3963
          %v3965 = vpop.f32.mrb[0].mxu0
          %v3966 = vadd.f32 %v3539, %v3965
          %v3967 = vpop.f32.mrb[0].mxu0
          %v3968 = vadd.f32 %v3543, %v3967
          %3969 = vmatprep.mubr.bf16.mxu0 %v3465
          %3970 = vmatmul.mubr.bf16.gmra.mrb[0].mxu0 %v3464
          %v3971 = vpop.f32.mrb[0].mxu0
          %v3972 = vadd.f32 %v3539, %v3971
          %v3973 = vpop.f32.mrb[0].mxu0
          %v3974 = vadd.f32 %v3543, %v3973
          %v3975 = vpop.f32.mrb[0].mxu0
          %v3976 = vadd.f32 %v3539, %v3975
          %v3977 = vpop.f32.mrb[0].mxu0
          %v3978 = vadd.f32 %v3543, %v3977
          %3979 = vmatprep.mubr.bf16.mxu0 %v3467
          %3980 = vmatmul.mubr.bf16.gmra.mrb[0].mxu0 %v3466
          %v3981 = vpop.f32.mrb[0].mxu0
          %v3982 = vadd.f32 %v3539, %v3981
          %v3983 = vpop.f32.mrb[0].mxu0
          %v3984 = vadd.f32 %v3543, %v3983
          %v3985 = vpop.f32.mrb[0].mxu0
          %v3986 = vadd.f32 %v3539, %v3985
          %v3987 = vpop.f32.mrb[0].mxu0
          %v3988 = vadd.f32 %v3543, %v3987
          %3989 = vmatprep.mubr.bf16.mxu0 %v3469
          %3990 = vmatmul.mubr.bf16.gmra.mrb[0].mxu0 %v3468
          %v3991 = vpop.f32.mrb[0].mxu0
          %v3992 = vadd.f32 %v3539, %v3991
          %v3993 = vpop.f32.mrb[0].mxu0
          %v3994 = vadd.f32 %v3543, %v3993
          %v3995 = vpop.f32.mrb[0].mxu0
          %v3996 = vadd.f32 %v3539, %v3995
          %v3997 = vpop.f32.mrb[0].mxu0
          %v3998 = vadd.f32 %v3543, %v3997
          %3999 = vdwg.mxu0
          %4000 = vmatprep.subr.bf16.mxu0 0
          %4001 = vmatpush1.bf16.msra.mxu0 %v3713
          %4002 = vmatprep.subr.bf16.mxu0 0
          %4003 = vmatpush1.bf16.msra.mxu0 %v3716
          %4004 = vmatprep.subr.bf16.mxu0 0
          %4005 = vmatpush1.bf16.msra.mxu0 %v3719
          %4006 = vmatprep.subr.bf16.mxu0 0
          %4007 = vmatpush1.bf16.msra.mxu0 %v3722
          %4008 = vmatprep.subr.bf16.mxu0 0
          %4009 = vmatpush1.bf16.msra.mxu0 %v3725
          %4010 = vmatprep.subr.bf16.mxu0 0
          %4011 = vmatpush1.bf16.msra.mxu0 %v3728
          %4012 = vmatprep.subr.bf16.mxu0 0
          %4013 = vmatpush1.bf16.msra.mxu0 %v3731
          %4014 = vmatprep.subr.bf16.mxu0 0
          %4015 = vmatpush1.bf16.msra.mxu0 %v3734
          %4016 = vmatprep.subr.bf16.mxu0 0
          %4017 = vmatpush1.bf16.msra.mxu0 %v3737
          %4018 = vmatprep.subr.bf16.mxu0 0
          %4019 = vmatpush1.bf16.msra.mxu0 %v3740
          %4020 = vmatprep.subr.bf16.mxu0 0
          %4021 = vmatpush1.bf16.msra.mxu0 %v3743
          %4022 = vmatprep.subr.bf16.mxu0 0
          %4023 = vmatpush1.bf16.msra.mxu0 %v3746
          %4024 = vmatprep.subr.bf16.mxu0 0
          %4025 = vmatpush1.bf16.msra.mxu0 %v3749
          %4026 = vmatprep.subr.bf16.mxu0 0
          %4027 = vmatpush1.bf16.msra.mxu0 %v3752
          %4028 = vmatprep.subr.bf16.mxu0 0
          %4029 = vmatpush1.bf16.msra.mxu0 %v3755
          %4030 = vmatprep.subr.bf16.mxu0 0
          %4031 = vmatpush1.bf16.msra.mxu0 %v3758
          %4032 = vmatprep.mubr.bf16.mxu0 %v3439
          %4033 = vmatmul.mubr.bf16.gmra.mrb[0].mxu0 %v3438
          %v4034 = vpop.f32.mrb[0].mxu0
          %v4035 = vadd.f32 %v3547, %v4034
          %v4036 = vpop.f32.mrb[0].mxu0
          %v4037 = vpop.f32.mrb[0].mxu0
          %v4038 = vadd.f32 %v3547, %v4037
          %v4039 = vpop.f32.mrb[0].mxu0
          %4040 = vmatprep.mubr.bf16.mxu0 %v3441
          %4041 = vmatmul.mubr.bf16.gmra.mrb[0].mxu0 %v3440
          %v4042 = vpop.f32.mrb[0].mxu0
          %v4043 = vadd.f32 %v3547, %v4042
          %v4044 = vpop.f32.mrb[0].mxu0
          %v4045 = vpop.f32.mrb[0].mxu0
          %v4046 = vadd.f32 %v3547, %v4045
          %v4047 = vpop.f32.mrb[0].mxu0
          %4048 = vmatprep.mubr.bf16.mxu0 %v3443
          %4049 = vmatmul.mubr.bf16.gmra.mrb[0].mxu0 %v3442
          %v4050 = vpop.f32.mrb[0].mxu0
          %v4051 = vadd.f32 %v3547, %v4050
          %v4052 = vpop.f32.mrb[0].mxu0
          %v4053 = vpop.f32.mrb[0].mxu0
          %v4054 = vadd.f32 %v3547, %v4053
          %v4055 = vpop.f32.mrb[0].mxu0
          %4056 = vmatprep.mubr.bf16.mxu0 %v3445
          %4057 = vmatmul.mubr.bf16.gmra.mrb[0].mxu0 %v3444
          %v4058 = vpop.f32.mrb[0].mxu0
          %v4059 = vadd.f32 %v3547, %v4058
          %v4060 = vpop.f32.mrb[0].mxu0
          %v4061 = vpop.f32.mrb[0].mxu0
          %v4062 = vadd.f32 %v3547, %v4061
          %v4063 = vpop.f32.mrb[0].mxu0
          %4064 = vmatprep.mubr.bf16.mxu0 %v3447
          %4065 = vmatmul.mubr.bf16.gmra.mrb[0].mxu0 %v3446
          %v4066 = vpop.f32.mrb[0].mxu0
          %v4067 = vadd.f32 %v3547, %v4066
          %v4068 = vpop.f32.mrb[0].mxu0
          %v4069 = vpop.f32.mrb[0].mxu0
          %v4070 = vadd.f32 %v3547, %v4069
          %v4071 = vpop.f32.mrb[0].mxu0
          %4072 = vmatprep.mubr.bf16.mxu0 %v3449
          %4073 = vmatmul.mubr.bf16.gmra.mrb[0].mxu0 %v3448
          %v4074 = vpop.f32.mrb[0].mxu0
          %v4075 = vadd.f32 %v3547, %v4074
          %v4076 = vpop.f32.mrb[0].mxu0
          %v4077 = vpop.f32.mrb[0].mxu0
          %v4078 = vadd.f32 %v3547, %v4077
          %v4079 = vpop.f32.mrb[0].mxu0
          %4080 = vmatprep.mubr.bf16.mxu0 %v3451
          %4081 = vmatmul.mubr.bf16.gmra.mrb[0].mxu0 %v3450
          %v4082 = vpop.f32.mrb[0].mxu0
          %v4083 = vadd.f32 %v3547, %v4082
          %v4084 = vpop.f32.mrb[0].mxu0
          %v4085 = vpop.f32.mrb[0].mxu0
          %v4086 = vadd.f32 %v3547, %v4085
          %v4087 = vpop.f32.mrb[0].mxu0
          %4088 = vmatprep.mubr.bf16.mxu0 %v3453
          %4089 = vmatmul.mubr.bf16.gmra.mrb[0].mxu0 %v3452
          %v4090 = vpop.f32.mrb[0].mxu0
          %v4091 = vadd.f32 %v3547, %v4090
          %v4092 = vpop.f32.mrb[0].mxu0
          %v4093 = vpop.f32.mrb[0].mxu0
          %v4094 = vadd.f32 %v3547, %v4093
          %v4095 = vpop.f32.mrb[0].mxu0
          %4096 = vmatprep.mubr.bf16.mxu0 %v3455
          %4097 = vmatmul.mubr.bf16.gmra.mrb[0].mxu0 %v3454
          %v4098 = vpop.f32.mrb[0].mxu0
          %v4099 = vadd.f32 %v3547, %v4098
          %v4100 = vpop.f32.mrb[0].mxu0
          %v4101 = vpop.f32.mrb[0].mxu0
          %v4102 = vadd.f32 %v3547, %v4101
          %v4103 = vpop.f32.mrb[0].mxu0
          %4104 = vmatprep.mubr.bf16.mxu0 %v3457
          %4105 = vmatmul.mubr.bf16.gmra.mrb[0].mxu0 %v3456
          %v4106 = vpop.f32.mrb[0].mxu0
          %v4107 = vadd.f32 %v3547, %v4106
          %v4108 = vpop.f32.mrb[0].mxu0
          %v4109 = vpop.f32.mrb[0].mxu0
          %v4110 = vadd.f32 %v3547, %v4109
          %v4111 = vpop.f32.mrb[0].mxu0
          %4112 = vmatprep.mubr.bf16.mxu0 %v3459
          %4113 = vmatmul.mubr.bf16.gmra.mrb[0].mxu0 %v3458
          %v4114 = vpop.f32.mrb[0].mxu0
          %v4115 = vadd.f32 %v3547, %v4114
          %v4116 = vpop.f32.mrb[0].mxu0
          %v4117 = vpop.f32.mrb[0].mxu0
          %v4118 = vadd.f32 %v3547, %v4117
          %v4119 = vpop.f32.mrb[0].mxu0
          %4120 = vmatprep.mubr.bf16.mxu0 %v3461
          %4121 = vmatmul.mubr.bf16.gmra.mrb[0].mxu0 %v3460
          %v4122 = vpop.f32.mrb[0].mxu0
          %v4123 = vadd.f32 %v3547, %v4122
          %v4124 = vpop.f32.mrb[0].mxu0
          %v4125 = vpop.f32.mrb[0].mxu0
          %v4126 = vadd.f32 %v3547, %v4125
          %v4127 = vpop.f32.mrb[0].mxu0
          %4128 = vmatprep.mubr.bf16.mxu0 %v3463
          %4129 = vmatmul.mubr.bf16.gmra.mrb[0].mxu0 %v3462
          %v4130 = vpop.f32.mrb[0].mxu0
          %v4131 = vadd.f32 %v3547, %v4130
          %v4132 = vpop.f32.mrb[0].mxu0
          %v4133 = vpop.f32.mrb[0].mxu0
          %v4134 = vadd.f32 %v3547, %v4133
          %v4135 = vpop.f32.mrb[0].mxu0
          %4136 = vmatprep.mubr.bf16.mxu0 %v3465
          %4137 = vmatmul.mubr.bf16.gmra.mrb[0].mxu0 %v3464
          %v4138 = vpop.f32.mrb[0].mxu0
          %v4139 = vadd.f32 %v3547, %v4138
          %v4140 = vpop.f32.mrb[0].mxu0
          %v4141 = vpop.f32.mrb[0].mxu0
          %v4142 = vadd.f32 %v3547, %v4141
          %v4143 = vpop.f32.mrb[0].mxu0
          %4144 = vmatprep.mubr.bf16.mxu0 %v3467
          %4145 = vmatmul.mubr.bf16.gmra.mrb[0].mxu0 %v3466
          %v4146 = vpop.f32.mrb[0].mxu0
          %v4147 = vadd.f32 %v3547, %v4146
          %v4148 = vpop.f32.mrb[0].mxu0
          %v4149 = vpop.f32.mrb[0].mxu0
          %v4150 = vadd.f32 %v3547, %v4149
          %v4151 = vpop.f32.mrb[0].mxu0
          %4152 = vmatprep.mubr.bf16.mxu0 %v3469
          %4153 = vmatmul.mubr.bf16.gmra.mrb[0].mxu0 %v3468
          %v4154 = vpop.f32.mrb[0].mxu0
          %v4155 = vadd.f32 %v3547, %v4154
          %v4156 = vpop.f32.mrb[0].mxu0
          %v4157 = vpop.f32.mrb[0].mxu0
          %v4158 = vadd.f32 %v3547, %v4157
          %v4159 = vpop.f32.mrb[0].mxu0
          %4160 = vdwg.mxu0
          %v4161 = vld [vmem:[%s545] sm:$0xff]
          %v4162 = vld [vmem:[%s545 + $0x8] sm:$0xf]
          %v4163 = vld [vmem:[%s545 + $0xc] sm:$0xff]
          %v4164 = vld [vmem:[%s545 + $0x14] sm:$0xf]
          %v4165 = vld [vmem:[%s545 + $0x18] sm:$0xff]
          %v4166 = vld [vmem:[%s545 + $0x20] sm:$0xf]
          %v4167 = vld [vmem:[%s545 + $0x24] sm:$0xff]
          %v4168 = vld [vmem:[%s545 + $0x2c] sm:$0xf]
          %v4169 = vld [vmem:[%s545 + $0x30] sm:$0xff]
          %v4170 = vld [vmem:[%s545 + $0x38] sm:$0xf]
          %v4171 = vld [vmem:[%s545 + $0x3c] sm:$0xff]
          %v4172 = vld [vmem:[%s545 + $0x44] sm:$0xf]
          %v4173 = vld [vmem:[%s545 + $0x48] sm:$0xff]
          %v4174 = vld [vmem:[%s545 + $0x50] sm:$0xf]
          %v4175 = vld [vmem:[%s545 + $0x54] sm:$0xff]
          %v4176 = vld [vmem:[%s545 + $0x5c] sm:$0xf]
          %v4177 = vld [vmem:[%s545 + $0x60] sm:$0xff]
          %v4178 = vld [vmem:[%s545 + $0x68] sm:$0xf]
          %v4179 = vld [vmem:[%s545 + $0x6c] sm:$0xff]
          %v4180 = vld [vmem:[%s545 + $0x74] sm:$0xf]
          %v4181 = vld [vmem:[%s545 + $0x78] sm:$0xff]
          %v4182 = vld [vmem:[%s545 + $0x80] sm:$0xf]
          %v4183 = vld [vmem:[%s545 + $0x84] sm:$0xff]
          %v4184 = vld [vmem:[%s545 + $0x8c] sm:$0xf]
          %v4185 = vld [vmem:[%s545 + $0x90] sm:$0xff]
          %v4186 = vld [vmem:[%s545 + $0x98] sm:$0xf]
          %v4187 = vld [vmem:[%s545 + $0x9c] sm:$0xff]
          %v4188 = vld [vmem:[%s545 + $0xa4] sm:$0xf]
          %v4189 = vld [vmem:[%s545 + $0xa8] sm:$0xff]
          %v4190 = vld [vmem:[%s545 + $0xb0] sm:$0xf]
          %v4191 = vld [vmem:[%s545 + $0xb4] sm:$0xff]
          %v4192 = vld [vmem:[%s545 + $0xbc] sm:$0xf]
          %v4193 = vld [vmem:[%s628] sm:$0x7]
          %v4195 = vlaneseq
          %v4196 = vshrl.u32 %v4195, 7
          %v4197 = vsub.s32 0, %v4196
          %v4198 = vrot.slane %v4193, %v4197
          %v4199 = vlaneseq
          %v4200 = vshrl.u32 %v4199, 7
          %v4201 = vsub.s32 1, %v4200
          %v4202 = vrot.slane %v4193, %v4201
          %v4203 = vlaneseq
          %v4204 = vshrl.u32 %v4203, 7
          %v4205 = vsub.s32 2, %v4204
          %v4206 = vrot.slane %v4193, %v4205
          %v4242 = vunpack.c.l.b16 %v4161
          %v4243 = vunpack.c.h.b16 %v4161
          %v4244 = vunpack.c.l.b16 %v4162
          %v4245 = vunpack.c.l.b16 %v4163
          %v4246 = vunpack.c.h.b16 %v4163
          %v4247 = vunpack.c.l.b16 %v4164
          %v4248 = vunpack.c.l.b16 %v4165
          %v4249 = vunpack.c.h.b16 %v4165
          %v4250 = vunpack.c.l.b16 %v4166
          %v4251 = vunpack.c.l.b16 %v4167
          %v4252 = vunpack.c.h.b16 %v4167
          %v4253 = vunpack.c.l.b16 %v4168
          %v4254 = vunpack.c.l.b16 %v4169
          %v4255 = vunpack.c.h.b16 %v4169
          %v4256 = vunpack.c.l.b16 %v4170
          %v4257 = vunpack.c.l.b16 %v4171
          %v4258 = vunpack.c.h.b16 %v4171
          %v4259 = vunpack.c.l.b16 %v4172
          %v4260 = vunpack.c.l.b16 %v4173
          %v4261 = vunpack.c.h.b16 %v4173
          %v4262 = vunpack.c.l.b16 %v4174
          %v4263 = vunpack.c.l.b16 %v4175
          %v4264 = vunpack.c.h.b16 %v4175
          %v4265 = vunpack.c.l.b16 %v4176
          %v4266 = vunpack.c.l.b16 %v4177
          %v4267 = vunpack.c.h.b16 %v4177
          %v4268 = vunpack.c.l.b16 %v4178
          %v4269 = vunpack.c.l.b16 %v4179
          %v4270 = vunpack.c.h.b16 %v4179
          %v4271 = vunpack.c.l.b16 %v4180
          %v4272 = vunpack.c.l.b16 %v4181
          %v4273 = vunpack.c.h.b16 %v4181
          %v4274 = vunpack.c.l.b16 %v4182
          %v4275 = vunpack.c.l.b16 %v4183
          %v4276 = vunpack.c.h.b16 %v4183
          %v4277 = vunpack.c.l.b16 %v4184
          %v4278 = vunpack.c.l.b16 %v4185
          %v4279 = vunpack.c.h.b16 %v4185
          %v4280 = vunpack.c.l.b16 %v4186
          %v4281 = vunpack.c.l.b16 %v4187
          %v4282 = vunpack.c.h.b16 %v4187
          %v4283 = vunpack.c.l.b16 %v4188
          %v4284 = vunpack.c.l.b16 %v4189
          %v4285 = vunpack.c.h.b16 %v4189
          %v4286 = vunpack.c.l.b16 %v4190
          %v4287 = vunpack.c.l.b16 %v4191
          %v4288 = vunpack.c.h.b16 %v4191
          %v4289 = vunpack.c.l.b16 %v4192
          %v4290 = vpack.c.b16 %v4245, %v4242
          %v4291 = vpack.c.b16 %v4246, %v4243
          %v4292 = vpack.c.b16 %v4247, %v4244
          %v4293 = vpack.c.b16 %v4251, %v4248
          %v4294 = vpack.c.b16 %v4252, %v4249
          %v4295 = vpack.c.b16 %v4253, %v4250
          %v4296 = vpack.c.b16 %v4257, %v4254
          %v4297 = vpack.c.b16 %v4258, %v4255
          %v4298 = vpack.c.b16 %v4259, %v4256
          %v4299 = vpack.c.b16 %v4263, %v4260
          %v4300 = vpack.c.b16 %v4264, %v4261
          %v4301 = vpack.c.b16 %v4265, %v4262
          %v4302 = vpack.c.b16 %v4269, %v4266
          %v4303 = vpack.c.b16 %v4270, %v4267
          %v4304 = vpack.c.b16 %v4271, %v4268
          %v4305 = vpack.c.b16 %v4275, %v4272
          %v4306 = vpack.c.b16 %v4276, %v4273
          %v4307 = vpack.c.b16 %v4277, %v4274
          %v4308 = vpack.c.b16 %v4281, %v4278
          %v4309 = vpack.c.b16 %v4282, %v4279
          %v4310 = vpack.c.b16 %v4283, %v4280
          %v4311 = vpack.c.b16 %v4287, %v4284
          %v4312 = vpack.c.b16 %v4288, %v4285
          %v4313 = vpack.c.b16 %v4289, %v4286
          %4338 = vmatprep.subr.bf16.mxu0 %v4291
          %4339 = vmatpush1.bf16.msra.mxu0 %v4290
          %4340 = vmatprep.subr.bf16.mxu0 %v4294
          %4341 = vmatpush1.bf16.msra.mxu0 %v4293
          %4342 = vmatprep.subr.bf16.mxu0 %v4297
          %4343 = vmatpush1.bf16.msra.mxu0 %v4296
          %4344 = vmatprep.subr.bf16.mxu0 %v4300
          %4345 = vmatpush1.bf16.msra.mxu0 %v4299
          %4346 = vmatprep.subr.bf16.mxu0 %v4303
          %4347 = vmatpush1.bf16.msra.mxu0 %v4302
          %4348 = vmatprep.subr.bf16.mxu0 %v4306
          %4349 = vmatpush1.bf16.msra.mxu0 %v4305
          %4350 = vmatprep.subr.bf16.mxu0 %v4309
          %4351 = vmatpush1.bf16.msra.mxu0 %v4308
          %4352 = vmatprep.subr.bf16.mxu0 %v4312
          %4353 = vmatpush1.bf16.msra.mxu0 %v4311
          %4354 = vmatprep.subr.bf16.mxu0 0
          %4355 = vmatpush1.bf16.msra.mxu0 0
          %4356 = vmatprep.subr.bf16.mxu0 0
          %4357 = vmatpush1.bf16.msra.mxu0 0
          %4358 = vmatprep.subr.bf16.mxu0 0
          %4359 = vmatpush1.bf16.msra.mxu0 0
          %4360 = vmatprep.subr.bf16.mxu0 0
          %4361 = vmatpush1.bf16.msra.mxu0 0
          %4362 = vmatprep.subr.bf16.mxu0 0
          %4363 = vmatpush1.bf16.msra.mxu0 0
          %4364 = vmatprep.subr.bf16.mxu0 0
          %4365 = vmatpush1.bf16.msra.mxu0 0
          %4366 = vmatprep.subr.bf16.mxu0 0
          %4367 = vmatpush1.bf16.msra.mxu0 0
          %4368 = vmatprep.subr.bf16.mxu0 0
          %4369 = vmatpush1.bf16.msra.mxu0 0
          %4370 = vmatprep.mubr.bf16.mxu0 0
          %4371 = vmatmul.mubr.bf16.gmra.mrb[0].mxu0 %v799
          %v4372 = vpop.f32.mrb[0].mxu0
          %v4373 = vadd.f32 %v4198, %v4372
          %v4374 = vpop.f32.mrb[0].mxu0
          %v4375 = vadd.f32 %v4202, %v4374
          %v4376 = vpop.f32.mrb[0].mxu0
          %v4377 = vadd.f32 %v4198, %v4376
          %v4378 = vpop.f32.mrb[0].mxu0
          %v4379 = vadd.f32 %v4202, %v4378
          %4380 = vmatprep.mubr.bf16.mxu0 0
          %4381 = vmatmul.mubr.bf16.gmra.mrb[0].mxu0 %v800
          %v4382 = vpop.f32.mrb[0].mxu0
          %v4383 = vadd.f32 %v4198, %v4382
          %v4384 = vpop.f32.mrb[0].mxu0
          %v4385 = vadd.f32 %v4202, %v4384
          %v4386 = vpop.f32.mrb[0].mxu0
          %v4387 = vadd.f32 %v4198, %v4386
          %v4388 = vpop.f32.mrb[0].mxu0
          %v4389 = vadd.f32 %v4202, %v4388
          %4390 = vmatprep.mubr.bf16.mxu0 0
          %4391 = vmatmul.mubr.bf16.gmra.mrb[0].mxu0 %v801
          %v4392 = vpop.f32.mrb[0].mxu0
          %v4393 = vadd.f32 %v4198, %v4392
          %v4394 = vpop.f32.mrb[0].mxu0
          %v4395 = vadd.f32 %v4202, %v4394
          %v4396 = vpop.f32.mrb[0].mxu0
          %v4397 = vadd.f32 %v4198, %v4396
          %v4398 = vpop.f32.mrb[0].mxu0
          %v4399 = vadd.f32 %v4202, %v4398
          %4400 = vmatprep.mubr.bf16.mxu0 0
          %4401 = vmatmul.mubr.bf16.gmra.mrb[0].mxu0 %v802
          %v4402 = vpop.f32.mrb[0].mxu0
          %v4403 = vadd.f32 %v4198, %v4402
          %v4404 = vpop.f32.mrb[0].mxu0
          %v4405 = vadd.f32 %v4202, %v4404
          %v4406 = vpop.f32.mrb[0].mxu0
          %v4407 = vadd.f32 %v4198, %v4406
          %v4408 = vpop.f32.mrb[0].mxu0
          %v4409 = vadd.f32 %v4202, %v4408
          %4410 = vmatprep.mubr.bf16.mxu0 0
          %4411 = vmatmul.mubr.bf16.gmra.mrb[0].mxu0 %v803
          %v4412 = vpop.f32.mrb[0].mxu0
          %v4413 = vadd.f32 %v4198, %v4412
          %v4414 = vpop.f32.mrb[0].mxu0
          %v4415 = vadd.f32 %v4202, %v4414
          %v4416 = vpop.f32.mrb[0].mxu0
          %v4417 = vadd.f32 %v4198, %v4416
          %v4418 = vpop.f32.mrb[0].mxu0
          %v4419 = vadd.f32 %v4202, %v4418
          %4420 = vmatprep.mubr.bf16.mxu0 0
          %4421 = vmatmul.mubr.bf16.gmra.mrb[0].mxu0 %v804
          %v4422 = vpop.f32.mrb[0].mxu0
          %v4423 = vadd.f32 %v4198, %v4422
          %v4424 = vpop.f32.mrb[0].mxu0
          %v4425 = vadd.f32 %v4202, %v4424
          %v4426 = vpop.f32.mrb[0].mxu0
          %v4427 = vadd.f32 %v4198, %v4426
          %v4428 = vpop.f32.mrb[0].mxu0
          %v4429 = vadd.f32 %v4202, %v4428
          %4430 = vmatprep.mubr.bf16.mxu0 0
          %4431 = vmatmul.mubr.bf16.gmra.mrb[0].mxu0 %v805
          %v4432 = vpop.f32.mrb[0].mxu0
          %v4433 = vadd.f32 %v4198, %v4432
          %v4434 = vpop.f32.mrb[0].mxu0
          %v4435 = vadd.f32 %v4202, %v4434
          %v4436 = vpop.f32.mrb[0].mxu0
          %v4437 = vadd.f32 %v4198, %v4436
          %v4438 = vpop.f32.mrb[0].mxu0
          %v4439 = vadd.f32 %v4202, %v4438
          %4440 = vmatprep.mubr.bf16.mxu0 0
          %4441 = vmatmul.mubr.bf16.gmra.mrb[0].mxu0 %v806
          %v4442 = vpop.f32.mrb[0].mxu0
          %v4443 = vadd.f32 %v4198, %v4442
          %v4444 = vpop.f32.mrb[0].mxu0
          %v4445 = vadd.f32 %v4202, %v4444
          %v4446 = vpop.f32.mrb[0].mxu0
          %v4447 = vadd.f32 %v4198, %v4446
          %v4448 = vpop.f32.mrb[0].mxu0
          %v4449 = vadd.f32 %v4202, %v4448
          %4450 = vmatprep.mubr.bf16.mxu0 0
          %4451 = vmatmul.mubr.bf16.gmra.mrb[0].mxu0 %v807
          %v4452 = vpop.f32.mrb[0].mxu0
          %v4453 = vadd.f32 %v4198, %v4452
          %v4454 = vpop.f32.mrb[0].mxu0
          %v4455 = vadd.f32 %v4202, %v4454
          %v4456 = vpop.f32.mrb[0].mxu0
          %v4457 = vadd.f32 %v4198, %v4456
          %v4458 = vpop.f32.mrb[0].mxu0
          %v4459 = vadd.f32 %v4202, %v4458
          %4460 = vmatprep.mubr.bf16.mxu0 0
          %4461 = vmatmul.mubr.bf16.gmra.mrb[0].mxu0 %v808
          %v4462 = vpop.f32.mrb[0].mxu0
          %v4463 = vadd.f32 %v4198, %v4462
          %v4464 = vpop.f32.mrb[0].mxu0
          %v4465 = vadd.f32 %v4202, %v4464
          %v4466 = vpop.f32.mrb[0].mxu0
          %v4467 = vadd.f32 %v4198, %v4466
          %v4468 = vpop.f32.mrb[0].mxu0
          %v4469 = vadd.f32 %v4202, %v4468
          %4470 = vmatprep.mubr.bf16.mxu0 0
          %4471 = vmatmul.mubr.bf16.gmra.mrb[0].mxu0 %v809
          %v4472 = vpop.f32.mrb[0].mxu0
          %v4473 = vadd.f32 %v4198, %v4472
          %v4474 = vpop.f32.mrb[0].mxu0
          %v4475 = vadd.f32 %v4202, %v4474
          %v4476 = vpop.f32.mrb[0].mxu0
          %v4477 = vadd.f32 %v4198, %v4476
          %v4478 = vpop.f32.mrb[0].mxu0
          %v4479 = vadd.f32 %v4202, %v4478
          %4480 = vmatprep.mubr.bf16.mxu0 0
          %4481 = vmatmul.mubr.bf16.gmra.mrb[0].mxu0 %v810
          %v4482 = vpop.f32.mrb[0].mxu0
          %v4483 = vadd.f32 %v4198, %v4482
          %v4484 = vpop.f32.mrb[0].mxu0
          %v4485 = vadd.f32 %v4202, %v4484
          %v4486 = vpop.f32.mrb[0].mxu0
          %v4487 = vadd.f32 %v4198, %v4486
          %v4488 = vpop.f32.mrb[0].mxu0
          %v4489 = vadd.f32 %v4202, %v4488
          %4490 = vmatprep.mubr.bf16.mxu0 0
          %4491 = vmatmul.mubr.bf16.gmra.mrb[0].mxu0 %v811
          %v4492 = vpop.f32.mrb[0].mxu0
          %v4493 = vadd.f32 %v4198, %v4492
          %v4494 = vpop.f32.mrb[0].mxu0
          %v4495 = vadd.f32 %v4202, %v4494
          %v4496 = vpop.f32.mrb[0].mxu0
          %v4497 = vadd.f32 %v4198, %v4496
          %v4498 = vpop.f32.mrb[0].mxu0
          %v4499 = vadd.f32 %v4202, %v4498
          %4500 = vmatprep.mubr.bf16.mxu0 0
          %4501 = vmatmul.mubr.bf16.gmra.mrb[0].mxu0 %v812
          %v4502 = vpop.f32.mrb[0].mxu0
          %v4503 = vadd.f32 %v4198, %v4502
          %v4504 = vpop.f32.mrb[0].mxu0
          %v4505 = vadd.f32 %v4202, %v4504
          %v4506 = vpop.f32.mrb[0].mxu0
          %v4507 = vadd.f32 %v4198, %v4506
          %v4508 = vpop.f32.mrb[0].mxu0
          %v4509 = vadd.f32 %v4202, %v4508
          %4510 = vmatprep.mubr.bf16.mxu0 0
          %4511 = vmatmul.mubr.bf16.gmra.mrb[0].mxu0 %v813
          %v4512 = vpop.f32.mrb[0].mxu0
          %v4513 = vadd.f32 %v4198, %v4512
          %v4514 = vpop.f32.mrb[0].mxu0
          %v4515 = vadd.f32 %v4202, %v4514
          %v4516 = vpop.f32.mrb[0].mxu0
          %v4517 = vadd.f32 %v4198, %v4516
          %v4518 = vpop.f32.mrb[0].mxu0
          %v4519 = vadd.f32 %v4202, %v4518
          %4520 = vmatprep.mubr.bf16.mxu0 0
          %4521 = vmatmul.mubr.bf16.gmra.mrb[0].mxu0 %v814
          %v4522 = vpop.f32.mrb[0].mxu0
          %v4523 = vadd.f32 %v4198, %v4522
          %v4524 = vpop.f32.mrb[0].mxu0
          %v4525 = vadd.f32 %v4202, %v4524
          %v4526 = vpop.f32.mrb[0].mxu0
          %v4527 = vadd.f32 %v4198, %v4526
          %v4528 = vpop.f32.mrb[0].mxu0
          %v4529 = vadd.f32 %v4202, %v4528
          %4530 = vdwg.mxu0
          %4531 = vmatprep.subr.bf16.mxu0 0
          %4532 = vmatpush1.bf16.msra.mxu0 %v4292
          %4533 = vmatprep.subr.bf16.mxu0 0
          %4534 = vmatpush1.bf16.msra.mxu0 %v4295
          %4535 = vmatprep.subr.bf16.mxu0 0
          %4536 = vmatpush1.bf16.msra.mxu0 %v4298
          %4537 = vmatprep.subr.bf16.mxu0 0
          %4538 = vmatpush1.bf16.msra.mxu0 %v4301
          %4539 = vmatprep.subr.bf16.mxu0 0
          %4540 = vmatpush1.bf16.msra.mxu0 %v4304
          %4541 = vmatprep.subr.bf16.mxu0 0
          %4542 = vmatpush1.bf16.msra.mxu0 %v4307
          %4543 = vmatprep.subr.bf16.mxu0 0
          %4544 = vmatpush1.bf16.msra.mxu0 %v4310
          %4545 = vmatprep.subr.bf16.mxu0 0
          %4546 = vmatpush1.bf16.msra.mxu0 %v4313
          %4547 = vmatprep.subr.bf16.mxu0 0
          %4548 = vmatpush1.bf16.msra.mxu0 0
          %4549 = vmatprep.subr.bf16.mxu0 0
          %4550 = vmatpush1.bf16.msra.mxu0 0
          %4551 = vmatprep.subr.bf16.mxu0 0
          %4552 = vmatpush1.bf16.msra.mxu0 0
          %4553 = vmatprep.subr.bf16.mxu0 0
          %4554 = vmatpush1.bf16.msra.mxu0 0
          %4555 = vmatprep.subr.bf16.mxu0 0
          %4556 = vmatpush1.bf16.msra.mxu0 0
          %4557 = vmatprep.subr.bf16.mxu0 0
          %4558 = vmatpush1.bf16.msra.mxu0 0
          %4559 = vmatprep.subr.bf16.mxu0 0
          %4560 = vmatpush1.bf16.msra.mxu0 0
          %4561 = vmatprep.subr.bf16.mxu0 0
          %4562 = vmatpush1.bf16.msra.mxu0 0
          %4563 = vmatprep.mubr.bf16.mxu0 0
          %4564 = vmatmul.mubr.bf16.gmra.mrb[0].mxu0 %v799
          %v4565 = vpop.f32.mrb[0].mxu0
          %v4566 = vadd.f32 %v4206, %v4565
          %v4567 = vpop.f32.mrb[0].mxu0
          %v4568 = vpop.f32.mrb[0].mxu0
          %v4569 = vadd.f32 %v4206, %v4568
          %v4570 = vpop.f32.mrb[0].mxu0
          %4571 = vmatprep.mubr.bf16.mxu0 0
          %4572 = vmatmul.mubr.bf16.gmra.mrb[0].mxu0 %v800
          %v4573 = vpop.f32.mrb[0].mxu0
          %v4574 = vadd.f32 %v4206, %v4573
          %v4575 = vpop.f32.mrb[0].mxu0
          %v4576 = vpop.f32.mrb[0].mxu0
          %v4577 = vadd.f32 %v4206, %v4576
          %v4578 = vpop.f32.mrb[0].mxu0
          %4579 = vmatprep.mubr.bf16.mxu0 0
          %4580 = vmatmul.mubr.bf16.gmra.mrb[0].mxu0 %v801
          %v4581 = vpop.f32.mrb[0].mxu0
          %v4582 = vadd.f32 %v4206, %v4581
          %v4583 = vpop.f32.mrb[0].mxu0
          %v4584 = vpop.f32.mrb[0].mxu0
          %v4585 = vadd.f32 %v4206, %v4584
          %v4586 = vpop.f32.mrb[0].mxu0
          %4587 = vmatprep.mubr.bf16.mxu0 0
          %4588 = vmatmul.mubr.bf16.gmra.mrb[0].mxu0 %v802
          %v4589 = vpop.f32.mrb[0].mxu0
          %v4590 = vadd.f32 %v4206, %v4589
          %v4591 = vpop.f32.mrb[0].mxu0
          %v4592 = vpop.f32.mrb[0].mxu0
          %v4593 = vadd.f32 %v4206, %v4592
          %v4594 = vpop.f32.mrb[0].mxu0
          %4595 = vmatprep.mubr.bf16.mxu0 0
          %4596 = vmatmul.mubr.bf16.gmra.mrb[0].mxu0 %v803
          %v4597 = vpop.f32.mrb[0].mxu0
          %v4598 = vadd.f32 %v4206, %v4597
          %v4599 = vpop.f32.mrb[0].mxu0
          %v4600 = vpop.f32.mrb[0].mxu0
          %v4601 = vadd.f32 %v4206, %v4600
          %v4602 = vpop.f32.mrb[0].mxu0
          %4603 = vmatprep.mubr.bf16.mxu0 0
          %4604 = vmatmul.mubr.bf16.gmra.mrb[0].mxu0 %v804
          %v4605 = vpop.f32.mrb[0].mxu0
          %v4606 = vadd.f32 %v4206, %v4605
          %v4607 = vpop.f32.mrb[0].mxu0
          %v4608 = vpop.f32.mrb[0].mxu0
          %v4609 = vadd.f32 %v4206, %v4608
          %v4610 = vpop.f32.mrb[0].mxu0
          %4611 = vmatprep.mubr.bf16.mxu0 0
          %4612 = vmatmul.mubr.bf16.gmra.mrb[0].mxu0 %v805
          %v4613 = vpop.f32.mrb[0].mxu0
          %v4614 = vadd.f32 %v4206, %v4613
          %v4615 = vpop.f32.mrb[0].mxu0
          %v4616 = vpop.f32.mrb[0].mxu0
          %v4617 = vadd.f32 %v4206, %v4616
          %v4618 = vpop.f32.mrb[0].mxu0
          %4619 = vmatprep.mubr.bf16.mxu0 0
          %4620 = vmatmul.mubr.bf16.gmra.mrb[0].mxu0 %v806
          %v4621 = vpop.f32.mrb[0].mxu0
          %v4622 = vadd.f32 %v4206, %v4621
          %v4623 = vpop.f32.mrb[0].mxu0
          %v4624 = vpop.f32.mrb[0].mxu0
          %v4625 = vadd.f32 %v4206, %v4624
          %v4626 = vpop.f32.mrb[0].mxu0
          %4627 = vmatprep.mubr.bf16.mxu0 0
          %4628 = vmatmul.mubr.bf16.gmra.mrb[0].mxu0 %v807
          %v4629 = vpop.f32.mrb[0].mxu0
          %v4630 = vadd.f32 %v4206, %v4629
          %v4631 = vpop.f32.mrb[0].mxu0
          %v4632 = vpop.f32.mrb[0].mxu0
          %v4633 = vadd.f32 %v4206, %v4632
          %v4634 = vpop.f32.mrb[0].mxu0
          %4635 = vmatprep.mubr.bf16.mxu0 0
          %4636 = vmatmul.mubr.bf16.gmra.mrb[0].mxu0 %v808
          %v4637 = vpop.f32.mrb[0].mxu0
          %v4638 = vadd.f32 %v4206, %v4637
          %v4639 = vpop.f32.mrb[0].mxu0
          %v4640 = vpop.f32.mrb[0].mxu0
          %v4641 = vadd.f32 %v4206, %v4640
          %v4642 = vpop.f32.mrb[0].mxu0
          %4643 = vmatprep.mubr.bf16.mxu0 0
          %4644 = vmatmul.mubr.bf16.gmra.mrb[0].mxu0 %v809
          %v4645 = vpop.f32.mrb[0].mxu0
          %v4646 = vadd.f32 %v4206, %v4645
          %v4647 = vpop.f32.mrb[0].mxu0
          %v4648 = vpop.f32.mrb[0].mxu0
          %v4649 = vadd.f32 %v4206, %v4648
          %v4650 = vpop.f32.mrb[0].mxu0
          %4651 = vmatprep.mubr.bf16.mxu0 0
          %4652 = vmatmul.mubr.bf16.gmra.mrb[0].mxu0 %v810
          %v4653 = vpop.f32.mrb[0].mxu0
          %v4654 = vadd.f32 %v4206, %v4653
          %v4655 = vpop.f32.mrb[0].mxu0
          %v4656 = vpop.f32.mrb[0].mxu0
          %v4657 = vadd.f32 %v4206, %v4656
          %v4658 = vpop.f32.mrb[0].mxu0
          %4659 = vmatprep.mubr.bf16.mxu0 0
          %4660 = vmatmul.mubr.bf16.gmra.mrb[0].mxu0 %v811
          %v4661 = vpop.f32.mrb[0].mxu0
          %v4662 = vadd.f32 %v4206, %v4661
          %v4663 = vpop.f32.mrb[0].mxu0
          %v4664 = vpop.f32.mrb[0].mxu0
          %v4665 = vadd.f32 %v4206, %v4664
          %v4666 = vpop.f32.mrb[0].mxu0
          %4667 = vmatprep.mubr.bf16.mxu0 0
          %4668 = vmatmul.mubr.bf16.gmra.mrb[0].mxu0 %v812
          %v4669 = vpop.f32.mrb[0].mxu0
          %v4670 = vadd.f32 %v4206, %v4669
          %v4671 = vpop.f32.mrb[0].mxu0
          %v4672 = vpop.f32.mrb[0].mxu0
          %v4673 = vadd.f32 %v4206, %v4672
          %v4674 = vpop.f32.mrb[0].mxu0
          %4675 = vmatprep.mubr.bf16.mxu0 0
          %4676 = vmatmul.mubr.bf16.gmra.mrb[0].mxu0 %v813
          %v4677 = vpop.f32.mrb[0].mxu0
          %v4678 = vadd.f32 %v4206, %v4677
          %v4679 = vpop.f32.mrb[0].mxu0
          %v4680 = vpop.f32.mrb[0].mxu0
          %v4681 = vadd.f32 %v4206, %v4680
          %v4682 = vpop.f32.mrb[0].mxu0
          %4683 = vmatprep.mubr.bf16.mxu0 0
          %4684 = vmatmul.mubr.bf16.gmra.mrb[0].mxu0 %v814
          %v4685 = vpop.f32.mrb[0].mxu0
          %v4686 = vadd.f32 %v4206, %v4685
          %v4687 = vpop.f32.mrb[0].mxu0
          %v4688 = vpop.f32.mrb[0].mxu0
          %v4689 = vadd.f32 %v4206, %v4688
          %v4690 = vpop.f32.mrb[0].mxu0
          %4691 = vdwg.mxu0
          %v4692 = vadd.f32 %v3842, %v4373
          %v4693 = vadd.f32 %v3846, %v4377
          %v4694 = vadd.f32 %v3852, %v4383
          %v4695 = vadd.f32 %v3856, %v4387
          %v4696 = vadd.f32 %v3862, %v4393
          %v4697 = vadd.f32 %v3866, %v4397
          %v4698 = vadd.f32 %v3872, %v4403
          %v4699 = vadd.f32 %v3876, %v4407
          %v4700 = vadd.f32 %v3882, %v4413
          %v4701 = vadd.f32 %v3886, %v4417
          %v4702 = vadd.f32 %v3892, %v4423
          %v4703 = vadd.f32 %v3896, %v4427
          %v4704 = vadd.f32 %v3902, %v4433
          %v4705 = vadd.f32 %v3906, %v4437
          %v4706 = vadd.f32 %v3912, %v4443
          %v4707 = vadd.f32 %v3916, %v4447
          %v4708 = vadd.f32 %v3922, %v4453
          %v4709 = vadd.f32 %v3926, %v4457
          %v4710 = vadd.f32 %v3932, %v4463
          %v4711 = vadd.f32 %v3936, %v4467
          %v4712 = vadd.f32 %v3942, %v4473
          %v4713 = vadd.f32 %v3946, %v4477
          %v4714 = vadd.f32 %v3952, %v4483
          %v4715 = vadd.f32 %v3956, %v4487
          %v4716 = vadd.f32 %v3962, %v4493
          %v4717 = vadd.f32 %v3966, %v4497
          %v4718 = vadd.f32 %v3972, %v4503
          %v4719 = vadd.f32 %v3976, %v4507
          %v4720 = vadd.f32 %v3982, %v4513
          %v4721 = vadd.f32 %v3986, %v4517
          %v4722 = vadd.f32 %v3992, %v4523
          %v4723 = vadd.f32 %v3996, %v4527
          %v4724 = vxor.u32 %v4692, 2147483648
          %v4725 = vxor.u32 %v4693, 2147483648
          %v4726 = vxor.u32 %v4694, 2147483648
          %v4727 = vxor.u32 %v4695, 2147483648
          %v4728 = vxor.u32 %v4696, 2147483648
          %v4729 = vxor.u32 %v4697, 2147483648
          %v4730 = vxor.u32 %v4698, 2147483648
          %v4731 = vxor.u32 %v4699, 2147483648
          %v4732 = vxor.u32 %v4700, 2147483648
          %v4733 = vxor.u32 %v4701, 2147483648
          %v4734 = vxor.u32 %v4702, 2147483648
          %v4735 = vxor.u32 %v4703, 2147483648
          %v4736 = vxor.u32 %v4704, 2147483648
          %v4737 = vxor.u32 %v4705, 2147483648
          %v4738 = vxor.u32 %v4706, 2147483648
          %v4739 = vxor.u32 %v4707, 2147483648
          %v4740 = vxor.u32 %v4708, 2147483648
          %v4741 = vxor.u32 %v4709, 2147483648
          %v4742 = vxor.u32 %v4710, 2147483648
          %v4743 = vxor.u32 %v4711, 2147483648
          %v4744 = vxor.u32 %v4712, 2147483648
          %v4745 = vxor.u32 %v4713, 2147483648
          %v4746 = vxor.u32 %v4714, 2147483648
          %v4747 = vxor.u32 %v4715, 2147483648
          %v4748 = vxor.u32 %v4716, 2147483648
          %v4749 = vxor.u32 %v4717, 2147483648
          %v4750 = vxor.u32 %v4718, 2147483648
          %v4751 = vxor.u32 %v4719, 2147483648
          %v4752 = vxor.u32 %v4720, 2147483648
          %v4753 = vxor.u32 %v4721, 2147483648
          %v4754 = vxor.u32 %v4722, 2147483648
          %v4755 = vxor.u32 %v4723, 2147483648
          %v4756 = vmul.f32 %v4724, 1.442695
          %v4757 = vpow.pop %v4756
          %v4758 = vmul.f32 %v4725, 1.442695
          %v4759 = vpow.pop %v4758
          %v4760 = vmul.f32 %v4726, 1.442695
          %v4761 = vpow.pop %v4760
          %v4762 = vmul.f32 %v4727, 1.442695
          %v4763 = vpow.pop %v4762
          %v4764 = vmul.f32 %v4728, 1.442695
          %v4765 = vpow.pop %v4764
          %v4766 = vmul.f32 %v4729, 1.442695
          %v4767 = vpow.pop %v4766
          %v4768 = vmul.f32 %v4730, 1.442695
          %v4769 = vpow.pop %v4768
          %v4770 = vmul.f32 %v4731, 1.442695
          %v4771 = vpow.pop %v4770
          %v4772 = vmul.f32 %v4732, 1.442695
          %v4773 = vpow.pop %v4772
          %v4774 = vmul.f32 %v4733, 1.442695
          %v4775 = vpow.pop %v4774
          %v4776 = vmul.f32 %v4734, 1.442695
          %v4777 = vpow.pop %v4776
          %v4778 = vmul.f32 %v4735, 1.442695
          %v4779 = vpow.pop %v4778
          %v4780 = vmul.f32 %v4736, 1.442695
          %v4781 = vpow.pop %v4780
          %v4782 = vmul.f32 %v4737, 1.442695
          %v4783 = vpow.pop %v4782
          %v4784 = vmul.f32 %v4738, 1.442695
          %v4785 = vpow.pop %v4784
          %v4786 = vmul.f32 %v4739, 1.442695
          %v4787 = vpow.pop %v4786
          %v4788 = vmul.f32 %v4740, 1.442695
          %v4789 = vpow.pop %v4788
          %v4790 = vmul.f32 %v4741, 1.442695
          %v4791 = vpow.pop %v4790
          %v4792 = vmul.f32 %v4742, 1.442695
          %v4793 = vpow.pop %v4792
          %v4794 = vmul.f32 %v4743, 1.442695
          %v4795 = vpow.pop %v4794
          %v4796 = vmul.f32 %v4744, 1.442695
          %v4797 = vpow.pop %v4796
          %v4798 = vmul.f32 %v4745, 1.442695
          %v4799 = vpow.pop %v4798
          %v4800 = vmul.f32 %v4746, 1.442695
          %v4801 = vpow.pop %v4800
          %v4802 = vmul.f32 %v4747, 1.442695
          %v4803 = vpow.pop %v4802
          %v4804 = vmul.f32 %v4748, 1.442695
          %v4805 = vpow.pop %v4804
          %v4806 = vmul.f32 %v4749, 1.442695
          %v4807 = vpow.pop %v4806
          %v4808 = vmul.f32 %v4750, 1.442695
          %v4809 = vpow.pop %v4808
          %v4810 = vmul.f32 %v4751, 1.442695
          %v4811 = vpow.pop %v4810
          %v4812 = vmul.f32 %v4752, 1.442695
          %v4813 = vpow.pop %v4812
          %v4814 = vmul.f32 %v4753, 1.442695
          %v4815 = vpow.pop %v4814
          %v4816 = vmul.f32 %v4754, 1.442695
          %v4817 = vpow.pop %v4816
          %v4818 = vmul.f32 %v4755, 1.442695
          %v4819 = vpow.pop %v4818
          %v4820 = vadd.f32 %v4757, 1.0
          %v4821 = vadd.f32 %v4759, 1.0
          %v4822 = vadd.f32 %v4761, 1.0
          %v4823 = vadd.f32 %v4763, 1.0
          %v4824 = vadd.f32 %v4765, 1.0
          %v4825 = vadd.f32 %v4767, 1.0
          %v4826 = vadd.f32 %v4769, 1.0
          %v4827 = vadd.f32 %v4771, 1.0
          %v4828 = vadd.f32 %v4773, 1.0
          %v4829 = vadd.f32 %v4775, 1.0
          %v4830 = vadd.f32 %v4777, 1.0
          %v4831 = vadd.f32 %v4779, 1.0
          %v4832 = vadd.f32 %v4781, 1.0
          %v4833 = vadd.f32 %v4783, 1.0
          %v4834 = vadd.f32 %v4785, 1.0
          %v4835 = vadd.f32 %v4787, 1.0
          %v4836 = vadd.f32 %v4789, 1.0
          %v4837 = vadd.f32 %v4791, 1.0
          %v4838 = vadd.f32 %v4793, 1.0
          %v4839 = vadd.f32 %v4795, 1.0
          %v4840 = vadd.f32 %v4797, 1.0
          %v4841 = vadd.f32 %v4799, 1.0
          %v4842 = vadd.f32 %v4801, 1.0
          %v4843 = vadd.f32 %v4803, 1.0
          %v4844 = vadd.f32 %v4805, 1.0
          %v4845 = vadd.f32 %v4807, 1.0
          %v4846 = vadd.f32 %v4809, 1.0
          %v4847 = vadd.f32 %v4811, 1.0
          %v4848 = vadd.f32 %v4813, 1.0
          %v4849 = vadd.f32 %v4815, 1.0
          %v4850 = vadd.f32 %v4817, 1.0
          %v4851 = vadd.f32 %v4819, 1.0
          %v4852 = vrcp.pop %v4820
          %v4853 = vmul.f32 1.0, %v4852
          %v4854 = vrcp.pop %v4821
          %v4855 = vmul.f32 1.0, %v4854
          %v4856 = vrcp.pop %v4822
          %v4857 = vmul.f32 1.0, %v4856
          %v4858 = vrcp.pop %v4823
          %v4859 = vmul.f32 1.0, %v4858
          %v4860 = vrcp.pop %v4824
          %v4861 = vmul.f32 1.0, %v4860
          %v4862 = vrcp.pop %v4825
          %v4863 = vmul.f32 1.0, %v4862
          %v4864 = vrcp.pop %v4826
          %v4865 = vmul.f32 1.0, %v4864
          %v4866 = vrcp.pop %v4827
          %v4867 = vmul.f32 1.0, %v4866
          %v4868 = vrcp.pop %v4828
          %v4869 = vmul.f32 1.0, %v4868
          %v4870 = vrcp.pop %v4829
          %v4871 = vmul.f32 1.0, %v4870
          %v4872 = vrcp.pop %v4830
          %v4873 = vmul.f32 1.0, %v4872
          %v4874 = vrcp.pop %v4831
          %v4875 = vmul.f32 1.0, %v4874
          %v4876 = vrcp.pop %v4832
          %v4877 = vmul.f32 1.0, %v4876
          %v4878 = vrcp.pop %v4833
          %v4879 = vmul.f32 1.0, %v4878
          %v4880 = vrcp.pop %v4834
          %v4881 = vmul.f32 1.0, %v4880
          %v4882 = vrcp.pop %v4835
          %v4883 = vmul.f32 1.0, %v4882
          %v4884 = vrcp.pop %v4836
          %v4885 = vmul.f32 1.0, %v4884
          %v4886 = vrcp.pop %v4837
          %v4887 = vmul.f32 1.0, %v4886
          %v4888 = vrcp.pop %v4838
          %v4889 = vmul.f32 1.0, %v4888
          %v4890 = vrcp.pop %v4839
          %v4891 = vmul.f32 1.0, %v4890
          %v4892 = vrcp.pop %v4840
          %v4893 = vmul.f32 1.0, %v4892
          %v4894 = vrcp.pop %v4841
          %v4895 = vmul.f32 1.0, %v4894
          %v4896 = vrcp.pop %v4842
          %v4897 = vmul.f32 1.0, %v4896
          %v4898 = vrcp.pop %v4843
          %v4899 = vmul.f32 1.0, %v4898
          %v4900 = vrcp.pop %v4844
          %v4901 = vmul.f32 1.0, %v4900
          %v4902 = vrcp.pop %v4845
          %v4903 = vmul.f32 1.0, %v4902
          %v4904 = vrcp.pop %v4846
          %v4905 = vmul.f32 1.0, %v4904
          %v4906 = vrcp.pop %v4847
          %v4907 = vmul.f32 1.0, %v4906
          %v4908 = vrcp.pop %v4848
          %v4909 = vmul.f32 1.0, %v4908
          %v4910 = vrcp.pop %v4849
          %v4911 = vmul.f32 1.0, %v4910
          %v4912 = vrcp.pop %v4850
          %v4913 = vmul.f32 1.0, %v4912
          %v4914 = vrcp.pop %v4851
          %v4915 = vmul.f32 1.0, %v4914
          %v4916 = vadd.f32 %v3844, %v4375
          %v4917 = vadd.f32 %v3848, %v4379
          %v4918 = vadd.f32 %v3854, %v4385
          %v4919 = vadd.f32 %v3858, %v4389
          %v4920 = vadd.f32 %v3864, %v4395
          %v4921 = vadd.f32 %v3868, %v4399
          %v4922 = vadd.f32 %v3874, %v4405
          %v4923 = vadd.f32 %v3878, %v4409
          %v4924 = vadd.f32 %v3884, %v4415
          %v4925 = vadd.f32 %v3888, %v4419
          %v4926 = vadd.f32 %v3894, %v4425
          %v4927 = vadd.f32 %v3898, %v4429
          %v4928 = vadd.f32 %v3904, %v4435
          %v4929 = vadd.f32 %v3908, %v4439
          %v4930 = vadd.f32 %v3914, %v4445
          %v4931 = vadd.f32 %v3918, %v4449
          %v4932 = vadd.f32 %v3924, %v4455
          %v4933 = vadd.f32 %v3928, %v4459
          %v4934 = vadd.f32 %v3934, %v4465
          %v4935 = vadd.f32 %v3938, %v4469
          %v4936 = vadd.f32 %v3944, %v4475
          %v4937 = vadd.f32 %v3948, %v4479
          %v4938 = vadd.f32 %v3954, %v4485
          %v4939 = vadd.f32 %v3958, %v4489
          %v4940 = vadd.f32 %v3964, %v4495
          %v4941 = vadd.f32 %v3968, %v4499
          %v4942 = vadd.f32 %v3974, %v4505
          %v4943 = vadd.f32 %v3978, %v4509
          %v4944 = vadd.f32 %v3984, %v4515
          %v4945 = vadd.f32 %v3988, %v4519
          %v4946 = vadd.f32 %v3994, %v4525
          %v4947 = vadd.f32 %v3998, %v4529
          %v4948 = vxor.u32 %v4916, 2147483648
          %v4949 = vxor.u32 %v4917, 2147483648
          %v4950 = vxor.u32 %v4918, 2147483648
          %v4951 = vxor.u32 %v4919, 2147483648
          %v4952 = vxor.u32 %v4920, 2147483648
          %v4953 = vxor.u32 %v4921, 2147483648
          %v4954 = vxor.u32 %v4922, 2147483648
          %v4955 = vxor.u32 %v4923, 2147483648
          %v4956 = vxor.u32 %v4924, 2147483648
          %v4957 = vxor.u32 %v4925, 2147483648
          %v4958 = vxor.u32 %v4926, 2147483648
          %v4959 = vxor.u32 %v4927, 2147483648
          %v4960 = vxor.u32 %v4928, 2147483648
          %v4961 = vxor.u32 %v4929, 2147483648
          %v4962 = vxor.u32 %v4930, 2147483648
          %v4963 = vxor.u32 %v4931, 2147483648
          %v4964 = vxor.u32 %v4932, 2147483648
          %v4965 = vxor.u32 %v4933, 2147483648
          %v4966 = vxor.u32 %v4934, 2147483648
          %v4967 = vxor.u32 %v4935, 2147483648
          %v4968 = vxor.u32 %v4936, 2147483648
          %v4969 = vxor.u32 %v4937, 2147483648
          %v4970 = vxor.u32 %v4938, 2147483648
          %v4971 = vxor.u32 %v4939, 2147483648
          %v4972 = vxor.u32 %v4940, 2147483648
          %v4973 = vxor.u32 %v4941, 2147483648
          %v4974 = vxor.u32 %v4942, 2147483648
          %v4975 = vxor.u32 %v4943, 2147483648
          %v4976 = vxor.u32 %v4944, 2147483648
          %v4977 = vxor.u32 %v4945, 2147483648
          %v4978 = vxor.u32 %v4946, 2147483648
          %v4979 = vxor.u32 %v4947, 2147483648
          %v4980 = vmul.f32 %v4948, 1.442695
          %v4981 = vpow.pop %v4980
          %v4982 = vmul.f32 %v4949, 1.442695
          %v4983 = vpow.pop %v4982
          %v4984 = vmul.f32 %v4950, 1.442695
          %v4985 = vpow.pop %v4984
          %v4986 = vmul.f32 %v4951, 1.442695
          %v4987 = vpow.pop %v4986
          %v4988 = vmul.f32 %v4952, 1.442695
          %v4989 = vpow.pop %v4988
          %v4990 = vmul.f32 %v4953, 1.442695
          %v4991 = vpow.pop %v4990
          %v4992 = vmul.f32 %v4954, 1.442695
          %v4993 = vpow.pop %v4992
          %v4994 = vmul.f32 %v4955, 1.442695
          %v4995 = vpow.pop %v4994
          %v4996 = vmul.f32 %v4956, 1.442695
          %v4997 = vpow.pop %v4996
          %v4998 = vmul.f32 %v4957, 1.442695
          %v4999 = vpow.pop %v4998
          %v5000 = vmul.f32 %v4958, 1.442695
          %v5001 = vpow.pop %v5000
          %v5002 = vmul.f32 %v4959, 1.442695
          %v5003 = vpow.pop %v5002
          %v5004 = vmul.f32 %v4960, 1.442695
          %v5005 = vpow.pop %v5004
          %v5006 = vmul.f32 %v4961, 1.442695
          %v5007 = vpow.pop %v5006
          %v5008 = vmul.f32 %v4962, 1.442695
          %v5009 = vpow.pop %v5008
          %v5010 = vmul.f32 %v4963, 1.442695
          %v5011 = vpow.pop %v5010
          %v5012 = vmul.f32 %v4964, 1.442695
          %v5013 = vpow.pop %v5012
          %v5014 = vmul.f32 %v4965, 1.442695
          %v5015 = vpow.pop %v5014
          %v5016 = vmul.f32 %v4966, 1.442695
          %v5017 = vpow.pop %v5016
          %v5018 = vmul.f32 %v4967, 1.442695
          %v5019 = vpow.pop %v5018
          %v5020 = vmul.f32 %v4968, 1.442695
          %v5021 = vpow.pop %v5020
          %v5022 = vmul.f32 %v4969, 1.442695
          %v5023 = vpow.pop %v5022
          %v5024 = vmul.f32 %v4970, 1.442695
          %v5025 = vpow.pop %v5024
          %v5026 = vmul.f32 %v4971, 1.442695
          %v5027 = vpow.pop %v5026
          %v5028 = vmul.f32 %v4972, 1.442695
          %v5029 = vpow.pop %v5028
          %v5030 = vmul.f32 %v4973, 1.442695
          %v5031 = vpow.pop %v5030
          %v5032 = vmul.f32 %v4974, 1.442695
          %v5033 = vpow.pop %v5032
          %v5034 = vmul.f32 %v4975, 1.442695
          %v5035 = vpow.pop %v5034
          %v5036 = vmul.f32 %v4976, 1.442695
          %v5037 = vpow.pop %v5036
          %v5038 = vmul.f32 %v4977, 1.442695
          %v5039 = vpow.pop %v5038
          %v5040 = vmul.f32 %v4978, 1.442695
          %v5041 = vpow.pop %v5040
          %v5042 = vmul.f32 %v4979, 1.442695
          %v5043 = vpow.pop %v5042
          %v5044 = vadd.f32 %v4981, 1.0
          %v5045 = vadd.f32 %v4983, 1.0
          %v5046 = vadd.f32 %v4985, 1.0
          %v5047 = vadd.f32 %v4987, 1.0
          %v5048 = vadd.f32 %v4989, 1.0
          %v5049 = vadd.f32 %v4991, 1.0
          %v5050 = vadd.f32 %v4993, 1.0
          %v5051 = vadd.f32 %v4995, 1.0
          %v5052 = vadd.f32 %v4997, 1.0
          %v5053 = vadd.f32 %v4999, 1.0
          %v5054 = vadd.f32 %v5001, 1.0
          %v5055 = vadd.f32 %v5003, 1.0
          %v5056 = vadd.f32 %v5005, 1.0
          %v5057 = vadd.f32 %v5007, 1.0
          %v5058 = vadd.f32 %v5009, 1.0
          %v5059 = vadd.f32 %v5011, 1.0
          %v5060 = vadd.f32 %v5013, 1.0
          %v5061 = vadd.f32 %v5015, 1.0
          %v5062 = vadd.f32 %v5017, 1.0
          %v5063 = vadd.f32 %v5019, 1.0
          %v5064 = vadd.f32 %v5021, 1.0
          %v5065 = vadd.f32 %v5023, 1.0
          %v5066 = vadd.f32 %v5025, 1.0
          %v5067 = vadd.f32 %v5027, 1.0
          %v5068 = vadd.f32 %v5029, 1.0
          %v5069 = vadd.f32 %v5031, 1.0
          %v5070 = vadd.f32 %v5033, 1.0
          %v5071 = vadd.f32 %v5035, 1.0
          %v5072 = vadd.f32 %v5037, 1.0
          %v5073 = vadd.f32 %v5039, 1.0
          %v5074 = vadd.f32 %v5041, 1.0
          %v5075 = vadd.f32 %v5043, 1.0
          %v5076 = vrcp.pop %v5044
          %v5077 = vmul.f32 1.0, %v5076
          %v5078 = vrcp.pop %v5045
          %v5079 = vmul.f32 1.0, %v5078
          %v5080 = vrcp.pop %v5046
          %v5081 = vmul.f32 1.0, %v5080
          %v5082 = vrcp.pop %v5047
          %v5083 = vmul.f32 1.0, %v5082
          %v5084 = vrcp.pop %v5048
          %v5085 = vmul.f32 1.0, %v5084
          %v5086 = vrcp.pop %v5049
          %v5087 = vmul.f32 1.0, %v5086
          %v5088 = vrcp.pop %v5050
          %v5089 = vmul.f32 1.0, %v5088
          %v5090 = vrcp.pop %v5051
          %v5091 = vmul.f32 1.0, %v5090
          %v5092 = vrcp.pop %v5052
          %v5093 = vmul.f32 1.0, %v5092
          %v5094 = vrcp.pop %v5053
          %v5095 = vmul.f32 1.0, %v5094
          %v5096 = vrcp.pop %v5054
          %v5097 = vmul.f32 1.0, %v5096
          %v5098 = vrcp.pop %v5055
          %v5099 = vmul.f32 1.0, %v5098
          %v5100 = vrcp.pop %v5056
          %v5101 = vmul.f32 1.0, %v5100
          %v5102 = vrcp.pop %v5057
          %v5103 = vmul.f32 1.0, %v5102
          %v5104 = vrcp.pop %v5058
          %v5105 = vmul.f32 1.0, %v5104
          %v5106 = vrcp.pop %v5059
          %v5107 = vmul.f32 1.0, %v5106
          %v5108 = vrcp.pop %v5060
          %v5109 = vmul.f32 1.0, %v5108
          %v5110 = vrcp.pop %v5061
          %v5111 = vmul.f32 1.0, %v5110
          %v5112 = vrcp.pop %v5062
          %v5113 = vmul.f32 1.0, %v5112
          %v5114 = vrcp.pop %v5063
          %v5115 = vmul.f32 1.0, %v5114
          %v5116 = vrcp.pop %v5064
          %v5117 = vmul.f32 1.0, %v5116
          %v5118 = vrcp.pop %v5065
          %v5119 = vmul.f32 1.0, %v5118
          %v5120 = vrcp.pop %v5066
          %v5121 = vmul.f32 1.0, %v5120
          %v5122 = vrcp.pop %v5067
          %v5123 = vmul.f32 1.0, %v5122
          %v5124 = vrcp.pop %v5068
          %v5125 = vmul.f32 1.0, %v5124
          %v5126 = vrcp.pop %v5069
          %v5127 = vmul.f32 1.0, %v5126
          %v5128 = vrcp.pop %v5070
          %v5129 = vmul.f32 1.0, %v5128
          %v5130 = vrcp.pop %v5071
          %v5131 = vmul.f32 1.0, %v5130
          %v5132 = vrcp.pop %v5072
          %v5133 = vmul.f32 1.0, %v5132
          %v5134 = vrcp.pop %v5073
          %v5135 = vmul.f32 1.0, %v5134
          %v5136 = vrcp.pop %v5074
          %v5137 = vmul.f32 1.0, %v5136
          %v5138 = vrcp.pop %v5075
          %v5139 = vmul.f32 1.0, %v5138
          %v5140 = vmul.f32 %v4853, %v4566
          %v5141 = vmul.f32 %v4855, %v4569
          %v5142 = vmul.f32 %v4857, %v4574
          %v5143 = vmul.f32 %v4859, %v4577
          %v5144 = vmul.f32 %v4861, %v4582
          %v5145 = vmul.f32 %v4863, %v4585
          %v5146 = vmul.f32 %v4865, %v4590
          %v5147 = vmul.f32 %v4867, %v4593
          %v5148 = vmul.f32 %v4869, %v4598
          %v5149 = vmul.f32 %v4871, %v4601
          %v5150 = vmul.f32 %v4873, %v4606
          %v5151 = vmul.f32 %v4875, %v4609
          %v5152 = vmul.f32 %v4877, %v4614
          %v5153 = vmul.f32 %v4879, %v4617
          %v5154 = vmul.f32 %v4881, %v4622
          %v5155 = vmul.f32 %v4883, %v4625
          %v5156 = vmul.f32 %v4885, %v4630
          %v5157 = vmul.f32 %v4887, %v4633
          %v5158 = vmul.f32 %v4889, %v4638
          %v5159 = vmul.f32 %v4891, %v4641
          %v5160 = vmul.f32 %v4893, %v4646
          %v5161 = vmul.f32 %v4895, %v4649
          %v5162 = vmul.f32 %v4897, %v4654
          %v5163 = vmul.f32 %v4899, %v4657
          %v5164 = vmul.f32 %v4901, %v4662
          %v5165 = vmul.f32 %v4903, %v4665
          %v5166 = vmul.f32 %v4905, %v4670
          %v5167 = vmul.f32 %v4907, %v4673
          %v5168 = vmul.f32 %v4909, %v4678
          %v5169 = vmul.f32 %v4911, %v4681
          %v5170 = vmul.f32 %v4913, %v4686
          %v5171 = vmul.f32 %v4915, %v4689
          %v5172 = vadd.f32 %v4035, %v5140
          %v5173 = vadd.f32 %v4038, %v5141
          %v5174 = vadd.f32 %v4043, %v5142
          %v5175 = vadd.f32 %v4046, %v5143
          %v5176 = vadd.f32 %v4051, %v5144
          %v5177 = vadd.f32 %v4054, %v5145
          %v5178 = vadd.f32 %v4059, %v5146
          %v5179 = vadd.f32 %v4062, %v5147
          %v5180 = vadd.f32 %v4067, %v5148
          %v5181 = vadd.f32 %v4070, %v5149
          %v5182 = vadd.f32 %v4075, %v5150
          %v5183 = vadd.f32 %v4078, %v5151
          %v5184 = vadd.f32 %v4083, %v5152
          %v5185 = vadd.f32 %v4086, %v5153
          %v5186 = vadd.f32 %v4091, %v5154
          %v5187 = vadd.f32 %v4094, %v5155
          %v5188 = vadd.f32 %v4099, %v5156
          %v5189 = vadd.f32 %v4102, %v5157
          %v5190 = vadd.f32 %v4107, %v5158
          %v5191 = vadd.f32 %v4110, %v5159
          %v5192 = vadd.f32 %v4115, %v5160
          %v5193 = vadd.f32 %v4118, %v5161
          %v5194 = vadd.f32 %v4123, %v5162
          %v5195 = vadd.f32 %v4126, %v5163
          %v5196 = vadd.f32 %v4131, %v5164
          %v5197 = vadd.f32 %v4134, %v5165
          %v5198 = vadd.f32 %v4139, %v5166
          %v5199 = vadd.f32 %v4142, %v5167
          %v5200 = vadd.f32 %v4147, %v5168
          %v5201 = vadd.f32 %v4150, %v5169
          %v5202 = vadd.f32 %v4155, %v5170
          %v5203 = vadd.f32 %v4158, %v5171
          %v5204 = vtanh.pop %v5172
          %v5205 = vtanh.pop %v5173
          %v5206 = vtanh.pop %v5174
          %v5207 = vtanh.pop %v5175
          %v5208 = vtanh.pop %v5176
          %v5209 = vtanh.pop %v5177
          %v5210 = vtanh.pop %v5178
          %v5211 = vtanh.pop %v5179
          %v5212 = vtanh.pop %v5180
          %v5213 = vtanh.pop %v5181
          %v5214 = vtanh.pop %v5182
          %v5215 = vtanh.pop %v5183
          %v5216 = vtanh.pop %v5184
          %v5217 = vtanh.pop %v5185
          %v5218 = vtanh.pop %v5186
          %v5219 = vtanh.pop %v5187
          %v5220 = vtanh.pop %v5188
          %v5221 = vtanh.pop %v5189
          %v5222 = vtanh.pop %v5190
          %v5223 = vtanh.pop %v5191
          %v5224 = vtanh.pop %v5192
          %v5225 = vtanh.pop %v5193
          %v5226 = vtanh.pop %v5194
          %v5227 = vtanh.pop %v5195
          %v5228 = vtanh.pop %v5196
          %v5229 = vtanh.pop %v5197
          %v5230 = vtanh.pop %v5198
          %v5231 = vtanh.pop %v5199
          %v5232 = vtanh.pop %v5200
          %v5233 = vtanh.pop %v5201
          %v5234 = vtanh.pop %v5202
          %v5235 = vtanh.pop %v5203
          %v5236 = vsub.f32 1.0, %v5077
          %v5237 = vsub.f32 1.0, %v5079
          %v5238 = vsub.f32 1.0, %v5081
          %v5239 = vsub.f32 1.0, %v5083
          %v5240 = vsub.f32 1.0, %v5085
          %v5241 = vsub.f32 1.0, %v5087
          %v5242 = vsub.f32 1.0, %v5089
          %v5243 = vsub.f32 1.0, %v5091
          %v5244 = vsub.f32 1.0, %v5093
          %v5245 = vsub.f32 1.0, %v5095
          %v5246 = vsub.f32 1.0, %v5097
          %v5247 = vsub.f32 1.0, %v5099
          %v5248 = vsub.f32 1.0, %v5101
          %v5249 = vsub.f32 1.0, %v5103
          %v5250 = vsub.f32 1.0, %v5105
          %v5251 = vsub.f32 1.0, %v5107
          %v5252 = vsub.f32 1.0, %v5109
          %v5253 = vsub.f32 1.0, %v5111
          %v5254 = vsub.f32 1.0, %v5113
          %v5255 = vsub.f32 1.0, %v5115
          %v5256 = vsub.f32 1.0, %v5117
          %v5257 = vsub.f32 1.0, %v5119
          %v5258 = vsub.f32 1.0, %v5121
          %v5259 = vsub.f32 1.0, %v5123
          %v5260 = vsub.f32 1.0, %v5125
          %v5261 = vsub.f32 1.0, %v5127
          %v5262 = vsub.f32 1.0, %v5129
          %v5263 = vsub.f32 1.0, %v5131
          %v5264 = vsub.f32 1.0, %v5133
          %v5265 = vsub.f32 1.0, %v5135
          %v5266 = vsub.f32 1.0, %v5137
          %v5267 = vsub.f32 1.0, %v5139
          %v5268 = vmul.f32 %v5236, %v5204
          %v5269 = vmul.f32 %v5237, %v5205
          %v5270 = vmul.f32 %v5238, %v5206
          %v5271 = vmul.f32 %v5239, %v5207
          %v5272 = vmul.f32 %v5240, %v5208
          %v5273 = vmul.f32 %v5241, %v5209
          %v5274 = vmul.f32 %v5242, %v5210
          %v5275 = vmul.f32 %v5243, %v5211
          %v5276 = vmul.f32 %v5244, %v5212
          %v5277 = vmul.f32 %v5245, %v5213
          %v5278 = vmul.f32 %v5246, %v5214
          %v5279 = vmul.f32 %v5247, %v5215
          %v5280 = vmul.f32 %v5248, %v5216
          %v5281 = vmul.f32 %v5249, %v5217
          %v5282 = vmul.f32 %v5250, %v5218
          %v5283 = vmul.f32 %v5251, %v5219
          %v5284 = vmul.f32 %v5252, %v5220
          %v5285 = vmul.f32 %v5253, %v5221
          %v5286 = vmul.f32 %v5254, %v5222
          %v5287 = vmul.f32 %v5255, %v5223
          %v5288 = vmul.f32 %v5256, %v5224
          %v5289 = vmul.f32 %v5257, %v5225
          %v5290 = vmul.f32 %v5258, %v5226
          %v5291 = vmul.f32 %v5259, %v5227
          %v5292 = vmul.f32 %v5260, %v5228
          %v5293 = vmul.f32 %v5261, %v5229
          %v5294 = vmul.f32 %v5262, %v5230
          %v5295 = vmul.f32 %v5263, %v5231
          %v5296 = vmul.f32 %v5264, %v5232
          %v5297 = vmul.f32 %v5265, %v5233
          %v5298 = vmul.f32 %v5266, %v5234
          %v5299 = vmul.f32 %v5267, %v5235
          %v5300 = vmul.f32 %v5077, %v767
          %v5301 = vmul.f32 %v5079, %v768
          %v5302 = vmul.f32 %v5081, %v769
          %v5303 = vmul.f32 %v5083, %v770
          %v5304 = vmul.f32 %v5085, %v771
          %v5305 = vmul.f32 %v5087, %v772
          %v5306 = vmul.f32 %v5089, %v773
          %v5307 = vmul.f32 %v5091, %v774
          %v5308 = vmul.f32 %v5093, %v775
          %v5309 = vmul.f32 %v5095, %v776
          %v5310 = vmul.f32 %v5097, %v777
          %v5311 = vmul.f32 %v5099, %v778
          %v5312 = vmul.f32 %v5101, %v779
          %v5313 = vmul.f32 %v5103, %v780
          %v5314 = vmul.f32 %v5105, %v781
          %v5315 = vmul.f32 %v5107, %v782
          %v5316 = vmul.f32 %v5109, %v783
          %v5317 = vmul.f32 %v5111, %v784
          %v5318 = vmul.f32 %v5113, %v785
          %v5319 = vmul.f32 %v5115, %v786
          %v5320 = vmul.f32 %v5117, %v787
          %v5321 = vmul.f32 %v5119, %v788
          %v5322 = vmul.f32 %v5121, %v789
          %v5323 = vmul.f32 %v5123, %v790
          %v5324 = vmul.f32 %v5125, %v791
          %v5325 = vmul.f32 %v5127, %v792
          %v5326 = vmul.f32 %v5129, %v793
          %v5327 = vmul.f32 %v5131, %v794
          %v5328 = vmul.f32 %v5133, %v795
          %v5329 = vmul.f32 %v5135, %v796
          %v5330 = vmul.f32 %v5137, %v797
          %v5331 = vmul.f32 %v5139, %v798
          %v5332 = vadd.f32 %v5268, %v5300
          %v5333 = vadd.f32 %v5269, %v5301
          %v5334 = vadd.f32 %v5270, %v5302
          %v5335 = vadd.f32 %v5271, %v5303
          %v5336 = vadd.f32 %v5272, %v5304
          %v5337 = vadd.f32 %v5273, %v5305
          %v5338 = vadd.f32 %v5274, %v5306
          %v5339 = vadd.f32 %v5275, %v5307
          %v5340 = vadd.f32 %v5276, %v5308
          %v5341 = vadd.f32 %v5277, %v5309
          %v5342 = vadd.f32 %v5278, %v5310
          %v5343 = vadd.f32 %v5279, %v5311
          %v5344 = vadd.f32 %v5280, %v5312
          %v5345 = vadd.f32 %v5281, %v5313
          %v5346 = vadd.f32 %v5282, %v5314
          %v5347 = vadd.f32 %v5283, %v5315
          %v5348 = vadd.f32 %v5284, %v5316
          %v5349 = vadd.f32 %v5285, %v5317
          %v5350 = vadd.f32 %v5286, %v5318
          %v5351 = vadd.f32 %v5287, %v5319
          %v5352 = vadd.f32 %v5288, %v5320
          %v5353 = vadd.f32 %v5289, %v5321
          %v5354 = vadd.f32 %v5290, %v5322
          %v5355 = vadd.f32 %v5291, %v5323
          %v5356 = vadd.f32 %v5292, %v5324
          %v5357 = vadd.f32 %v5293, %v5325
          %v5358 = vadd.f32 %v5294, %v5326
          %v5359 = vadd.f32 %v5295, %v5327
          %v5360 = vadd.f32 %v5296, %v5328
          %v5361 = vadd.f32 %v5297, %v5329
          %v5362 = vadd.f32 %v5298, %v5330
          %v5363 = vadd.f32 %v5299, %v5331
          %5364 = vst [vmem:[%s11] sm:$0xff] %v5332
          %5365 = vst [vmem:[%s11 + $0x8] sm:$0xff] %v5333
          %5366 = vst [vmem:[%s11 + $0x10] sm:$0xff] %v5334
          %5367 = vst [vmem:[%s11 + $0x18] sm:$0xff] %v5335
          %5368 = vst [vmem:[%s11 + $0x20] sm:$0xff] %v5336
          %5369 = vst [vmem:[%s11 + $0x28] sm:$0xff] %v5337
          %5370 = vst [vmem:[%s11 + $0x30] sm:$0xff] %v5338
          %5371 = vst [vmem:[%s11 + $0x38] sm:$0xff] %v5339
          %5372 = vst [vmem:[%s11 + $0x40] sm:$0xff] %v5340
          %5373 = vst [vmem:[%s11 + $0x48] sm:$0xff] %v5341
          %5374 = vst [vmem:[%s11 + $0x50] sm:$0xff] %v5342
          %5375 = vst [vmem:[%s11 + $0x58] sm:$0xff] %v5343
          %5376 = vst [vmem:[%s11 + $0x60] sm:$0xff] %v5344
          %5377 = vst [vmem:[%s11 + $0x68] sm:$0xff] %v5345
          %5378 = vst [vmem:[%s11 + $0x70] sm:$0xff] %v5346
          %5379 = vst [vmem:[%s11 + $0x78] sm:$0xff] %v5347
          %5380 = vst [vmem:[%s11 + $0x80] sm:$0xff] %v5348
          %5381 = vst [vmem:[%s11 + $0x88] sm:$0xff] %v5349
          %5382 = vst [vmem:[%s11 + $0x90] sm:$0xff] %v5350
          %5383 = vst [vmem:[%s11 + $0x98] sm:$0xff] %v5351
          %5384 = vst [vmem:[%s11 + $0xa0] sm:$0xff] %v5352
          %5385 = vst [vmem:[%s11 + $0xa8] sm:$0xff] %v5353
          %5386 = vst [vmem:[%s11 + $0xb0] sm:$0xff] %v5354
          %5387 = vst [vmem:[%s11 + $0xb8] sm:$0xff] %v5355
          %5388 = vst [vmem:[%s11 + $0xc0] sm:$0xff] %v5356
          %5389 = vst [vmem:[%s11 + $0xc8] sm:$0xff] %v5357
          %5390 = vst [vmem:[%s11 + $0xd0] sm:$0xff] %v5358
          %5391 = vst [vmem:[%s11 + $0xd8] sm:$0xff] %v5359
          %5392 = vst [vmem:[%s11 + $0xe0] sm:$0xff] %v5360
          %5393 = vst [vmem:[%s11 + $0xe8] sm:$0xff] %v5361
          %5394 = vst [vmem:[%s11 + $0xf0] sm:$0xff] %v5362
          %5395 = vst [vmem:[%s11 + $0xf8] sm:$0xff] %v5363
        $region100: #{node_emb_forward.1} parent=63 // pred_fallthru
          _
        // Predicated region
        $region101: #{node_emb_forward.1} parent=63 // pred_check
          %p5396 = pneg %p336
        $region102: #{node_emb_forward.1} parent=63 // pred_check_branch
          %5398 = sbr.rel (%p5396) target = $region104
        $region103: #{node_emb_forward.1} parent=63 // pred_region
          _
        $region104: #{node_emb_forward.1} parent=63 // pred_fallthru
          _
        // Predicated region
        $region105: #{node_emb_forward.1} parent=63 // pred_check
          %p5399 = pneg %p336
        $region106: #{node_emb_forward.1} parent=63 // pred_check_branch
          %5401 = sbr.rel (%p5399) target = $region108
        $region107: #{node_emb_forward.1} parent=63 // pred_region
          _
        $region108: #{node_emb_forward.1} parent=63 // pred_fallthru
          _
      $region64: #{node_emb_forward.1} parent=5 // pred_fallthru
        _
      %p5402 = scmp.le.s32.totalorder 2, %s25
      // Predicated region
      $region109: #{node_emb_forward.1} parent=5 // pred_check
        %p5403 = pneg %p5402
      $region110: #{node_emb_forward.1} parent=5 // pred_check_branch
        %5405 = sbr.rel (%p5403) target = $region112
      $region111: #{node_emb_forward.1} parent=5 // pred_region
        %s5406 = ssub.s32 %s25, 2
      $region112: #{node_emb_forward.1} parent=5 // pred_fallthru
        _
    $region6: #{node_emb_forward.1} parent=1 // loop_footer
      %s29 = sadd.s32 1, %s25
    $region7: #{node_emb_forward.1} parent=1 // loop_footer_branch
      %24 = sbr.rel target = $region3
    $region8: #{node_emb_forward.1} parent=1 // loop_exit
      _
    %5407 = vsyncpa [#allocation4], 1
    %s5408 = scalar_lea.sflag [#allocation4], 1
    %5409 = vsyncpa %s5408, 1
    %5410 = vsyncpa [#allocation6], 1
    %5411 = vsyncpa [#allocation9], 1
    %s5412 = scalar_lea.sflag [#allocation9], 1
    %5413 = vsyncpa %s5412, 1
    %5414 = vsyncpa [#allocation12], 1
    %s5415 = scalar_lea.sflag [#allocation12], 1
    %5416 = vsyncpa %s5415, 1

</llo_original>
